<compile_context>
chip_gen: v7x
topology: tpu7x:2x2x1
jax: 0.10.0
libtpu: 0.0.40
codegen_flags: <defaults>
</compile_context>

<pallas_src>
import jax
import jax.numpy as jnp
from jax.experimental import pallas as pl

# ----- module hyper-parameters (CotLayerNoNorm(dim=32, kernel_size=3)) -----
DIM = 32
KS = 3
B = 2
H = W = 16
HW = H * W                                   # 256 pixels per sample (lane axis)
PAD = KS // 2
KEY_GROUPS = 4                               # key_embed conv groups
SHARE_PLANES = 8
FACTOR = 2
RADIX = 2
REDUCTION = 4
ATTN_CHS = max(DIM * RADIX // REDUCTION, 32)             # 32
WCH = KS * KS * DIM // SHARE_PLANES                      # 36 embed-conv2 channels
GN_GROUPS = DIM // SHARE_PLANES                          # 4 GroupNorm groups
CPG = WCH // GN_GROUPS                                   # 9 channels per GN group
WEIGHT_CH = WCH // (KS * KS)                             # 4 shared local-conv weight channels
MID = DIM // FACTOR                                      # 16
TAPS = KS * KS                                           # 9
EPS = 1e-5

# packed per-channel vector offsets (sublane offsets, multiples of 8)
V_B2, V_GAM, V_BET, V_SE1B, V_SE2B = 0, 40, 80, 120, 152
VEC_ROWS = 216


def _cot_kernel(p_ref, wf_ref, wc_ref, w1k_ref, w2_ref, gmat_ref, rep_ref,
                wse1_ref, wse2_ref, vec_ref, out_ref):
    f32 = jnp.float32
    bf16 = jnp.bfloat16

    vec = vec_ref[...]                                    # (216, 1) packed vectors
    b2 = vec[V_B2:V_B2 + WCH]
    gam = vec[V_GAM:V_GAM + WCH]
    bet = vec[V_BET:V_BET + WCH]
    b_se1 = vec[V_SE1B:V_SE1B + ATTN_CHS]
    b_se2 = vec[V_SE2B:V_SE2B + RADIX * DIM]

    # ---- fused bf16 matmul: key_embed (grouped 3x3 conv) + embed-conv1 x-half ----
    rf = jnp.dot(wf_ref[...], p_ref[...], preferred_element_type=f32)   # (48, 512)
    k = jnp.maximum(rf[0:DIM], 0.0)                                     # key_embed + ReLU

    # ---- embed: 1x1 conv (k-half added) + ReLU, 1x1 conv + bias ----
    e1 = jnp.maximum(
        rf[DIM:DIM + MID]
        + jnp.dot(w1k_ref[...], k.astype(bf16), preferred_element_type=f32), 0.0)
    w_pre = jnp.dot(w2_ref[...], e1.astype(bf16),
                    preferred_element_type=f32) + b2                    # (36, 512)

    # ---- GroupNorm, per sample: lane-reduced stats + tiny group-mean matmul ----
    halves = []
    for b in range(B):
        wp = w_pre[:, b * HW:(b + 1) * HW]                              # (36, 256)
        s1 = jnp.sum(wp, axis=1, keepdims=True)                         # (36, 1)
        s2 = jnp.sum(wp * wp, axis=1, keepdims=True)
        gm = jnp.dot(gmat_ref[...], s1, preferred_element_type=f32)     # group mean
        gsq = jnp.dot(gmat_ref[...], s2, preferred_element_type=f32)    # group E[x^2]
        var = jnp.maximum(gsq - gm * gm, 0.0)                           # clamp >= 0
        scale = jax.lax.rsqrt(var + EPS) * gam
        halves.append(wp * scale + (bet - gm * scale))
    w_n = jnp.concatenate(halves, axis=1)                               # (36, 512), tap-major rows

    # ---- local_conv (aggregation_zeropad): 9-tap MAC, conv1x1 computed per tap ----
    acc = jnp.zeros((DIM, B * HW), f32)
    for t in range(TAPS):
        xt = p_ref[t * DIM:(t + 1) * DIM, :]                            # (32, 512) bf16, tap t of x
        y_t = jnp.dot(wc_ref[...], xt, preferred_element_type=f32)      # conv1x1 at tap t
        w_t = jnp.dot(rep_ref[...], w_n[t * WEIGHT_CH:(t + 1) * WEIGHT_CH, :],
                      preferred_element_type=f32)                       # expand 4 -> 32 (c % 4)
        acc = acc + w_t * y_t
    v = acc * pl.reciprocal(1.0 + jnp.exp(-acc), approx=True)           # SiLU

    # ---- split-attention SE + radix-2 softmax blend (per sample) ----
    for b in range(B):
        sl = slice(b * HW, (b + 1) * HW)
        vb = v[:, sl]
        kb = k[:, sl]
        gap = jnp.sum(vb + kb, axis=1, keepdims=True) * (1.0 / HW)      # (32, 1)
        a1 = jnp.maximum(
            jnp.dot(wse1_ref[...], gap, preferred_element_type=f32) + b_se1, 0.0)
        logit = jnp.dot(wse2_ref[...], a1, preferred_element_type=f32) + b_se2   # (64, 1)
        a_v = pl.reciprocal(1.0 + jnp.exp(logit[DIM:] - logit[0:DIM]), approx=True)
        out_ref[b, :, :] = vb * a_v + kb * (1.0 - a_v)                  # NCHW channel-major


@jax.jit
def cot_layer(x_nchw, params):
    """x_nchw: (B, DIM, H, W) float32 -> (B, DIM, H, W) float32."""
    # tap-major im2col (zero padding): rows = tap*32 + channel, cols = sample*256 + pixel
    xp = jnp.pad(x_nchw, ((0, 0), (0, 0), (PAD, PAD), (PAD, PAD)))
    taps = [xp[:, :, dy:dy + H, dx:dx + W].reshape(B, DIM, HW)
            for dy in range(KS) for dx in range(KS)]
    patches = (jnp.stack(taps, axis=0)            # (9, B, 32, 256)
               .transpose(0, 2, 1, 3)             # (9, 32, B, 256)
               .reshape(TAPS * DIM, B * HW)
               .astype(jnp.bfloat16))              # (288, 512)

    out = pl.pallas_call(
        _cot_kernel,
        out_shape=jax.ShapeDtypeStruct((B, DIM, HW), jnp.float32),
    )(patches, *params)
    return out.reshape(B, DIM, H, W)


def make_weights(key):
    """Raw PyTorch-layout weights (deterministic)."""
    keys = iter(jax.random.split(key, 16))

    def nrm(shape, s=0.1):
        return s * jax.random.normal(next(keys), shape, jnp.float32)

    key_w = nrm((DIM, DIM // KEY_GROUPS, KS, KS), 0.15)   # key_embed conv (groups=4, no bias)
    w1 = nrm((MID, 2 * DIM), 0.15)                        # embed conv1 (1x1, no bias)
    w2 = nrm((WCH, MID), 0.15)                            # embed conv2 (1x1, bias)
    b2 = nrm((WCH,))
    gn_gamma = 1.0 + nrm((WCH,))
    gn_beta = nrm((WCH,))
    wc = nrm((DIM, DIM), 0.15)                            # conv1x1 (no bias)
    se1_w = nrm((ATTN_CHS, DIM), 0.15)
    se1_b = nrm((ATTN_CHS,))
    se2_w = nrm((RADIX * DIM, ATTN_CHS), 0.15)
    se2_b = nrm((RADIX * DIM,))
    return (key_w, w1, w2, b2, gn_gamma, gn_beta, wc, se1_w, se1_b, se2_w, se2_b)


def pack_params(raw):
    (key_w, w1, w2, b2, gamma, beta, wc, se1_w, se1_b, se2_w, se2_b) = raw

    # tap-major permutation of embed-conv2 output channels: new row t*4+wc <- old wc*9+t
    r = jnp.arange(WCH)
    perm = (r % WEIGHT_CH) * TAPS + (r // WEIGHT_CH)
    w2_p, b2_p, gam_p, bet_p = w2[perm], b2[perm], gamma[perm], beta[perm]

    # fused (48, 288): rows 0..31 key_embed (block-diag over 4 groups), 32..47 embed-conv1 x-half
    chg = DIM // KEY_GROUPS
    co = jnp.arange(DIM)
    ci = jnp.arange(DIM)
    same_group = (co[:, None] // chg) == (ci[None, :] // chg)
    wf = jnp.zeros((DIM + MID, TAPS * DIM), jnp.float32)
    for t in range(TAPS):
        kh, kw = t // KS, t % KS
        dense = jnp.where(same_group, key_w[co[:, None], ci[None, :] % chg, kh, kw], 0.0)
        wf = wf.at[0:DIM, t * DIM:(t + 1) * DIM].set(dense)
    center = PAD * KS + PAD
    wf = wf.at[DIM:DIM + MID, center * DIM:(center + 1) * DIM].set(w1[:, :DIM])
    wf = wf.astype(jnp.bfloat16)

    w1k = w1[:, DIM:].astype(jnp.bfloat16)                # (16, 32), k-half of embed conv1
    w2b = w2_p.astype(jnp.bfloat16)                       # (36, 16)
    wcb = wc.astype(jnp.bfloat16)                         # (32, 32)

    # GroupNorm group-mean matrix on the permuted rows (group = row % 4)
    gid = jnp.arange(WCH) % GN_GROUPS
    gmat = (gid[:, None] == gid[None, :]).astype(jnp.float32) / float(HW * CPG)

    # one-hot expansion matrix: output channel c uses shared weight channel c % 4
    rep = (jnp.arange(DIM)[:, None] % WEIGHT_CH
           == jnp.arange(WEIGHT_CH)[None, :]).astype(jnp.float32)       # (32, 4)

    # SE: de-interleave the radix dim of conv2 (rows [all r=0 | all r=1])
    se2_w_r = jnp.concatenate([se2_w[0::2], se2_w[1::2]], axis=0)
    se2_b_r = jnp.concatenate([se2_b[0::2], se2_b[1::2]], axis=0)

    # packed per-channel column vectors (offsets multiples of 8)
    vec = jnp.zeros((VEC_ROWS, 1), jnp.float32)
    vec = vec.at[V_B2:V_B2 + WCH, 0].set(b2_p)
    vec = vec.at[V_GAM:V_GAM + WCH, 0].set(gam_p)
    vec = vec.at[V_BET:V_BET + WCH, 0].set(bet_p)
    vec = vec.at[V_SE1B:V_SE1B + ATTN_CHS, 0].set(se1_b)
    vec = vec.at[V_SE2B:V_SE2B + RADIX * DIM, 0].set(se2_b_r)

    return (wf, wcb, w1k, w2b, gmat, rep, se1_w, se2_w_r, vec)


def _reference(x, raw):
    """Pure-JAX f32 reference of CotLayerNoNorm.forward (for validation)."""
    (key_w, w1, w2, b2, gamma, beta, wc, se1_w, se1_b, se2_w, se2_b) = raw
    chg = DIM // KEY_GROUPS
    xp = jnp.pad(x, ((0, 0), (0, 0), (PAD, PAD), (PAD, PAD)))
    k = jnp.zeros_like(x)
    for dy in range(KS):
        for dx in range(KS):
            xs = xp[:, :, dy:dy + H, dx:dx + W]
            for g in range(KEY_GROUPS):
                w_g = key_w[g * chg:(g + 1) * chg, :, dy, dx]
                k = k.at[:, g * chg:(g + 1) * chg].add(
                    jnp.einsum('oi,bihw->bohw', w_g, xs[:, g * chg:(g + 1) * chg]))
    k = jnp.maximum(k, 0.0)
    qk = jnp.concatenate([x, k], axis=1)
    e1 = jnp.maximum(jnp.einsum('oi,bihw->bohw', w1, qk), 0.0)
    w_pre = jnp.einsum('oi,bihw->bohw', w2, e1) + b2[None, :, None, None]
    wg = w_pre.reshape(B, GN_GROUPS, CPG, H, W)
    mean = wg.mean(axis=(2, 3, 4), keepdims=True)
    var = wg.var(axis=(2, 3, 4), keepdims=True)
    wn = ((wg - mean) * jax.lax.rsqrt(var + EPS)).reshape(B, WCH, H, W)
    wn = wn * gamma[None, :, None, None] + beta[None, :, None, None]
    y = jnp.einsum('oi,bihw->bohw', wc, x)
    yp = jnp.pad(y, ((0, 0), (0, 0), (PAD, PAD), (PAD, PAD)))
    wv = wn.reshape(B, WEIGHT_CH, TAPS, H, W)
    cidx = jnp.arange(DIM) % WEIGHT_CH
    agg = jnp.zeros_like(y)
    for dy in range(KS):
        for dx in range(KS):
            t = dy * KS + dx
            ys = yp[:, :, dy:dy + H, dx:dx + W]
            wt = wv[:, :, t][:, cidx]
            agg = agg + wt * ys
    v = agg * jax.nn.sigmoid(agg)                          # SiLU
    gap = (v + k).mean(axis=(2, 3))                        # (B, 32)
    a1 = jnp.maximum(gap @ se1_w.T + se1_b, 0.0)
    logits = (a1 @ se2_w.T + se2_b).reshape(B, DIM, RADIX)
    attn = jax.nn.softmax(logits, axis=2)
    return v * attn[:, :, 0, None, None] + k * attn[:, :, 1, None, None]


if __name__ == "__main__":
    root = jax.random.PRNGKey(0)
    kx, kp = jax.random.split(root)
    x = jax.random.normal(kx, (B, DIM, H, W), jnp.float32)   # NCHW, like the PyTorch module
    raw = make_weights(kp)
    params = pack_params(raw)

    out = jax.block_until_ready(cot_layer(x, params))
    assert out.shape == (B, DIM, H, W) and out.dtype == jnp.float32
    assert bool(jnp.all(jnp.isfinite(out)))

    ref = jax.jit(_reference)(x, raw)
    rel = float(jnp.linalg.norm(out - ref) / (jnp.linalg.norm(ref) + 1e-12))
    assert rel < 0.1, f"kernel vs reference relative L2 error {rel:.4f}"

    print("KERNEL_OK")
</pallas_src>

<mosaic_0001>
module attributes {stable_mosaic.version = 11 : i64} {
  func.func @_cot_kernel(%arg0: memref<288x512xbf16, #tpu.memory_space<vmem>>, %arg1: memref<48x288xbf16, #tpu.memory_space<vmem>>, %arg2: memref<32x32xbf16, #tpu.memory_space<vmem>>, %arg3: memref<16x32xbf16, #tpu.memory_space<vmem>>, %arg4: memref<36x16xbf16, #tpu.memory_space<vmem>>, %arg5: memref<36x36xf32, #tpu.memory_space<vmem>>, %arg6: memref<32x4xf32, #tpu.memory_space<vmem>>, %arg7: memref<32x32xf32, #tpu.memory_space<vmem>>, %arg8: memref<64x32xf32, #tpu.memory_space<vmem>>, %arg9: memref<216x1xf32, #tpu.memory_space<vmem>>, %arg10: memref<2x32x256xf32, #tpu.memory_space<vmem>>) attributes {dimension_semantics = [], scalar_prefetch = 0 : i64, scratch_operands = 0 : i64, tpu.core_type = #tpu.core_type<tc>} {
    %c0 = arith.constant 0 : index
    %c0_0 = arith.constant 0 : index
    %0 = vector.load %arg9[%c0, %c0_0] : memref<216x1xf32, #tpu.memory_space<vmem>>, vector<216x1xf32>
    %1 = vector.extract_strided_slice %0 {offsets = [0, 0], sizes = [36, 1], strides = [1, 1]} : vector<216x1xf32> to vector<36x1xf32>
    %2 = vector.extract_strided_slice %0 {offsets = [40, 0], sizes = [36, 1], strides = [1, 1]} : vector<216x1xf32> to vector<36x1xf32>
    %3 = vector.extract_strided_slice %0 {offsets = [80, 0], sizes = [36, 1], strides = [1, 1]} : vector<216x1xf32> to vector<36x1xf32>
    %4 = vector.extract_strided_slice %0 {offsets = [120, 0], sizes = [32, 1], strides = [1, 1]} : vector<216x1xf32> to vector<32x1xf32>
    %5 = vector.extract_strided_slice %0 {offsets = [152, 0], sizes = [64, 1], strides = [1, 1]} : vector<216x1xf32> to vector<64x1xf32>
    %c0_1 = arith.constant 0 : index
    %c0_2 = arith.constant 0 : index
    %6 = vector.load %arg1[%c0_1, %c0_2] : memref<48x288xbf16, #tpu.memory_space<vmem>>, vector<48x288xbf16>
    %c0_3 = arith.constant 0 : index
    %c0_4 = arith.constant 0 : index
    %7 = vector.load %arg0[%c0_3, %c0_4] : memref<288x512xbf16, #tpu.memory_space<vmem>>, vector<288x512xbf16>
    %cst = arith.constant dense<0.000000e+00> : vector<48x512xf32>
    %8 = tpu.matmul %6, %7, %cst {dimension_numbers = #tpu.dot_dimension_numbers<[1], [0], [0], [1], [0, 0, 1, 1], [], []>} : vector<48x288xbf16>, vector<288x512xbf16>, vector<48x512xf32> -> vector<48x512xf32>
    %9 = vector.extract_strided_slice %8 {offsets = [0, 0], sizes = [32, 512], strides = [1, 1]} : vector<48x512xf32> to vector<32x512xf32>
    %cst_5 = arith.constant 0.000000e+00 : f32
    %10 = vector.broadcast %cst_5 : f32 to vector<32x512xf32>
    %11 = arith.maximumf %9, %10 : vector<32x512xf32>
    %12 = vector.extract_strided_slice %8 {offsets = [32, 0], sizes = [16, 512], strides = [1, 1]} : vector<48x512xf32> to vector<16x512xf32>
    %c0_6 = arith.constant 0 : index
    %c0_7 = arith.constant 0 : index
    %13 = vector.load %arg3[%c0_6, %c0_7] : memref<16x32xbf16, #tpu.memory_space<vmem>>, vector<16x32xbf16>
    %14 = arith.truncf %11 : vector<32x512xf32> to vector<32x512xbf16>
    %cst_8 = arith.constant dense<0.000000e+00> : vector<16x512xf32>
    %15 = tpu.matmul %13, %14, %cst_8 {dimension_numbers = #tpu.dot_dimension_numbers<[1], [0], [0], [1], [0, 0, 1, 1], [], []>} : vector<16x32xbf16>, vector<32x512xbf16>, vector<16x512xf32> -> vector<16x512xf32>
    %16 = arith.addf %12, %15 : vector<16x512xf32>
    %cst_9 = arith.constant 0.000000e+00 : f32
    %17 = vector.broadcast %cst_9 : f32 to vector<16x512xf32>
    %18 = arith.maximumf %16, %17 : vector<16x512xf32>
    %c0_10 = arith.constant 0 : index
    %c0_11 = arith.constant 0 : index
    %19 = vector.load %arg4[%c0_10, %c0_11] : memref<36x16xbf16, #tpu.memory_space<vmem>>, vector<36x16xbf16>
    %20 = arith.truncf %18 : vector<16x512xf32> to vector<16x512xbf16>
    %cst_12 = arith.constant dense<0.000000e+00> : vector<36x512xf32>
    %21 = tpu.matmul %19, %20, %cst_12 {dimension_numbers = #tpu.dot_dimension_numbers<[1], [0], [0], [1], [0, 0, 1, 1], [], []>} : vector<36x16xbf16>, vector<16x512xbf16>, vector<36x512xf32> -> vector<36x512xf32>
    %22 = vector.broadcast %1 : vector<36x1xf32> to vector<36x512xf32>
    %23 = arith.addf %21, %22 : vector<36x512xf32>
    %24 = vector.extract_strided_slice %23 {offsets = [0, 0], sizes = [36, 256], strides = [1, 1]} : vector<36x512xf32> to vector<36x256xf32>
    %cst_13 = arith.constant dense<0.000000e+00> : vector<36xf32>
    %25 = vector.multi_reduction <add>, %24, %cst_13 [1] : vector<36x256xf32> to vector<36xf32>
    %26 = vector.shape_cast %25 : vector<36xf32> to vector<36x1xf32>
    %27 = arith.mulf %24, %24 : vector<36x256xf32>
    %cst_14 = arith.constant dense<0.000000e+00> : vector<36xf32>
    %28 = vector.multi_reduction <add>, %27, %cst_14 [1] : vector<36x256xf32> to vector<36xf32>
    %29 = vector.shape_cast %28 : vector<36xf32> to vector<36x1xf32>
    %c0_15 = arith.constant 0 : index
    %c0_16 = arith.constant 0 : index
    %30 = vector.load %arg5[%c0_15, %c0_16] : memref<36x36xf32, #tpu.memory_space<vmem>>, vector<36x36xf32>
    %cst_17 = arith.constant dense<0.000000e+00> : vector<36x1xf32>
    %31 = tpu.matmul %30, %26, %cst_17 {dimension_numbers = #tpu.dot_dimension_numbers<[1], [0], [0], [1], [0, 0, 1, 1], [], []>} : vector<36x36xf32>, vector<36x1xf32>, vector<36x1xf32> -> vector<36x1xf32>
    %c0_18 = arith.constant 0 : index
    %c0_19 = arith.constant 0 : index
    %32 = vector.load %arg5[%c0_18, %c0_19] : memref<36x36xf32, #tpu.memory_space<vmem>>, vector<36x36xf32>
    %cst_20 = arith.constant dense<0.000000e+00> : vector<36x1xf32>
    %33 = tpu.matmul %32, %29, %cst_20 {dimension_numbers = #tpu.dot_dimension_numbers<[1], [0], [0], [1], [0, 0, 1, 1], [], []>} : vector<36x36xf32>, vector<36x1xf32>, vector<36x1xf32> -> vector<36x1xf32>
    %34 = arith.mulf %31, %31 : vector<36x1xf32>
    %35 = arith.subf %33, %34 : vector<36x1xf32>
    %cst_21 = arith.constant 0.000000e+00 : f32
    %36 = vector.broadcast %cst_21 : f32 to vector<36x1xf32>
    %37 = arith.maximumf %35, %36 : vector<36x1xf32>
    %cst_22 = arith.constant 9.99999974E-6 : f32
    %38 = vector.broadcast %cst_22 : f32 to vector<36x1xf32>
    %39 = arith.addf %37, %38 : vector<36x1xf32>
    %40 = math.rsqrt %39 : vector<36x1xf32>
    %41 = arith.mulf %40, %2 : vector<36x1xf32>
    %42 = vector.broadcast %41 : vector<36x1xf32> to vector<36x256xf32>
    %43 = arith.mulf %24, %42 : vector<36x256xf32>
    %44 = arith.mulf %31, %41 : vector<36x1xf32>
    %45 = arith.subf %3, %44 : vector<36x1xf32>
    %46 = vector.broadcast %45 : vector<36x1xf32> to vector<36x256xf32>
    %47 = arith.addf %43, %46 : vector<36x256xf32>
    %48 = vector.extract_strided_slice %23 {offsets = [0, 256], sizes = [36, 256], strides = [1, 1]} : vector<36x512xf32> to vector<36x256xf32>
    %cst_23 = arith.constant dense<0.000000e+00> : vector<36xf32>
    %49 = vector.multi_reduction <add>, %48, %cst_23 [1] : vector<36x256xf32> to vector<36xf32>
    %50 = vector.shape_cast %49 : vector<36xf32> to vector<36x1xf32>
    %51 = arith.mulf %48, %48 : vector<36x256xf32>
    %cst_24 = arith.constant dense<0.000000e+00> : vector<36xf32>
    %52 = vector.multi_reduction <add>, %51, %cst_24 [1] : vector<36x256xf32> to vector<36xf32>
    %53 = vector.shape_cast %52 : vector<36xf32> to vector<36x1xf32>
    %c0_25 = arith.constant 0 : index
    %c0_26 = arith.constant 0 : index
    %54 = vector.load %arg5[%c0_25, %c0_26] : memref<36x36xf32, #tpu.memory_space<vmem>>, vector<36x36xf32>
    %cst_27 = arith.constant dense<0.000000e+00> : vector<36x1xf32>
    %55 = tpu.matmul %54, %50, %cst_27 {dimension_numbers = #tpu.dot_dimension_numbers<[1], [0], [0], [1], [0, 0, 1, 1], [], []>} : vector<36x36xf32>, vector<36x1xf32>, vector<36x1xf32> -> vector<36x1xf32>
    %c0_28 = arith.constant 0 : index
    %c0_29 = arith.constant 0 : index
    %56 = vector.load %arg5[%c0_28, %c0_29] : memref<36x36xf32, #tpu.memory_space<vmem>>, vector<36x36xf32>
    %cst_30 = arith.constant dense<0.000000e+00> : vector<36x1xf32>
    %57 = tpu.matmul %56, %53, %cst_30 {dimension_numbers = #tpu.dot_dimension_numbers<[1], [0], [0], [1], [0, 0, 1, 1], [], []>} : vector<36x36xf32>, vector<36x1xf32>, vector<36x1xf32> -> vector<36x1xf32>
    %58 = arith.mulf %55, %55 : vector<36x1xf32>
    %59 = arith.subf %57, %58 : vector<36x1xf32>
    %cst_31 = arith.constant 0.000000e+00 : f32
    %60 = vector.broadcast %cst_31 : f32 to vector<36x1xf32>
    %61 = arith.maximumf %59, %60 : vector<36x1xf32>
    %cst_32 = arith.constant 9.99999974E-6 : f32
    %62 = vector.broadcast %cst_32 : f32 to vector<36x1xf32>
    %63 = arith.addf %61, %62 : vector<36x1xf32>
    %64 = math.rsqrt %63 : vector<36x1xf32>
    %65 = arith.mulf %64, %2 : vector<36x1xf32>
    %66 = vector.broadcast %65 : vector<36x1xf32> to vector<36x256xf32>
    %67 = arith.mulf %48, %66 : vector<36x256xf32>
    %68 = arith.mulf %55, %65 : vector<36x1xf32>
    %69 = arith.subf %3, %68 : vector<36x1xf32>
    %70 = vector.broadcast %69 : vector<36x1xf32> to vector<36x256xf32>
    %71 = arith.addf %67, %70 : vector<36x256xf32>
    %72 = tpu.concatenate %47, %71 in 1 : vector<36x256xf32>, vector<36x256xf32> -> vector<36x512xf32>
    %cst_33 = arith.constant 0.000000e+00 : f32
    %73 = vector.broadcast %cst_33 : f32 to vector<32x512xf32>
    %c0_34 = arith.constant 0 : index
    %c0_35 = arith.constant 0 : index
    %74 = vector.load %arg0[%c0_34, %c0_35] : memref<288x512xbf16, #tpu.memory_space<vmem>>, vector<32x512xbf16>
    %c0_36 = arith.constant 0 : index
    %c0_37 = arith.constant 0 : index
    %75 = vector.load %arg2[%c0_36, %c0_37] : memref<32x32xbf16, #tpu.memory_space<vmem>>, vector<32x32xbf16>
    %cst_38 = arith.constant dense<0.000000e+00> : vector<32x512xf32>
    %76 = tpu.matmul %75, %74, %cst_38 {dimension_numbers = #tpu.dot_dimension_numbers<[1], [0], [0], [1], [0, 0, 1, 1], [], []>} : vector<32x32xbf16>, vector<32x512xbf16>, vector<32x512xf32> -> vector<32x512xf32>
    %c0_39 = arith.constant 0 : index
    %c0_40 = arith.constant 0 : index
    %77 = vector.load %arg6[%c0_39, %c0_40] : memref<32x4xf32, #tpu.memory_space<vmem>>, vector<32x4xf32>
    %78 = vector.extract_strided_slice %72 {offsets = [0, 0], sizes = [4, 512], strides = [1, 1]} : vector<36x512xf32> to vector<4x512xf32>
    %cst_41 = arith.constant dense<0.000000e+00> : vector<32x512xf32>
    %79 = tpu.matmul %77, %78, %cst_41 {dimension_numbers = #tpu.dot_dimension_numbers<[1], [0], [0], [1], [0, 0, 1, 1], [], []>} : vector<32x4xf32>, vector<4x512xf32>, vector<32x512xf32> -> vector<32x512xf32>
    %80 = arith.mulf %79, %76 : vector<32x512xf32>
    %81 = arith.addf %73, %80 : vector<32x512xf32>
    %c32 = arith.constant 32 : index
    %c0_42 = arith.constant 0 : index
    %82 = vector.load %arg0[%c32, %c0_42] : memref<288x512xbf16, #tpu.memory_space<vmem>>, vector<32x512xbf16>
    %c0_43 = arith.constant 0 : index
    %c0_44 = arith.constant 0 : index
    %83 = vector.load %arg2[%c0_43, %c0_44] : memref<32x32xbf16, #tpu.memory_space<vmem>>, vector<32x32xbf16>
    %cst_45 = arith.constant dense<0.000000e+00> : vector<32x512xf32>
    %84 = tpu.matmul %83, %82, %cst_45 {dimension_numbers = #tpu.dot_dimension_numbers<[1], [0], [0], [1], [0, 0, 1, 1], [], []>} : vector<32x32xbf16>, vector<32x512xbf16>, vector<32x512xf32> -> vector<32x512xf32>
    %c0_46 = arith.constant 0 : index
    %c0_47 = arith.constant 0 : index
    %85 = vector.load %arg6[%c0_46, %c0_47] : memref<32x4xf32, #tpu.memory_space<vmem>>, vector<32x4xf32>
    %86 = vector.extract_strided_slice %72 {offsets = [4, 0], sizes = [4, 512], strides = [1, 1]} : vector<36x512xf32> to vector<4x512xf32>
    %cst_48 = arith.constant dense<0.000000e+00> : vector<32x512xf32>
    %87 = tpu.matmul %85, %86, %cst_48 {dimension_numbers = #tpu.dot_dimension_numbers<[1], [0], [0], [1], [0, 0, 1, 1], [], []>} : vector<32x4xf32>, vector<4x512xf32>, vector<32x512xf32> -> vector<32x512xf32>
    %88 = arith.mulf %87, %84 : vector<32x512xf32>
    %89 = arith.addf %81, %88 : vector<32x512xf32>
    %c64 = arith.constant 64 : index
    %c0_49 = arith.constant 0 : index
    %90 = vector.load %arg0[%c64, %c0_49] : memref<288x512xbf16, #tpu.memory_space<vmem>>, vector<32x512xbf16>
    %c0_50 = arith.constant 0 : index
    %c0_51 = arith.constant 0 : index
    %91 = vector.load %arg2[%c0_50, %c0_51] : memref<32x32xbf16, #tpu.memory_space<vmem>>, vector<32x32xbf16>
    %cst_52 = arith.constant dense<0.000000e+00> : vector<32x512xf32>
    %92 = tpu.matmul %91, %90, %cst_52 {dimension_numbers = #tpu.dot_dimension_numbers<[1], [0], [0], [1], [0, 0, 1, 1], [], []>} : vector<32x32xbf16>, vector<32x512xbf16>, vector<32x512xf32> -> vector<32x512xf32>
    %c0_53 = arith.constant 0 : index
    %c0_54 = arith.constant 0 : index
    %93 = vector.load %arg6[%c0_53, %c0_54] : memref<32x4xf32, #tpu.memory_space<vmem>>, vector<32x4xf32>
    %94 = vector.extract_strided_slice %72 {offsets = [8, 0], sizes = [4, 512], strides = [1, 1]} : vector<36x512xf32> to vector<4x512xf32>
    %cst_55 = arith.constant dense<0.000000e+00> : vector<32x512xf32>
    %95 = tpu.matmul %93, %94, %cst_55 {dimension_numbers = #tpu.dot_dimension_numbers<[1], [0], [0], [1], [0, 0, 1, 1], [], []>} : vector<32x4xf32>, vector<4x512xf32>, vector<32x512xf32> -> vector<32x512xf32>
    %96 = arith.mulf %95, %92 : vector<32x512xf32>
    %97 = arith.addf %89, %96 : vector<32x512xf32>
    %c96 = arith.constant 96 : index
    %c0_56 = arith.constant 0 : index
    %98 = vector.load %arg0[%c96, %c0_56] : memref<288x512xbf16, #tpu.memory_space<vmem>>, vector<32x512xbf16>
    %c0_57 = arith.constant 0 : index
    %c0_58 = arith.constant 0 : index
    %99 = vector.load %arg2[%c0_57, %c0_58] : memref<32x32xbf16, #tpu.memory_space<vmem>>, vector<32x32xbf16>
    %cst_59 = arith.constant dense<0.000000e+00> : vector<32x512xf32>
    %100 = tpu.matmul %99, %98, %cst_59 {dimension_numbers = #tpu.dot_dimension_numbers<[1], [0], [0], [1], [0, 0, 1, 1], [], []>} : vector<32x32xbf16>, vector<32x512xbf16>, vector<32x512xf32> -> vector<32x512xf32>
    %c0_60 = arith.constant 0 : index
    %c0_61 = arith.constant 0 : index
    %101 = vector.load %arg6[%c0_60, %c0_61] : memref<32x4xf32, #tpu.memory_space<vmem>>, vector<32x4xf32>
    %102 = vector.extract_strided_slice %72 {offsets = [12, 0], sizes = [4, 512], strides = [1, 1]} : vector<36x512xf32> to vector<4x512xf32>
    %cst_62 = arith.constant dense<0.000000e+00> : vector<32x512xf32>
    %103 = tpu.matmul %101, %102, %cst_62 {dimension_numbers = #tpu.dot_dimension_numbers<[1], [0], [0], [1], [0, 0, 1, 1], [], []>} : vector<32x4xf32>, vector<4x512xf32>, vector<32x512xf32> -> vector<32x512xf32>
    %104 = arith.mulf %103, %100 : vector<32x512xf32>
    %105 = arith.addf %97, %104 : vector<32x512xf32>
    %c128 = arith.constant 128 : index
    %c0_63 = arith.constant 0 : index
    %106 = vector.load %arg0[%c128, %c0_63] : memref<288x512xbf16, #tpu.memory_space<vmem>>, vector<32x512xbf16>
    %c0_64 = arith.constant 0 : index
    %c0_65 = arith.constant 0 : index
    %107 = vector.load %arg2[%c0_64, %c0_65] : memref<32x32xbf16, #tpu.memory_space<vmem>>, vector<32x32xbf16>
    %cst_66 = arith.constant dense<0.000000e+00> : vector<32x512xf32>
    %108 = tpu.matmul %107, %106, %cst_66 {dimension_numbers = #tpu.dot_dimension_numbers<[1], [0], [0], [1], [0, 0, 1, 1], [], []>} : vector<32x32xbf16>, vector<32x512xbf16>, vector<32x512xf32> -> vector<32x512xf32>
    %c0_67 = arith.constant 0 : index
    %c0_68 = arith.constant 0 : index
    %109 = vector.load %arg6[%c0_67, %c0_68] : memref<32x4xf32, #tpu.memory_space<vmem>>, vector<32x4xf32>
    %110 = vector.extract_strided_slice %72 {offsets = [16, 0], sizes = [4, 512], strides = [1, 1]} : vector<36x512xf32> to vector<4x512xf32>
    %cst_69 = arith.constant dense<0.000000e+00> : vector<32x512xf32>
    %111 = tpu.matmul %109, %110, %cst_69 {dimension_numbers = #tpu.dot_dimension_numbers<[1], [0], [0], [1], [0, 0, 1, 1], [], []>} : vector<32x4xf32>, vector<4x512xf32>, vector<32x512xf32> -> vector<32x512xf32>
    %112 = arith.mulf %111, %108 : vector<32x512xf32>
    %113 = arith.addf %105, %112 : vector<32x512xf32>
    %c160 = arith.constant 160 : index
    %c0_70 = arith.constant 0 : index
    %114 = vector.load %arg0[%c160, %c0_70] : memref<288x512xbf16, #tpu.memory_space<vmem>>, vector<32x512xbf16>
    %c0_71 = arith.constant 0 : index
    %c0_72 = arith.constant 0 : index
    %115 = vector.load %arg2[%c0_71, %c0_72] : memref<32x32xbf16, #tpu.memory_space<vmem>>, vector<32x32xbf16>
    %cst_73 = arith.constant dense<0.000000e+00> : vector<32x512xf32>
    %116 = tpu.matmul %115, %114, %cst_73 {dimension_numbers = #tpu.dot_dimension_numbers<[1], [0], [0], [1], [0, 0, 1, 1], [], []>} : vector<32x32xbf16>, vector<32x512xbf16>, vector<32x512xf32> -> vector<32x512xf32>
    %c0_74 = arith.constant 0 : index
    %c0_75 = arith.constant 0 : index
    %117 = vector.load %arg6[%c0_74, %c0_75] : memref<32x4xf32, #tpu.memory_space<vmem>>, vector<32x4xf32>
    %118 = vector.extract_strided_slice %72 {offsets = [20, 0], sizes = [4, 512], strides = [1, 1]} : vector<36x512xf32> to vector<4x512xf32>
    %cst_76 = arith.constant dense<0.000000e+00> : vector<32x512xf32>
    %119 = tpu.matmul %117, %118, %cst_76 {dimension_numbers = #tpu.dot_dimension_numbers<[1], [0], [0], [1], [0, 0, 1, 1], [], []>} : vector<32x4xf32>, vector<4x512xf32>, vector<32x512xf32> -> vector<32x512xf32>
    %120 = arith.mulf %119, %116 : vector<32x512xf32>
    %121 = arith.addf %113, %120 : vector<32x512xf32>
    %c192 = arith.constant 192 : index
    %c0_77 = arith.constant 0 : index
    %122 = vector.load %arg0[%c192, %c0_77] : memref<288x512xbf16, #tpu.memory_space<vmem>>, vector<32x512xbf16>
    %c0_78 = arith.constant 0 : index
    %c0_79 = arith.constant 0 : index
    %123 = vector.load %arg2[%c0_78, %c0_79] : memref<32x32xbf16, #tpu.memory_space<vmem>>, vector<32x32xbf16>
    %cst_80 = arith.constant dense<0.000000e+00> : vector<32x512xf32>
    %124 = tpu.matmul %123, %122, %cst_80 {dimension_numbers = #tpu.dot_dimension_numbers<[1], [0], [0], [1], [0, 0, 1, 1], [], []>} : vector<32x32xbf16>, vector<32x512xbf16>, vector<32x512xf32> -> vector<32x512xf32>
    %c0_81 = arith.constant 0 : index
    %c0_82 = arith.constant 0 : index
    %125 = vector.load %arg6[%c0_81, %c0_82] : memref<32x4xf32, #tpu.memory_space<vmem>>, vector<32x4xf32>
    %126 = vector.extract_strided_slice %72 {offsets = [24, 0], sizes = [4, 512], strides = [1, 1]} : vector<36x512xf32> to vector<4x512xf32>
    %cst_83 = arith.constant dense<0.000000e+00> : vector<32x512xf32>
    %127 = tpu.matmul %125, %126, %cst_83 {dimension_numbers = #tpu.dot_dimension_numbers<[1], [0], [0], [1], [0, 0, 1, 1], [], []>} : vector<32x4xf32>, vector<4x512xf32>, vector<32x512xf32> -> vector<32x512xf32>
    %128 = arith.mulf %127, %124 : vector<32x512xf32>
    %129 = arith.addf %121, %128 : vector<32x512xf32>
    %c224 = arith.constant 224 : index
    %c0_84 = arith.constant 0 : index
    %130 = vector.load %arg0[%c224, %c0_84] : memref<288x512xbf16, #tpu.memory_space<vmem>>, vector<32x512xbf16>
    %c0_85 = arith.constant 0 : index
    %c0_86 = arith.constant 0 : index
    %131 = vector.load %arg2[%c0_85, %c0_86] : memref<32x32xbf16, #tpu.memory_space<vmem>>, vector<32x32xbf16>
    %cst_87 = arith.constant dense<0.000000e+00> : vector<32x512xf32>
    %132 = tpu.matmul %131, %130, %cst_87 {dimension_numbers = #tpu.dot_dimension_numbers<[1], [0], [0], [1], [0, 0, 1, 1], [], []>} : vector<32x32xbf16>, vector<32x512xbf16>, vector<32x512xf32> -> vector<32x512xf32>
    %c0_88 = arith.constant 0 : index
    %c0_89 = arith.constant 0 : index
    %133 = vector.load %arg6[%c0_88, %c0_89] : memref<32x4xf32, #tpu.memory_space<vmem>>, vector<32x4xf32>
    %134 = vector.extract_strided_slice %72 {offsets = [28, 0], sizes = [4, 512], strides = [1, 1]} : vector<36x512xf32> to vector<4x512xf32>
    %cst_90 = arith.constant dense<0.000000e+00> : vector<32x512xf32>
    %135 = tpu.matmul %133, %134, %cst_90 {dimension_numbers = #tpu.dot_dimension_numbers<[1], [0], [0], [1], [0, 0, 1, 1], [], []>} : vector<32x4xf32>, vector<4x512xf32>, vector<32x512xf32> -> vector<32x512xf32>
    %136 = arith.mulf %135, %132 : vector<32x512xf32>
    %137 = arith.addf %129, %136 : vector<32x512xf32>
    %c256 = arith.constant 256 : index
    %c0_91 = arith.constant 0 : index
    %138 = vector.load %arg0[%c256, %c0_91] : memref<288x512xbf16, #tpu.memory_space<vmem>>, vector<32x512xbf16>
    %c0_92 = arith.constant 0 : index
    %c0_93 = arith.constant 0 : index
    %139 = vector.load %arg2[%c0_92, %c0_93] : memref<32x32xbf16, #tpu.memory_space<vmem>>, vector<32x32xbf16>
    %cst_94 = arith.constant dense<0.000000e+00> : vector<32x512xf32>
    %140 = tpu.matmul %139, %138, %cst_94 {dimension_numbers = #tpu.dot_dimension_numbers<[1], [0], [0], [1], [0, 0, 1, 1], [], []>} : vector<32x32xbf16>, vector<32x512xbf16>, vector<32x512xf32> -> vector<32x512xf32>
    %c0_95 = arith.constant 0 : index
    %c0_96 = arith.constant 0 : index
    %141 = vector.load %arg6[%c0_95, %c0_96] : memref<32x4xf32, #tpu.memory_space<vmem>>, vector<32x4xf32>
    %142 = vector.extract_strided_slice %72 {offsets = [32, 0], sizes = [4, 512], strides = [1, 1]} : vector<36x512xf32> to vector<4x512xf32>
    %cst_97 = arith.constant dense<0.000000e+00> : vector<32x512xf32>
    %143 = tpu.matmul %141, %142, %cst_97 {dimension_numbers = #tpu.dot_dimension_numbers<[1], [0], [0], [1], [0, 0, 1, 1], [], []>} : vector<32x4xf32>, vector<4x512xf32>, vector<32x512xf32> -> vector<32x512xf32>
    %144 = arith.mulf %143, %140 : vector<32x512xf32>
    %145 = arith.addf %137, %144 : vector<32x512xf32>
    %cst_98 = arith.constant 0.000000e+00 : f32
    %146 = vector.broadcast %cst_98 : f32 to vector<32x512xf32>
    %147 = arith.subf %146, %145 : vector<32x512xf32>
    %148 = math.exp %147 : vector<32x512xf32>
    %cst_99 = arith.constant 1.000000e+00 : f32
    %149 = vector.broadcast %cst_99 : f32 to vector<32x512xf32>
    %150 = arith.addf %149, %148 : vector<32x512xf32>
    %151 = tpu.reciprocal %150 {approx = true} : vector<32x512xf32> -> vector<32x512xf32>
    %152 = arith.mulf %145, %151 : vector<32x512xf32>
    %153 = vector.extract_strided_slice %152 {offsets = [0, 0], sizes = [32, 256], strides = [1, 1]} : vector<32x512xf32> to vector<32x256xf32>
    %154 = vector.extract_strided_slice %11 {offsets = [0, 0], sizes = [32, 256], strides = [1, 1]} : vector<32x512xf32> to vector<32x256xf32>
    %155 = arith.addf %153, %154 : vector<32x256xf32>
    %cst_100 = arith.constant dense<0.000000e+00> : vector<32xf32>
    %156 = vector.multi_reduction <add>, %155, %cst_100 [1] : vector<32x256xf32> to vector<32xf32>
    %157 = vector.shape_cast %156 : vector<32xf32> to vector<32x1xf32>
    %cst_101 = arith.constant 3.906250e-03 : f32
    %158 = vector.broadcast %cst_101 : f32 to vector<32x1xf32>
    %159 = arith.mulf %157, %158 : vector<32x1xf32>
    %c0_102 = arith.constant 0 : index
    %c0_103 = arith.constant 0 : index
    %160 = vector.load %arg7[%c0_102, %c0_103] : memref<32x32xf32, #tpu.memory_space<vmem>>, vector<32x32xf32>
    %cst_104 = arith.constant dense<0.000000e+00> : vector<32x1xf32>
    %161 = tpu.matmul %160, %159, %cst_104 {dimension_numbers = #tpu.dot_dimension_numbers<[1], [0], [0], [1], [0, 0, 1, 1], [], []>} : vector<32x32xf32>, vector<32x1xf32>, vector<32x1xf32> -> vector<32x1xf32>
    %162 = arith.addf %161, %4 : vector<32x1xf32>
    %cst_105 = arith.constant 0.000000e+00 : f32
    %163 = vector.broadcast %cst_105 : f32 to vector<32x1xf32>
    %164 = arith.maximumf %162, %163 : vector<32x1xf32>
    %c0_106 = arith.constant 0 : index
    %c0_107 = arith.constant 0 : index
    %165 = vector.load %arg8[%c0_106, %c0_107] : memref<64x32xf32, #tpu.memory_space<vmem>>, vector<64x32xf32>
    %cst_108 = arith.constant dense<0.000000e+00> : vector<64x1xf32>
    %166 = tpu.matmul %165, %164, %cst_108 {dimension_numbers = #tpu.dot_dimension_numbers<[1], [0], [0], [1], [0, 0, 1, 1], [], []>} : vector<64x32xf32>, vector<32x1xf32>, vector<64x1xf32> -> vector<64x1xf32>
    %167 = arith.addf %166, %5 : vector<64x1xf32>
    %168 = vector.extract_strided_slice %167 {offsets = [32, 0], sizes = [32, 1], strides = [1, 1]} : vector<64x1xf32> to vector<32x1xf32>
    %169 = vector.extract_strided_slice %167 {offsets = [0, 0], sizes = [32, 1], strides = [1, 1]} : vector<64x1xf32> to vector<32x1xf32>
    %170 = arith.subf %168, %169 : vector<32x1xf32>
    %171 = math.exp %170 : vector<32x1xf32>
    %cst_109 = arith.constant 1.000000e+00 : f32
    %172 = vector.broadcast %cst_109 : f32 to vector<32x1xf32>
    %173 = arith.addf %172, %171 : vector<32x1xf32>
    %174 = tpu.reciprocal %173 {approx = true} : vector<32x1xf32> -> vector<32x1xf32>
    %175 = vector.broadcast %174 : vector<32x1xf32> to vector<32x256xf32>
    %176 = arith.mulf %153, %175 : vector<32x256xf32>
    %cst_110 = arith.constant 1.000000e+00 : f32
    %177 = vector.broadcast %cst_110 : f32 to vector<32x1xf32>
    %178 = arith.subf %177, %174 : vector<32x1xf32>
    %179 = vector.broadcast %178 : vector<32x1xf32> to vector<32x256xf32>
    %180 = arith.mulf %154, %179 : vector<32x256xf32>
    %181 = arith.addf %176, %180 : vector<32x256xf32>
    %c0_111 = arith.constant 0 : index
    %c0_112 = arith.constant 0 : index
    %c0_113 = arith.constant 0 : index
    %182 = vector.load %arg10[%c0_111, %c0_112, %c0_113] : memref<2x32x256xf32, #tpu.memory_space<vmem>>, vector<1x32x256xf32>
    %183 = vector.shape_cast %182 : vector<1x32x256xf32> to vector<32x256xf32>
    %184 = vector.shape_cast %181 : vector<32x256xf32> to vector<1x32x256xf32>
    tpu.vector_store %arg10[%c0_111, %c0_112, %c0_113], %184 {strides = array<i32>} : memref<2x32x256xf32, #tpu.memory_space<vmem>>, vector<1x32x256xf32>,
    %185 = vector.extract_strided_slice %152 {offsets = [0, 256], sizes = [32, 256], strides = [1, 1]} : vector<32x512xf32> to vector<32x256xf32>
    %186 = vector.extract_strided_slice %11 {offsets = [0, 256], sizes = [32, 256], strides = [1, 1]} : vector<32x512xf32> to vector<32x256xf32>
    %187 = arith.addf %185, %186 : vector<32x256xf32>
    %cst_114 = arith.constant dense<0.000000e+00> : vector<32xf32>
    %188 = vector.multi_reduction <add>, %187, %cst_114 [1] : vector<32x256xf32> to vector<32xf32>
    %189 = vector.shape_cast %188 : vector<32xf32> to vector<32x1xf32>
    %cst_115 = arith.constant 3.906250e-03 : f32
    %190 = vector.broadcast %cst_115 : f32 to vector<32x1xf32>
    %191 = arith.mulf %189, %190 : vector<32x1xf32>
    %c0_116 = arith.constant 0 : index
    %c0_117 = arith.constant 0 : index
    %192 = vector.load %arg7[%c0_116, %c0_117] : memref<32x32xf32, #tpu.memory_space<vmem>>, vector<32x32xf32>
    %cst_118 = arith.constant dense<0.000000e+00> : vector<32x1xf32>
    %193 = tpu.matmul %192, %191, %cst_118 {dimension_numbers = #tpu.dot_dimension_numbers<[1], [0], [0], [1], [0, 0, 1, 1], [], []>} : vector<32x32xf32>, vector<32x1xf32>, vector<32x1xf32> -> vector<32x1xf32>
    %194 = arith.addf %193, %4 : vector<32x1xf32>
    %cst_119 = arith.constant 0.000000e+00 : f32
    %195 = vector.broadcast %cst_119 : f32 to vector<32x1xf32>
    %196 = arith.maximumf %194, %195 : vector<32x1xf32>
    %c0_120 = arith.constant 0 : index
    %c0_121 = arith.constant 0 : index
    %197 = vector.load %arg8[%c0_120, %c0_121] : memref<64x32xf32, #tpu.memory_space<vmem>>, vector<64x32xf32>
    %cst_122 = arith.constant dense<0.000000e+00> : vector<64x1xf32>
    %198 = tpu.matmul %197, %196, %cst_122 {dimension_numbers = #tpu.dot_dimension_numbers<[1], [0], [0], [1], [0, 0, 1, 1], [], []>} : vector<64x32xf32>, vector<32x1xf32>, vector<64x1xf32> -> vector<64x1xf32>
    %199 = arith.addf %198, %5 : vector<64x1xf32>
    %200 = vector.extract_strided_slice %199 {offsets = [32, 0], sizes = [32, 1], strides = [1, 1]} : vector<64x1xf32> to vector<32x1xf32>
    %201 = vector.extract_strided_slice %199 {offsets = [0, 0], sizes = [32, 1], strides = [1, 1]} : vector<64x1xf32> to vector<32x1xf32>
    %202 = arith.subf %200, %201 : vector<32x1xf32>
    %203 = math.exp %202 : vector<32x1xf32>
    %cst_123 = arith.constant 1.000000e+00 : f32
    %204 = vector.broadcast %cst_123 : f32 to vector<32x1xf32>
    %205 = arith.addf %204, %203 : vector<32x1xf32>
    %206 = tpu.reciprocal %205 {approx = true} : vector<32x1xf32> -> vector<32x1xf32>
    %207 = vector.broadcast %206 : vector<32x1xf32> to vector<32x256xf32>
    %208 = arith.mulf %185, %207 : vector<32x256xf32>
    %cst_124 = arith.constant 1.000000e+00 : f32
    %209 = vector.broadcast %cst_124 : f32 to vector<32x1xf32>
    %210 = arith.subf %209, %206 : vector<32x1xf32>
    %211 = vector.broadcast %210 : vector<32x1xf32> to vector<32x256xf32>
    %212 = arith.mulf %186, %211 : vector<32x256xf32>
    %213 = arith.addf %208, %212 : vector<32x256xf32>
    %c1 = arith.constant 1 : index
    %c0_125 = arith.constant 0 : index
    %c0_126 = arith.constant 0 : index
    %214 = vector.load %arg10[%c1, %c0_125, %c0_126] : memref<2x32x256xf32, #tpu.memory_space<vmem>>, vector<1x32x256xf32>
    %215 = vector.shape_cast %214 : vector<1x32x256xf32> to vector<32x256xf32>
    %216 = vector.shape_cast %213 : vector<32x256xf32> to vector<1x32x256xf32>
    tpu.vector_store %arg10[%c1, %c0_125, %c0_126], %216 {strides = array<i32>} : memref<2x32x256xf32, #tpu.memory_space<vmem>>, vector<1x32x256xf32>,
    return
  }
}

</mosaic_0001>

<llo_original>
// kernel: cot_layer.1
$region0: #{cot_layer.1}
  #allocation0 [shape = 'u32[]', space=smem, size = 0x4, offset = 0x4, fixed_abs, tag = 'smem constant byte address 0x4 - core index']
  #allocation1 [shape = 'u32[144,128]{1,0:T(1,128)}', space=vmem, size = 0x12000, scoped, tag = 'internal scratch']
  %s0 = inlined_call_operand.vmem [shape: bf16[288,512], index: 0, kind: input, shape index: {}]
  %s1 = inlined_call_operand.vmem [shape: bf16[48,288], index: 1, kind: input, shape index: {}]
  %s2 = inlined_call_operand.vmem [shape: bf16[32,32], index: 2, kind: input, shape index: {}]
  %s3 = inlined_call_operand.vmem [shape: bf16[16,32], index: 3, kind: input, shape index: {}]
  %s4 = inlined_call_operand.vmem [shape: bf16[36,16], index: 4, kind: input, shape index: {}]
  %s5 = inlined_call_operand.vmem [shape: f32[36,36], index: 5, kind: input, shape index: {}]
  %s6 = inlined_call_operand.vmem [shape: f32[32,4], index: 6, kind: input, shape index: {}]
  %s7 = inlined_call_operand.vmem [shape: f32[32,32], index: 7, kind: input, shape index: {}]
  %s8 = inlined_call_operand.vmem [shape: f32[64,32], index: 8, kind: input, shape index: {}]
  %s9 = inlined_call_operand.vmem [shape: f32[216,1], index: 9, kind: input, shape index: {}]
  %s10 = inlined_call_operand.vmem [shape: f32[2,32,256], index: 10, kind: output, shape index: {}]
  %s11 = sld [smem:[#allocation0]]
  $region50: #{cot_layer.1} parent=0
    _
  %s13 = ssub.s32 1, %s11
  %s14 = scalar_select 0, %s13, %s11
  // Predicated region
  $region2: #{cot_layer.1} parent=0 // pred_check
    _
  $region3: #{cot_layer.1} parent=0 // pred_check_branch
    %16 = sbr.rel (0) target = $region5
  $region4: #{cot_layer.1} parent=0 // pred_region
    _
  $region5: #{cot_layer.1} parent=0 // pred_fallthru
    _
  // Predicated region
  $region6: #{cot_layer.1} parent=0 // pred_check
    _
  $region7: #{cot_layer.1} parent=0 // pred_check_branch
    %18 = sbr.rel (0) target = $region9
  $region8: #{cot_layer.1} parent=0 // pred_region
    _
  $region9: #{cot_layer.1} parent=0 // pred_fallthru
    _
  // Predicated region
  $region10: #{cot_layer.1} parent=0 // pred_check
    _
  $region11: #{cot_layer.1} parent=0 // pred_check_branch
    %20 = sbr.rel (0) target = $region13
  $region12: #{cot_layer.1} parent=0 // pred_region
    _
  $region13: #{cot_layer.1} parent=0 // pred_fallthru
    _
  // Predicated region
  $region14: #{cot_layer.1} parent=0 // pred_check
    _
  $region15: #{cot_layer.1} parent=0 // pred_check_branch
    %22 = sbr.rel (0) target = $region17
  $region16: #{cot_layer.1} parent=0 // pred_region
    _
  $region17: #{cot_layer.1} parent=0 // pred_fallthru
    _
  // Predicated region
  $region18: #{cot_layer.1} parent=0 // pred_check
    _
  $region19: #{cot_layer.1} parent=0 // pred_check_branch
    %24 = sbr.rel (0) target = $region21
  $region20: #{cot_layer.1} parent=0 // pred_region
    _
  $region21: #{cot_layer.1} parent=0 // pred_fallthru
    _
  // Predicated region
  $region22: #{cot_layer.1} parent=0 // pred_check
    _
  $region23: #{cot_layer.1} parent=0 // pred_check_branch
    %26 = sbr.rel (0) target = $region25
  $region24: #{cot_layer.1} parent=0 // pred_region
    _
  $region25: #{cot_layer.1} parent=0 // pred_fallthru
    _
  // Predicated region
  $region26: #{cot_layer.1} parent=0 // pred_check
    _
  $region27: #{cot_layer.1} parent=0 // pred_check_branch
    %28 = sbr.rel (0) target = $region29
  $region28: #{cot_layer.1} parent=0 // pred_region
    _
  $region29: #{cot_layer.1} parent=0 // pred_fallthru
    _
  // Predicated region
  $region30: #{cot_layer.1} parent=0 // pred_check
    _
  $region31: #{cot_layer.1} parent=0 // pred_check_branch
    %30 = sbr.rel (0) target = $region33
  $region32: #{cot_layer.1} parent=0 // pred_region
    _
  $region33: #{cot_layer.1} parent=0 // pred_fallthru
    _
  // Predicated region
  $region34: #{cot_layer.1} parent=0 // pred_check
    _
  $region35: #{cot_layer.1} parent=0 // pred_check_branch
    %32 = sbr.rel (0) target = $region37
  $region36: #{cot_layer.1} parent=0 // pred_region
    _
  $region37: #{cot_layer.1} parent=0 // pred_fallthru
    _
  // Predicated region
  $region38: #{cot_layer.1} parent=0 // pred_check
    _
  $region39: #{cot_layer.1} parent=0 // pred_check_branch
    %34 = sbr.rel (0) target = $region41
  $region40: #{cot_layer.1} parent=0 // pred_region
    _
  $region41: #{cot_layer.1} parent=0 // pred_fallthru
    _
  %v36 = vld [vmem:[%s9] sm:$0xff]
  %v37 = vld [vmem:[%s9 + $0x8] sm:$0xff]
  %v38 = vld [vmem:[%s9 + $0x10] sm:$0xff]
  %v39 = vld [vmem:[%s9 + $0x18] sm:$0xff]
  %v40 = vld [vmem:[%s9 + $0x20] sm:$0xff]
  %v41 = vld [vmem:[%s9 + $0x28] sm:$0xff]
  %v42 = vld [vmem:[%s9 + $0x30] sm:$0xff]
  %v43 = vld [vmem:[%s9 + $0x38] sm:$0xff]
  %v44 = vld [vmem:[%s9 + $0x40] sm:$0xff]
  %v45 = vld [vmem:[%s9 + $0x48] sm:$0xff]
  %v46 = vld [vmem:[%s9 + $0x50] sm:$0xff]
  %v47 = vld [vmem:[%s9 + $0x58] sm:$0xff]
  %v48 = vld [vmem:[%s9 + $0x60] sm:$0xff]
  %v49 = vld [vmem:[%s9 + $0x68] sm:$0xff]
  %v50 = vld [vmem:[%s9 + $0x70] sm:$0xff]
  %v51 = vld [vmem:[%s9 + $0x78] sm:$0xff]
  %v52 = vld [vmem:[%s9 + $0x80] sm:$0xff]
  %v53 = vld [vmem:[%s9 + $0x88] sm:$0xff]
  %v54 = vld [vmem:[%s9 + $0x90] sm:$0xff]
  %v55 = vld [vmem:[%s9 + $0x98] sm:$0xff]
  %v56 = vld [vmem:[%s9 + $0xa0] sm:$0xff]
  %v57 = vld [vmem:[%s9 + $0xa8] sm:$0xff]
  %v58 = vld [vmem:[%s9 + $0xb0] sm:$0xff]
  %v59 = vld [vmem:[%s9 + $0xb8] sm:$0xff]
  %v60 = vld [vmem:[%s9 + $0xc0] sm:$0xff]
  %v61 = vld [vmem:[%s9 + $0xc8] sm:$0xff]
  %v62 = vld [vmem:[%s9 + $0xd0] sm:$0xff]
  %v63 = vld [vmem:[%s1] sm:$0xff]
  %v64 = vld [vmem:[%s1 + $0x8] sm:$0xf]
  %v65 = vld [vmem:[%s1 + $0xc] sm:$0xff]
  %v66 = vld [vmem:[%s1 + $0x14] sm:$0xf]
  %v67 = vld [vmem:[%s1 + $0x18] sm:$0xff]
  %v68 = vld [vmem:[%s1 + $0x20] sm:$0xf]
  %v69 = vld [vmem:[%s1 + $0x24] sm:$0xff]
  %v70 = vld [vmem:[%s1 + $0x2c] sm:$0xf]
  %v71 = vld [vmem:[%s1 + $0x30] sm:$0xff]
  %v72 = vld [vmem:[%s1 + $0x38] sm:$0xf]
  %v73 = vld [vmem:[%s1 + $0x3c] sm:$0xff]
  %v74 = vld [vmem:[%s1 + $0x44] sm:$0xf]
  %v75 = vld [vmem:[%s0] sm:$0xff]
  %v76 = vld [vmem:[%s0 + $0x8] sm:$0xff]
  %v77 = vld [vmem:[%s0 + $0x10] sm:$0xff]
  %v78 = vld [vmem:[%s0 + $0x18] sm:$0xff]
  %v79 = vld [vmem:[%s0 + $0x20] sm:$0xff]
  %v80 = vld [vmem:[%s0 + $0x28] sm:$0xff]
  %v81 = vld [vmem:[%s0 + $0x30] sm:$0xff]
  %v82 = vld [vmem:[%s0 + $0x38] sm:$0xff]
  %v83 = vld [vmem:[%s0 + $0x40] sm:$0xff]
  %v84 = vld [vmem:[%s0 + $0x48] sm:$0xff]
  %v85 = vld [vmem:[%s0 + $0x50] sm:$0xff]
  %v86 = vld [vmem:[%s0 + $0x58] sm:$0xff]
  %v87 = vld [vmem:[%s0 + $0x60] sm:$0xff]
  %v88 = vld [vmem:[%s0 + $0x68] sm:$0xff]
  %v89 = vld [vmem:[%s0 + $0x70] sm:$0xff]
  %v90 = vld [vmem:[%s0 + $0x78] sm:$0xff]
  %v91 = vld [vmem:[%s0 + $0x80] sm:$0xff]
  %v92 = vld [vmem:[%s0 + $0x88] sm:$0xff]
  %v93 = vld [vmem:[%s0 + $0x90] sm:$0xff]
  %v94 = vld [vmem:[%s0 + $0x98] sm:$0xff]
  %v95 = vld [vmem:[%s0 + $0xa0] sm:$0xff]
  %v96 = vld [vmem:[%s0 + $0xa8] sm:$0xff]
  %v97 = vld [vmem:[%s0 + $0xb0] sm:$0xff]
  %v98 = vld [vmem:[%s0 + $0xb8] sm:$0xff]
  %v99 = vld [vmem:[%s0 + $0xc0] sm:$0xff]
  %v100 = vld [vmem:[%s0 + $0xc8] sm:$0xff]
  %v101 = vld [vmem:[%s0 + $0xd0] sm:$0xff]
  %v102 = vld [vmem:[%s0 + $0xd8] sm:$0xff]
  %v103 = vld [vmem:[%s0 + $0xe0] sm:$0xff]
  %v104 = vld [vmem:[%s0 + $0xe8] sm:$0xff]
  %v105 = vld [vmem:[%s0 + $0xf0] sm:$0xff]
  %v106 = vld [vmem:[%s0 + $0xf8] sm:$0xff]
  %v107 = vld [vmem:[%s0 + $0x100] sm:$0xff]
  %v108 = vld [vmem:[%s0 + $0x108] sm:$0xff]
  %v109 = vld [vmem:[%s0 + $0x110] sm:$0xff]
  %v110 = vld [vmem:[%s0 + $0x118] sm:$0xff]
  %v111 = vld [vmem:[%s0 + $0x120] sm:$0xff]
  %v112 = vld [vmem:[%s0 + $0x128] sm:$0xff]
  %v113 = vld [vmem:[%s0 + $0x130] sm:$0xff]
  %v114 = vld [vmem:[%s0 + $0x138] sm:$0xff]
  %v115 = vld [vmem:[%s0 + $0x140] sm:$0xff]
  %v116 = vld [vmem:[%s0 + $0x148] sm:$0xff]
  %v117 = vld [vmem:[%s0 + $0x150] sm:$0xff]
  %v118 = vld [vmem:[%s0 + $0x158] sm:$0xff]
  %v119 = vld [vmem:[%s0 + $0x160] sm:$0xff]
  %v120 = vld [vmem:[%s0 + $0x168] sm:$0xff]
  %v121 = vld [vmem:[%s0 + $0x170] sm:$0xff]
  %v122 = vld [vmem:[%s0 + $0x178] sm:$0xff]
  %v123 = vld [vmem:[%s0 + $0x180] sm:$0xff]
  %v124 = vld [vmem:[%s0 + $0x188] sm:$0xff]
  %v125 = vld [vmem:[%s0 + $0x190] sm:$0xff]
  %v126 = vld [vmem:[%s0 + $0x198] sm:$0xff]
  %v127 = vld [vmem:[%s0 + $0x1a0] sm:$0xff]
  %v128 = vld [vmem:[%s0 + $0x1a8] sm:$0xff]
  %v129 = vld [vmem:[%s0 + $0x1b0] sm:$0xff]
  %v130 = vld [vmem:[%s0 + $0x1b8] sm:$0xff]
  %v131 = vld [vmem:[%s0 + $0x1c0] sm:$0xff]
  %v132 = vld [vmem:[%s0 + $0x1c8] sm:$0xff]
  %v133 = vld [vmem:[%s0 + $0x1d0] sm:$0xff]
  %v134 = vld [vmem:[%s0 + $0x1d8] sm:$0xff]
  %v135 = vld [vmem:[%s0 + $0x1e0] sm:$0xff]
  %v136 = vld [vmem:[%s0 + $0x1e8] sm:$0xff]
  %v137 = vld [vmem:[%s0 + $0x1f0] sm:$0xff]
  %v138 = vld [vmem:[%s0 + $0x1f8] sm:$0xff]
  %v139 = vld [vmem:[%s0 + $0x200] sm:$0xff]
  %v140 = vld [vmem:[%s0 + $0x208] sm:$0xff]
  %v141 = vld [vmem:[%s0 + $0x210] sm:$0xff]
  %v142 = vld [vmem:[%s0 + $0x218] sm:$0xff]
  %v143 = vld [vmem:[%s0 + $0x220] sm:$0xff]
  %v144 = vld [vmem:[%s0 + $0x228] sm:$0xff]
  %v145 = vld [vmem:[%s0 + $0x230] sm:$0xff]
  %v146 = vld [vmem:[%s0 + $0x238] sm:$0xff]
  %v159 = vunpack.c.l.b16 %v63
  %v160 = vunpack.c.h.b16 %v63
  %v161 = vunpack.c.l.b16 %v64
  %v162 = vunpack.c.l.b16 %v65
  %v163 = vunpack.c.h.b16 %v65
  %v164 = vunpack.c.l.b16 %v66
  %v165 = vunpack.c.l.b16 %v67
  %v166 = vunpack.c.h.b16 %v67
  %v167 = vunpack.c.l.b16 %v68
  %v168 = vunpack.c.l.b16 %v69
  %v169 = vunpack.c.h.b16 %v69
  %v170 = vunpack.c.l.b16 %v70
  %v171 = vunpack.c.l.b16 %v71
  %v172 = vunpack.c.h.b16 %v71
  %v173 = vunpack.c.l.b16 %v72
  %v174 = vunpack.c.l.b16 %v73
  %v175 = vunpack.c.h.b16 %v73
  %v176 = vunpack.c.l.b16 %v74
  %v177 = vpack.c.b16 %v162, %v159
  %v178 = vpack.c.b16 %v163, %v160
  %v179 = vpack.c.b16 %v164, %v161
  %v180 = vpack.c.b16 %v168, %v165
  %v181 = vpack.c.b16 %v169, %v166
  %v182 = vpack.c.b16 %v170, %v167
  %v183 = vpack.c.b16 %v174, %v171
  %v184 = vpack.c.b16 %v175, %v172
  %v185 = vpack.c.b16 %v176, %v173
  %v264 = vunpack.c.l.b16 %v75
  %v265 = vunpack.c.h.b16 %v75
  %v266 = vunpack.c.l.b16 %v76
  %v267 = vunpack.c.h.b16 %v76
  %v268 = vunpack.c.l.b16 %v77
  %v269 = vunpack.c.h.b16 %v77
  %v270 = vunpack.c.l.b16 %v78
  %v271 = vunpack.c.h.b16 %v78
  %v272 = vunpack.c.l.b16 %v79
  %v273 = vunpack.c.h.b16 %v79
  %v274 = vunpack.c.l.b16 %v80
  %v275 = vunpack.c.h.b16 %v80
  %v276 = vunpack.c.l.b16 %v81
  %v277 = vunpack.c.h.b16 %v81
  %v278 = vunpack.c.l.b16 %v82
  %v279 = vunpack.c.h.b16 %v82
  %v280 = vunpack.c.l.b16 %v83
  %v281 = vunpack.c.h.b16 %v83
  %v282 = vunpack.c.l.b16 %v84
  %v283 = vunpack.c.h.b16 %v84
  %v284 = vunpack.c.l.b16 %v85
  %v285 = vunpack.c.h.b16 %v85
  %v286 = vunpack.c.l.b16 %v86
  %v287 = vunpack.c.h.b16 %v86
  %v288 = vunpack.c.l.b16 %v87
  %v289 = vunpack.c.h.b16 %v87
  %v290 = vunpack.c.l.b16 %v88
  %v291 = vunpack.c.h.b16 %v88
  %v292 = vunpack.c.l.b16 %v89
  %v293 = vunpack.c.h.b16 %v89
  %v294 = vunpack.c.l.b16 %v90
  %v295 = vunpack.c.h.b16 %v90
  %v296 = vunpack.c.l.b16 %v91
  %v297 = vunpack.c.h.b16 %v91
  %v298 = vunpack.c.l.b16 %v92
  %v299 = vunpack.c.h.b16 %v92
  %v300 = vunpack.c.l.b16 %v93
  %v301 = vunpack.c.h.b16 %v93
  %v302 = vunpack.c.l.b16 %v94
  %v303 = vunpack.c.h.b16 %v94
  %v304 = vunpack.c.l.b16 %v95
  %v305 = vunpack.c.h.b16 %v95
  %v306 = vunpack.c.l.b16 %v96
  %v307 = vunpack.c.h.b16 %v96
  %v308 = vunpack.c.l.b16 %v97
  %v309 = vunpack.c.h.b16 %v97
  %v310 = vunpack.c.l.b16 %v98
  %v311 = vunpack.c.h.b16 %v98
  %v312 = vunpack.c.l.b16 %v99
  %v313 = vunpack.c.h.b16 %v99
  %v314 = vunpack.c.l.b16 %v100
  %v315 = vunpack.c.h.b16 %v100
  %v316 = vunpack.c.l.b16 %v101
  %v317 = vunpack.c.h.b16 %v101
  %v318 = vunpack.c.l.b16 %v102
  %v319 = vunpack.c.h.b16 %v102
  %v320 = vunpack.c.l.b16 %v103
  %v321 = vunpack.c.h.b16 %v103
  %v322 = vunpack.c.l.b16 %v104
  %v323 = vunpack.c.h.b16 %v104
  %v324 = vunpack.c.l.b16 %v105
  %v325 = vunpack.c.h.b16 %v105
  %v326 = vunpack.c.l.b16 %v106
  %v327 = vunpack.c.h.b16 %v106
  %v328 = vunpack.c.l.b16 %v107
  %v329 = vunpack.c.h.b16 %v107
  %v330 = vunpack.c.l.b16 %v108
  %v331 = vunpack.c.h.b16 %v108
  %v332 = vunpack.c.l.b16 %v109
  %v333 = vunpack.c.h.b16 %v109
  %v334 = vunpack.c.l.b16 %v110
  %v335 = vunpack.c.h.b16 %v110
  %v336 = vunpack.c.l.b16 %v111
  %v337 = vunpack.c.h.b16 %v111
  %v338 = vunpack.c.l.b16 %v112
  %v339 = vunpack.c.h.b16 %v112
  %v340 = vunpack.c.l.b16 %v113
  %v341 = vunpack.c.h.b16 %v113
  %v342 = vunpack.c.l.b16 %v114
  %v343 = vunpack.c.h.b16 %v114
  %v344 = vunpack.c.l.b16 %v115
  %v345 = vunpack.c.h.b16 %v115
  %v346 = vunpack.c.l.b16 %v116
  %v347 = vunpack.c.h.b16 %v116
  %v348 = vunpack.c.l.b16 %v117
  %v349 = vunpack.c.h.b16 %v117
  %v350 = vunpack.c.l.b16 %v118
  %v351 = vunpack.c.h.b16 %v118
  %v352 = vunpack.c.l.b16 %v119
  %v353 = vunpack.c.h.b16 %v119
  %v354 = vunpack.c.l.b16 %v120
  %v355 = vunpack.c.h.b16 %v120
  %v356 = vunpack.c.l.b16 %v121
  %v357 = vunpack.c.h.b16 %v121
  %v358 = vunpack.c.l.b16 %v122
  %v359 = vunpack.c.h.b16 %v122
  %v360 = vunpack.c.l.b16 %v123
  %v361 = vunpack.c.h.b16 %v123
  %v362 = vunpack.c.l.b16 %v124
  %v363 = vunpack.c.h.b16 %v124
  %v364 = vunpack.c.l.b16 %v125
  %v365 = vunpack.c.h.b16 %v125
  %v366 = vunpack.c.l.b16 %v126
  %v367 = vunpack.c.h.b16 %v126
  %v368 = vunpack.c.l.b16 %v127
  %v369 = vunpack.c.h.b16 %v127
  %v370 = vunpack.c.l.b16 %v128
  %v371 = vunpack.c.h.b16 %v128
  %v372 = vunpack.c.l.b16 %v129
  %v373 = vunpack.c.h.b16 %v129
  %v374 = vunpack.c.l.b16 %v130
  %v375 = vunpack.c.h.b16 %v130
  %v376 = vunpack.c.l.b16 %v131
  %v377 = vunpack.c.h.b16 %v131
  %v378 = vunpack.c.l.b16 %v132
  %v379 = vunpack.c.h.b16 %v132
  %v380 = vunpack.c.l.b16 %v133
  %v381 = vunpack.c.h.b16 %v133
  %v382 = vunpack.c.l.b16 %v134
  %v383 = vunpack.c.h.b16 %v134
  %v384 = vunpack.c.l.b16 %v135
  %v385 = vunpack.c.h.b16 %v135
  %v386 = vunpack.c.l.b16 %v136
  %v387 = vunpack.c.h.b16 %v136
  %v388 = vunpack.c.l.b16 %v137
  %v389 = vunpack.c.h.b16 %v137
  %v390 = vunpack.c.l.b16 %v138
  %v391 = vunpack.c.h.b16 %v138
  %v392 = vunpack.c.l.b16 %v139
  %v393 = vunpack.c.h.b16 %v139
  %v394 = vunpack.c.l.b16 %v140
  %v395 = vunpack.c.h.b16 %v140
  %v396 = vunpack.c.l.b16 %v141
  %v397 = vunpack.c.h.b16 %v141
  %v398 = vunpack.c.l.b16 %v142
  %v399 = vunpack.c.h.b16 %v142
  %v400 = vunpack.c.l.b16 %v143
  %v401 = vunpack.c.h.b16 %v143
  %v402 = vunpack.c.l.b16 %v144
  %v403 = vunpack.c.h.b16 %v144
  %v404 = vunpack.c.l.b16 %v145
  %v405 = vunpack.c.h.b16 %v145
  %v406 = vunpack.c.l.b16 %v146
  %v407 = vunpack.c.h.b16 %v146
  %v408 = vpack.c.b16 %v268, %v264
  %v409 = vpack.c.b16 %v269, %v265
  %v410 = vpack.c.b16 %v270, %v266
  %v411 = vpack.c.b16 %v271, %v267
  %v412 = vpack.c.b16 %v276, %v272
  %v413 = vpack.c.b16 %v277, %v273
  %v414 = vpack.c.b16 %v278, %v274
  %v415 = vpack.c.b16 %v279, %v275
  %v416 = vpack.c.b16 %v284, %v280
  %v417 = vpack.c.b16 %v285, %v281
  %v418 = vpack.c.b16 %v286, %v282
  %v419 = vpack.c.b16 %v287, %v283
  %v420 = vpack.c.b16 %v292, %v288
  %v421 = vpack.c.b16 %v293, %v289
  %v422 = vpack.c.b16 %v294, %v290
  %v423 = vpack.c.b16 %v295, %v291
  %v424 = vpack.c.b16 %v300, %v296
  %v425 = vpack.c.b16 %v301, %v297
  %v426 = vpack.c.b16 %v302, %v298
  %v427 = vpack.c.b16 %v303, %v299
  %v428 = vpack.c.b16 %v308, %v304
  %v429 = vpack.c.b16 %v309, %v305
  %v430 = vpack.c.b16 %v310, %v306
  %v431 = vpack.c.b16 %v311, %v307
  %v432 = vpack.c.b16 %v316, %v312
  %v433 = vpack.c.b16 %v317, %v313
  %v434 = vpack.c.b16 %v318, %v314
  %v435 = vpack.c.b16 %v319, %v315
  %v436 = vpack.c.b16 %v324, %v320
  %v437 = vpack.c.b16 %v325, %v321
  %v438 = vpack.c.b16 %v326, %v322
  %v439 = vpack.c.b16 %v327, %v323
  %v440 = vpack.c.b16 %v332, %v328
  %v441 = vpack.c.b16 %v333, %v329
  %v442 = vpack.c.b16 %v334, %v330
  %v443 = vpack.c.b16 %v335, %v331
  %v444 = vpack.c.b16 %v340, %v336
  %v445 = vpack.c.b16 %v341, %v337
  %v446 = vpack.c.b16 %v342, %v338
  %v447 = vpack.c.b16 %v343, %v339
  %v448 = vpack.c.b16 %v348, %v344
  %v449 = vpack.c.b16 %v349, %v345
  %v450 = vpack.c.b16 %v350, %v346
  %v451 = vpack.c.b16 %v351, %v347
  %v452 = vpack.c.b16 %v356, %v352
  %v453 = vpack.c.b16 %v357, %v353
  %v454 = vpack.c.b16 %v358, %v354
  %v455 = vpack.c.b16 %v359, %v355
  %v456 = vpack.c.b16 %v364, %v360
  %v457 = vpack.c.b16 %v365, %v361
  %v458 = vpack.c.b16 %v366, %v362
  %v459 = vpack.c.b16 %v367, %v363
  %v460 = vpack.c.b16 %v372, %v368
  %v461 = vpack.c.b16 %v373, %v369
  %v462 = vpack.c.b16 %v374, %v370
  %v463 = vpack.c.b16 %v375, %v371
  %v464 = vpack.c.b16 %v380, %v376
  %v465 = vpack.c.b16 %v381, %v377
  %v466 = vpack.c.b16 %v382, %v378
  %v467 = vpack.c.b16 %v383, %v379
  %v468 = vpack.c.b16 %v388, %v384
  %v469 = vpack.c.b16 %v389, %v385
  %v470 = vpack.c.b16 %v390, %v386
  %v471 = vpack.c.b16 %v391, %v387
  %v472 = vpack.c.b16 %v396, %v392
  %v473 = vpack.c.b16 %v397, %v393
  %v474 = vpack.c.b16 %v398, %v394
  %v475 = vpack.c.b16 %v399, %v395
  %v476 = vpack.c.b16 %v404, %v400
  %v477 = vpack.c.b16 %v405, %v401
  %v478 = vpack.c.b16 %v406, %v402
  %v479 = vpack.c.b16 %v407, %v403
  %vm552 = vcmask 261120
  %v554 = vsel %vm552, %v179, 0
  %v557 = vsel %vm552, %v182, 0
  %v560 = vsel %vm552, %v185, 0
  %562 = vmatprep.subr.bf16.mxu0 %v409
  %563 = vmatpush1.bf16.msra.mxu0 %v408
  %564 = vmatprep.subr.bf16.mxu0 %v413
  %565 = vmatpush1.bf16.msra.mxu0 %v412
  %566 = vmatprep.subr.bf16.mxu0 %v417
  %567 = vmatpush1.bf16.msra.mxu0 %v416
  %568 = vmatprep.subr.bf16.mxu0 %v421
  %569 = vmatpush1.bf16.msra.mxu0 %v420
  %570 = vmatprep.subr.bf16.mxu0 %v425
  %571 = vmatpush1.bf16.msra.mxu0 %v424
  %572 = vmatprep.subr.bf16.mxu0 %v429
  %573 = vmatpush1.bf16.msra.mxu0 %v428
  %574 = vmatprep.subr.bf16.mxu0 %v433
  %575 = vmatpush1.bf16.msra.mxu0 %v432
  %576 = vmatprep.subr.bf16.mxu0 %v437
  %577 = vmatpush1.bf16.msra.mxu0 %v436
  %578 = vmatprep.subr.bf16.mxu0 %v441
  %579 = vmatpush1.bf16.msra.mxu0 %v440
  %580 = vmatprep.subr.bf16.mxu0 %v445
  %581 = vmatpush1.bf16.msra.mxu0 %v444
  %582 = vmatprep.subr.bf16.mxu0 %v449
  %583 = vmatpush1.bf16.msra.mxu0 %v448
  %584 = vmatprep.subr.bf16.mxu0 %v453
  %585 = vmatpush1.bf16.msra.mxu0 %v452
  %586 = vmatprep.subr.bf16.mxu0 %v457
  %587 = vmatpush1.bf16.msra.mxu0 %v456
  %588 = vmatprep.subr.bf16.mxu0 %v461
  %589 = vmatpush1.bf16.msra.mxu0 %v460
  %590 = vmatprep.subr.bf16.mxu0 %v465
  %591 = vmatpush1.bf16.msra.mxu0 %v464
  %592 = vmatprep.subr.bf16.mxu0 %v469
  %593 = vmatpush1.bf16.msra.mxu0 %v468
  %594 = vmatprep.mubr.bf16.mxu0 %v178
  %595 = vmatmul.mubr.bf16.gmra.mrb[0].mxu0 %v177
  %v596 = vpop.f32.mrb[0].mxu0
  %v597 = vadd.f32 0.0, %v596
  %v598 = vpop.f32.mrb[0].mxu0
  %v599 = vadd.f32 0.0, %v598
  %v600 = vpop.f32.mrb[0].mxu0
  %v601 = vadd.f32 0.0, %v600
  %v602 = vpop.f32.mrb[0].mxu0
  %v603 = vadd.f32 0.0, %v602
  %604 = vmatprep.mubr.bf16.mxu0 %v181
  %605 = vmatmul.mubr.bf16.gmra.mrb[0].mxu0 %v180
  %v606 = vpop.f32.mrb[0].mxu0
  %v607 = vadd.f32 0.0, %v606
  %v608 = vpop.f32.mrb[0].mxu0
  %v609 = vadd.f32 0.0, %v608
  %v610 = vpop.f32.mrb[0].mxu0
  %v611 = vadd.f32 0.0, %v610
  %v612 = vpop.f32.mrb[0].mxu0
  %v613 = vadd.f32 0.0, %v612
  %614 = vmatprep.mubr.bf16.mxu0 %v184
  %615 = vmatmul.mubr.bf16.gmra.mrb[0].mxu0 %v183
  %v616 = vpop.f32.mrb[0].mxu0
  %v617 = vadd.f32 0.0, %v616
  %v618 = vpop.f32.mrb[0].mxu0
  %v619 = vadd.f32 0.0, %v618
  %v620 = vpop.f32.mrb[0].mxu0
  %v621 = vadd.f32 0.0, %v620
  %v622 = vpop.f32.mrb[0].mxu0
  %v623 = vadd.f32 0.0, %v622
  %624 = vdwg.mxu0
  %625 = vmatprep.subr.bf16.mxu0 %v473
  %626 = vmatpush1.bf16.msra.mxu0 %v472
  %627 = vmatprep.subr.bf16.mxu0 %v477
  %628 = vmatpush1.bf16.msra.mxu0 %v476
  %629 = vmatprep.subr.bf16.mxu0 0
  %630 = vmatpush1.bf16.msra.mxu0 0
  %631 = vmatprep.subr.bf16.mxu0 0
  %632 = vmatpush1.bf16.msra.mxu0 0
  %633 = vmatprep.subr.bf16.mxu0 0
  %634 = vmatpush1.bf16.msra.mxu0 0
  %635 = vmatprep.subr.bf16.mxu0 0
  %636 = vmatpush1.bf16.msra.mxu0 0
  %637 = vmatprep.subr.bf16.mxu0 0
  %638 = vmatpush1.bf16.msra.mxu0 0
  %639 = vmatprep.subr.bf16.mxu0 0
  %640 = vmatpush1.bf16.msra.mxu0 0
  %641 = vmatprep.subr.bf16.mxu0 0
  %642 = vmatpush1.bf16.msra.mxu0 0
  %643 = vmatprep.subr.bf16.mxu0 0
  %644 = vmatpush1.bf16.msra.mxu0 0
  %645 = vmatprep.subr.bf16.mxu0 0
  %646 = vmatpush1.bf16.msra.mxu0 0
  %647 = vmatprep.subr.bf16.mxu0 0
  %648 = vmatpush1.bf16.msra.mxu0 0
  %649 = vmatprep.subr.bf16.mxu0 0
  %650 = vmatpush1.bf16.msra.mxu0 0
  %651 = vmatprep.subr.bf16.mxu0 0
  %652 = vmatpush1.bf16.msra.mxu0 0
  %653 = vmatprep.subr.bf16.mxu0 0
  %654 = vmatpush1.bf16.msra.mxu0 0
  %655 = vmatprep.subr.bf16.mxu0 0
  %656 = vmatpush1.bf16.msra.mxu0 0
  %657 = vmatprep.mubr.bf16.mxu0 0
  %658 = vmatmul.mubr.bf16.gmra.mrb[0].mxu0 %v554
  %v659 = vpop.f32.mrb[0].mxu0
  %v660 = vadd.f32 %v597, %v659
  %v661 = vpop.f32.mrb[0].mxu0
  %v662 = vadd.f32 %v599, %v661
  %v663 = vpop.f32.mrb[0].mxu0
  %v664 = vadd.f32 %v601, %v663
  %v665 = vpop.f32.mrb[0].mxu0
  %v666 = vadd.f32 %v603, %v665
  %667 = vmatprep.mubr.bf16.mxu0 0
  %668 = vmatmul.mubr.bf16.gmra.mrb[0].mxu0 %v557
  %v669 = vpop.f32.mrb[0].mxu0
  %v670 = vadd.f32 %v607, %v669
  %v671 = vpop.f32.mrb[0].mxu0
  %v672 = vadd.f32 %v609, %v671
  %v673 = vpop.f32.mrb[0].mxu0
  %v674 = vadd.f32 %v611, %v673
  %v675 = vpop.f32.mrb[0].mxu0
  %v676 = vadd.f32 %v613, %v675
  %677 = vmatprep.mubr.bf16.mxu0 0
  %678 = vmatmul.mubr.bf16.gmra.mrb[0].mxu0 %v560
  %v679 = vpop.f32.mrb[0].mxu0
  %v680 = vadd.f32 %v617, %v679
  %v681 = vpop.f32.mrb[0].mxu0
  %v682 = vadd.f32 %v619, %v681
  %v683 = vpop.f32.mrb[0].mxu0
  %v684 = vadd.f32 %v621, %v683
  %v685 = vpop.f32.mrb[0].mxu0
  %v686 = vadd.f32 %v623, %v685
  %687 = vdwg.mxu0
  %688 = vmatprep.subr.bf16.mxu0 %v411
  %689 = vmatpush1.bf16.msra.mxu0 %v410
  %690 = vmatprep.subr.bf16.mxu0 %v415
  %691 = vmatpush1.bf16.msra.mxu0 %v414
  %692 = vmatprep.subr.bf16.mxu0 %v419
  %693 = vmatpush1.bf16.msra.mxu0 %v418
  %694 = vmatprep.subr.bf16.mxu0 %v423
  %695 = vmatpush1.bf16.msra.mxu0 %v422
  %696 = vmatprep.subr.bf16.mxu0 %v427
  %697 = vmatpush1.bf16.msra.mxu0 %v426
  %698 = vmatprep.subr.bf16.mxu0 %v431
  %699 = vmatpush1.bf16.msra.mxu0 %v430
  %700 = vmatprep.subr.bf16.mxu0 %v435
  %701 = vmatpush1.bf16.msra.mxu0 %v434
  %702 = vmatprep.subr.bf16.mxu0 %v439
  %703 = vmatpush1.bf16.msra.mxu0 %v438
  %704 = vmatprep.subr.bf16.mxu0 %v443
  %705 = vmatpush1.bf16.msra.mxu0 %v442
  %706 = vmatprep.subr.bf16.mxu0 %v447
  %707 = vmatpush1.bf16.msra.mxu0 %v446
  %708 = vmatprep.subr.bf16.mxu0 %v451
  %709 = vmatpush1.bf16.msra.mxu0 %v450
  %710 = vmatprep.subr.bf16.mxu0 %v455
  %711 = vmatpush1.bf16.msra.mxu0 %v454
  %712 = vmatprep.subr.bf16.mxu0 %v459
  %713 = vmatpush1.bf16.msra.mxu0 %v458
  %714 = vmatprep.subr.bf16.mxu0 %v463
  %715 = vmatpush1.bf16.msra.mxu0 %v462
  %716 = vmatprep.subr.bf16.mxu0 %v467
  %717 = vmatpush1.bf16.msra.mxu0 %v466
  %718 = vmatprep.subr.bf16.mxu0 %v471
  %719 = vmatpush1.bf16.msra.mxu0 %v470
  %720 = vmatprep.mubr.bf16.mxu0 %v178
  %721 = vmatmul.mubr.bf16.gmra.mrb[0].mxu0 %v177
  %v722 = vpop.f32.mrb[0].mxu0
  %v723 = vadd.f32 0.0, %v722
  %v724 = vpop.f32.mrb[0].mxu0
  %v725 = vadd.f32 0.0, %v724
  %v726 = vpop.f32.mrb[0].mxu0
  %v727 = vadd.f32 0.0, %v726
  %v728 = vpop.f32.mrb[0].mxu0
  %v729 = vadd.f32 0.0, %v728
  %730 = vmatprep.mubr.bf16.mxu0 %v181
  %731 = vmatmul.mubr.bf16.gmra.mrb[0].mxu0 %v180
  %v732 = vpop.f32.mrb[0].mxu0
  %v733 = vadd.f32 0.0, %v732
  %v734 = vpop.f32.mrb[0].mxu0
  %v735 = vadd.f32 0.0, %v734
  %v736 = vpop.f32.mrb[0].mxu0
  %v737 = vadd.f32 0.0, %v736
  %v738 = vpop.f32.mrb[0].mxu0
  %v739 = vadd.f32 0.0, %v738
  %740 = vmatprep.mubr.bf16.mxu0 %v184
  %741 = vmatmul.mubr.bf16.gmra.mrb[0].mxu0 %v183
  %v742 = vpop.f32.mrb[0].mxu0
  %v743 = vadd.f32 0.0, %v742
  %v744 = vpop.f32.mrb[0].mxu0
  %v745 = vadd.f32 0.0, %v744
  %v746 = vpop.f32.mrb[0].mxu0
  %v747 = vadd.f32 0.0, %v746
  %v748 = vpop.f32.mrb[0].mxu0
  %v749 = vadd.f32 0.0, %v748
  %750 = vdwg.mxu0
  %751 = vmatprep.subr.bf16.mxu0 %v475
  %752 = vmatpush1.bf16.msra.mxu0 %v474
  %753 = vmatprep.subr.bf16.mxu0 %v479
  %754 = vmatpush1.bf16.msra.mxu0 %v478
  %755 = vmatprep.subr.bf16.mxu0 0
  %756 = vmatpush1.bf16.msra.mxu0 0
  %757 = vmatprep.subr.bf16.mxu0 0
  %758 = vmatpush1.bf16.msra.mxu0 0
  %759 = vmatprep.subr.bf16.mxu0 0
  %760 = vmatpush1.bf16.msra.mxu0 0
  %761 = vmatprep.subr.bf16.mxu0 0
  %762 = vmatpush1.bf16.msra.mxu0 0
  %763 = vmatprep.subr.bf16.mxu0 0
  %764 = vmatpush1.bf16.msra.mxu0 0
  %765 = vmatprep.subr.bf16.mxu0 0
  %766 = vmatpush1.bf16.msra.mxu0 0
  %767 = vmatprep.subr.bf16.mxu0 0
  %768 = vmatpush1.bf16.msra.mxu0 0
  %769 = vmatprep.subr.bf16.mxu0 0
  %770 = vmatpush1.bf16.msra.mxu0 0
  %771 = vmatprep.subr.bf16.mxu0 0
  %772 = vmatpush1.bf16.msra.mxu0 0
  %773 = vmatprep.subr.bf16.mxu0 0
  %774 = vmatpush1.bf16.msra.mxu0 0
  %775 = vmatprep.subr.bf16.mxu0 0
  %776 = vmatpush1.bf16.msra.mxu0 0
  %777 = vmatprep.subr.bf16.mxu0 0
  %778 = vmatpush1.bf16.msra.mxu0 0
  %779 = vmatprep.subr.bf16.mxu0 0
  %780 = vmatpush1.bf16.msra.mxu0 0
  %781 = vmatprep.subr.bf16.mxu0 0
  %782 = vmatpush1.bf16.msra.mxu0 0
  %783 = vmatprep.mubr.bf16.mxu0 0
  %784 = vmatmul.mubr.bf16.gmra.mrb[0].mxu0 %v554
  %v785 = vpop.f32.mrb[0].mxu0
  %v786 = vadd.f32 %v723, %v785
  %v787 = vpop.f32.mrb[0].mxu0
  %v788 = vadd.f32 %v725, %v787
  %v789 = vpop.f32.mrb[0].mxu0
  %v790 = vadd.f32 %v727, %v789
  %v791 = vpop.f32.mrb[0].mxu0
  %v792 = vadd.f32 %v729, %v791
  %793 = vmatprep.mubr.bf16.mxu0 0
  %794 = vmatmul.mubr.bf16.gmra.mrb[0].mxu0 %v557
  %v795 = vpop.f32.mrb[0].mxu0
  %v796 = vadd.f32 %v733, %v795
  %v797 = vpop.f32.mrb[0].mxu0
  %v798 = vadd.f32 %v735, %v797
  %v799 = vpop.f32.mrb[0].mxu0
  %v800 = vadd.f32 %v737, %v799
  %v801 = vpop.f32.mrb[0].mxu0
  %v802 = vadd.f32 %v739, %v801
  %803 = vmatprep.mubr.bf16.mxu0 0
  %804 = vmatmul.mubr.bf16.gmra.mrb[0].mxu0 %v560
  %v805 = vpop.f32.mrb[0].mxu0
  %v806 = vadd.f32 %v743, %v805
  %v807 = vpop.f32.mrb[0].mxu0
  %v808 = vadd.f32 %v745, %v807
  %v809 = vpop.f32.mrb[0].mxu0
  %v810 = vadd.f32 %v747, %v809
  %v811 = vpop.f32.mrb[0].mxu0
  %v812 = vadd.f32 %v749, %v811
  %813 = vdwg.mxu0
  %v814 = vmax.f32 %v660, 0.0
  %v815 = vmax.f32 %v662, 0.0
  %v816 = vmax.f32 %v786, 0.0
  %v817 = vmax.f32 %v788, 0.0
  %v818 = vmax.f32 %v664, 0.0
  %v819 = vmax.f32 %v666, 0.0
  %v820 = vmax.f32 %v790, 0.0
  %v821 = vmax.f32 %v792, 0.0
  %v822 = vmax.f32 %v670, 0.0
  %v823 = vmax.f32 %v672, 0.0
  %v824 = vmax.f32 %v796, 0.0
  %v825 = vmax.f32 %v798, 0.0
  %v826 = vmax.f32 %v674, 0.0
  %v827 = vmax.f32 %v676, 0.0
  %v828 = vmax.f32 %v800, 0.0
  %v829 = vmax.f32 %v802, 0.0
  %v830 = vld [vmem:[%s3] sm:$0xf]
  %v831 = vld [vmem:[%s3 + $0x4] sm:$0xf]
  %v832 = vpack.c.bf16 %v818, %v814
  %v833 = vpack.c.bf16 %v819, %v815
  %v834 = vpack.c.bf16 %v820, %v816
  %v835 = vpack.c.bf16 %v821, %v817
  %v836 = vpack.c.bf16 %v826, %v822
  %v837 = vpack.c.bf16 %v827, %v823
  %v838 = vpack.c.bf16 %v828, %v824
  %v839 = vpack.c.bf16 %v829, %v825
  %v842 = vunpack.c.l.b16 %v830
  %v843 = vunpack.c.l.b16 %v831
  %v844 = vpack.c.b16 %v843, %v842
  %v846 = vsel %vm552, %v844, 0
  %848 = vmatprep.subr.bf16.mxu0 %v833
  %849 = vmatpush1.bf16.msra.mxu0 %v832
  %850 = vmatprep.subr.bf16.mxu0 %v837
  %851 = vmatpush1.bf16.msra.mxu0 %v836
  %852 = vmatprep.subr.bf16.mxu0 0
  %853 = vmatpush1.bf16.msra.mxu0 0
  %854 = vmatprep.subr.bf16.mxu0 0
  %855 = vmatpush1.bf16.msra.mxu0 0
  %856 = vmatprep.subr.bf16.mxu0 0
  %857 = vmatpush1.bf16.msra.mxu0 0
  %858 = vmatprep.subr.bf16.mxu0 0
  %859 = vmatpush1.bf16.msra.mxu0 0
  %860 = vmatprep.subr.bf16.mxu0 0
  %861 = vmatpush1.bf16.msra.mxu0 0
  %862 = vmatprep.subr.bf16.mxu0 0
  %863 = vmatpush1.bf16.msra.mxu0 0
  %864 = vmatprep.subr.bf16.mxu0 0
  %865 = vmatpush1.bf16.msra.mxu0 0
  %866 = vmatprep.subr.bf16.mxu0 0
  %867 = vmatpush1.bf16.msra.mxu0 0
  %868 = vmatprep.subr.bf16.mxu0 0
  %869 = vmatpush1.bf16.msra.mxu0 0
  %870 = vmatprep.subr.bf16.mxu0 0
  %871 = vmatpush1.bf16.msra.mxu0 0
  %872 = vmatprep.subr.bf16.mxu0 0
  %873 = vmatpush1.bf16.msra.mxu0 0
  %874 = vmatprep.subr.bf16.mxu0 0
  %875 = vmatpush1.bf16.msra.mxu0 0
  %876 = vmatprep.subr.bf16.mxu0 0
  %877 = vmatpush1.bf16.msra.mxu0 0
  %878 = vmatprep.subr.bf16.mxu0 0
  %879 = vmatpush1.bf16.msra.mxu0 0
  %880 = vmatprep.mubr.bf16.mxu0 0
  %881 = vmatmul.mubr.bf16.gmra.mrb[0].mxu0 %v846
  %v882 = vpop.f32.mrb[0].mxu0
  %v883 = vadd.f32 0.0, %v882
  %v884 = vpop.f32.mrb[0].mxu0
  %v885 = vadd.f32 0.0, %v884
  %v886 = vpop.f32.mrb[0].mxu0
  %v887 = vadd.f32 0.0, %v886
  %v888 = vpop.f32.mrb[0].mxu0
  %v889 = vadd.f32 0.0, %v888
  %890 = vdwg.mxu0
  %891 = vmatprep.subr.bf16.mxu0 %v835
  %892 = vmatpush1.bf16.msra.mxu0 %v834
  %893 = vmatprep.subr.bf16.mxu0 %v839
  %894 = vmatpush1.bf16.msra.mxu0 %v838
  %895 = vmatprep.subr.bf16.mxu0 0
  %896 = vmatpush1.bf16.msra.mxu0 0
  %897 = vmatprep.subr.bf16.mxu0 0
  %898 = vmatpush1.bf16.msra.mxu0 0
  %899 = vmatprep.subr.bf16.mxu0 0
  %900 = vmatpush1.bf16.msra.mxu0 0
  %901 = vmatprep.subr.bf16.mxu0 0
  %902 = vmatpush1.bf16.msra.mxu0 0
  %903 = vmatprep.subr.bf16.mxu0 0
  %904 = vmatpush1.bf16.msra.mxu0 0
  %905 = vmatprep.subr.bf16.mxu0 0
  %906 = vmatpush1.bf16.msra.mxu0 0
  %907 = vmatprep.subr.bf16.mxu0 0
  %908 = vmatpush1.bf16.msra.mxu0 0
  %909 = vmatprep.subr.bf16.mxu0 0
  %910 = vmatpush1.bf16.msra.mxu0 0
  %911 = vmatprep.subr.bf16.mxu0 0
  %912 = vmatpush1.bf16.msra.mxu0 0
  %913 = vmatprep.subr.bf16.mxu0 0
  %914 = vmatpush1.bf16.msra.mxu0 0
  %915 = vmatprep.subr.bf16.mxu0 0
  %916 = vmatpush1.bf16.msra.mxu0 0
  %917 = vmatprep.subr.bf16.mxu0 0
  %918 = vmatpush1.bf16.msra.mxu0 0
  %919 = vmatprep.subr.bf16.mxu0 0
  %920 = vmatpush1.bf16.msra.mxu0 0
  %921 = vmatprep.subr.bf16.mxu0 0
  %922 = vmatpush1.bf16.msra.mxu0 0
  %923 = vmatprep.mubr.bf16.mxu0 0
  %924 = vmatmul.mubr.bf16.gmra.mrb[0].mxu0 %v846
  %v925 = vpop.f32.mrb[0].mxu0
  %v926 = vadd.f32 0.0, %v925
  %v927 = vpop.f32.mrb[0].mxu0
  %v928 = vadd.f32 0.0, %v927
  %v929 = vpop.f32.mrb[0].mxu0
  %v930 = vadd.f32 0.0, %v929
  %v931 = vpop.f32.mrb[0].mxu0
  %v932 = vadd.f32 0.0, %v931
  %933 = vdwg.mxu0
  %v934 = vadd.f32 %v680, %v883
  %v935 = vadd.f32 %v682, %v885
  %v936 = vadd.f32 %v806, %v926
  %v937 = vadd.f32 %v808, %v928
  %v938 = vadd.f32 %v684, %v887
  %v939 = vadd.f32 %v686, %v889
  %v940 = vadd.f32 %v810, %v930
  %v941 = vadd.f32 %v812, %v932
  %v942 = vmax.f32 %v934, 0.0
  %v943 = vmax.f32 %v935, 0.0
  %v944 = vmax.f32 %v936, 0.0
  %v945 = vmax.f32 %v937, 0.0
  %v946 = vmax.f32 %v938, 0.0
  %v947 = vmax.f32 %v939, 0.0
  %v948 = vmax.f32 %v940, 0.0
  %v949 = vmax.f32 %v941, 0.0
  %v950 = vld [vmem:[%s4] sm:$0xf]
  %v951 = vld [vmem:[%s4 + $0x4] sm:$0xf]
  %v952 = vld [vmem:[%s4 + $0x8] sm:$0xf]
  %v953 = vld [vmem:[%s4 + $0xc] sm:$0xf]
  %v954 = vld [vmem:[%s4 + $0x10] sm:$0x3]
  %v955 = vpack.c.bf16 %v946, %v942
  %v956 = vpack.c.bf16 %v947, %v943
  %v957 = vpack.c.bf16 %v948, %v944
  %v958 = vpack.c.bf16 %v949, %v945
  %960 = vset.pattern.permute.xlu0 0
  %961 = vperm.xlu0 %960, %v36
  %v962 = vpop.permute.xlu0 %961
  %965 = vset.pattern.permute.xlu0 0
  %966 = vperm.xlu0 %965, %v37
  %v967 = vpop.permute.xlu0 %966
  %970 = vset.pattern.permute.xlu0 0
  %971 = vperm.xlu0 %970, %v38
  %v972 = vpop.permute.xlu0 %971
  %975 = vset.pattern.permute.xlu0 0
  %976 = vperm.xlu0 %975, %v39
  %v977 = vpop.permute.xlu0 %976
  %980 = vset.pattern.permute.xlu0 0
  %981 = vperm.xlu0 %980, %v40
  %v982 = vpop.permute.xlu0 %981
  %v989 = vunpack.c.l.b16 %v950
  %v990 = vunpack.c.l.b16 %v951
  %v991 = vunpack.c.l.b16 %v952
  %v992 = vunpack.c.l.b16 %v953
  %v993 = vunpack.c.l.b16 %v954
  %v994 = vpack.c.b16 %v990, %v989
  %v995 = vpack.c.b16 %v992, %v991
  %v996 = vpack.c.b16 %v993, %v993
  %vm997 = vcmask 130048
  %v999 = vsel %vm997, %v994, 0
  %v1002 = vsel %vm997, %v995, 0
  %v1005 = vsel %vm997, %v996, 0
  %1007 = vmatprep.subr.bf16.mxu0 %v956
  %1008 = vmatpush1.bf16.msra.mxu0 %v955
  %1009 = vmatprep.subr.bf16.mxu0 0
  %1010 = vmatpush1.bf16.msra.mxu0 0
  %1011 = vmatprep.subr.bf16.mxu0 0
  %1012 = vmatpush1.bf16.msra.mxu0 0
  %1013 = vmatprep.subr.bf16.mxu0 0
  %1014 = vmatpush1.bf16.msra.mxu0 0
  %1015 = vmatprep.subr.bf16.mxu0 0
  %1016 = vmatpush1.bf16.msra.mxu0 0
  %1017 = vmatprep.subr.bf16.mxu0 0
  %1018 = vmatpush1.bf16.msra.mxu0 0
  %1019 = vmatprep.subr.bf16.mxu0 0
  %1020 = vmatpush1.bf16.msra.mxu0 0
  %1021 = vmatprep.subr.bf16.mxu0 0
  %1022 = vmatpush1.bf16.msra.mxu0 0
  %1023 = vmatprep.subr.bf16.mxu0 0
  %1024 = vmatpush1.bf16.msra.mxu0 0
  %1025 = vmatprep.subr.bf16.mxu0 0
  %1026 = vmatpush1.bf16.msra.mxu0 0
  %1027 = vmatprep.subr.bf16.mxu0 0
  %1028 = vmatpush1.bf16.msra.mxu0 0
  %1029 = vmatprep.subr.bf16.mxu0 0
  %1030 = vmatpush1.bf16.msra.mxu0 0
  %1031 = vmatprep.subr.bf16.mxu0 0
  %1032 = vmatpush1.bf16.msra.mxu0 0
  %1033 = vmatprep.subr.bf16.mxu0 0
  %1034 = vmatpush1.bf16.msra.mxu0 0
  %1035 = vmatprep.subr.bf16.mxu0 0
  %1036 = vmatpush1.bf16.msra.mxu0 0
  %1037 = vmatprep.subr.bf16.mxu0 0
  %1038 = vmatpush1.bf16.msra.mxu0 0
  %1039 = vmatprep.mubr.bf16.mxu0 0
  %1040 = vmatmul.mubr.bf16.gmra.mrb[0].mxu0 %v999
  %v1041 = vpop.f32.mrb[0].mxu0
  %v1042 = vadd.f32 %v962, %v1041
  %v1043 = vpop.f32.mrb[0].mxu0
  %v1044 = vadd.f32 %v962, %v1043
  %v1045 = vpop.f32.mrb[0].mxu0
  %v1046 = vadd.f32 %v967, %v1045
  %v1047 = vpop.f32.mrb[0].mxu0
  %v1048 = vadd.f32 %v967, %v1047
  %1049 = vmatprep.mubr.bf16.mxu0 0
  %1050 = vmatmul.mubr.bf16.gmra.mrb[0].mxu0 %v1002
  %v1051 = vpop.f32.mrb[0].mxu0
  %v1052 = vadd.f32 %v972, %v1051
  %v1053 = vpop.f32.mrb[0].mxu0
  %v1054 = vadd.f32 %v972, %v1053
  %v1055 = vpop.f32.mrb[0].mxu0
  %v1056 = vadd.f32 %v977, %v1055
  %v1057 = vpop.f32.mrb[0].mxu0
  %v1058 = vadd.f32 %v977, %v1057
  %1059 = vmatprep.mubr.bf16.mxu0 0
  %1060 = vmatmul.mubr.bf16.gmra.mrb[0].mxu0 %v1005
  %v1061 = vpop.f32.mrb[0].mxu0
  %v1062 = vadd.f32 %v982, %v1061
  %v1063 = vpop.f32.mrb[0].mxu0
  %v1064 = vadd.f32 %v982, %v1063
  %v1065 = vpop.f32.mrb[0].mxu0
  %v1066 = vpop.f32.mrb[0].mxu0
  %1067 = vdwg.mxu0
  %1068 = vmatprep.subr.bf16.mxu0 %v958
  %1069 = vmatpush1.bf16.msra.mxu0 %v957
  %1070 = vmatprep.subr.bf16.mxu0 0
  %1071 = vmatpush1.bf16.msra.mxu0 0
  %1072 = vmatprep.subr.bf16.mxu0 0
  %1073 = vmatpush1.bf16.msra.mxu0 0
  %1074 = vmatprep.subr.bf16.mxu0 0
  %1075 = vmatpush1.bf16.msra.mxu0 0
  %1076 = vmatprep.subr.bf16.mxu0 0
  %1077 = vmatpush1.bf16.msra.mxu0 0
  %1078 = vmatprep.subr.bf16.mxu0 0
  %1079 = vmatpush1.bf16.msra.mxu0 0
  %1080 = vmatprep.subr.bf16.mxu0 0
  %1081 = vmatpush1.bf16.msra.mxu0 0
  %1082 = vmatprep.subr.bf16.mxu0 0
  %1083 = vmatpush1.bf16.msra.mxu0 0
  %1084 = vmatprep.subr.bf16.mxu0 0
  %1085 = vmatpush1.bf16.msra.mxu0 0
  %1086 = vmatprep.subr.bf16.mxu0 0
  %1087 = vmatpush1.bf16.msra.mxu0 0
  %1088 = vmatprep.subr.bf16.mxu0 0
  %1089 = vmatpush1.bf16.msra.mxu0 0
  %1090 = vmatprep.subr.bf16.mxu0 0
  %1091 = vmatpush1.bf16.msra.mxu0 0
  %1092 = vmatprep.subr.bf16.mxu0 0
  %1093 = vmatpush1.bf16.msra.mxu0 0
  %1094 = vmatprep.subr.bf16.mxu0 0
  %1095 = vmatpush1.bf16.msra.mxu0 0
  %1096 = vmatprep.subr.bf16.mxu0 0
  %1097 = vmatpush1.bf16.msra.mxu0 0
  %1098 = vmatprep.subr.bf16.mxu0 0
  %1099 = vmatpush1.bf16.msra.mxu0 0
  %1100 = vmatprep.mubr.bf16.mxu0 0
  %1101 = vmatmul.mubr.bf16.gmra.mrb[0].mxu0 %v999
  %v1102 = vpop.f32.mrb[0].mxu0
  %v1103 = vadd.f32 %v962, %v1102
  %v1104 = vpop.f32.mrb[0].mxu0
  %v1105 = vadd.f32 %v962, %v1104
  %v1106 = vpop.f32.mrb[0].mxu0
  %v1107 = vadd.f32 %v967, %v1106
  %v1108 = vpop.f32.mrb[0].mxu0
  %v1109 = vadd.f32 %v967, %v1108
  %1110 = vmatprep.mubr.bf16.mxu0 0
  %1111 = vmatmul.mubr.bf16.gmra.mrb[0].mxu0 %v1002
  %v1112 = vpop.f32.mrb[0].mxu0
  %v1113 = vadd.f32 %v972, %v1112
  %v1114 = vpop.f32.mrb[0].mxu0
  %v1115 = vadd.f32 %v972, %v1114
  %v1116 = vpop.f32.mrb[0].mxu0
  %v1117 = vadd.f32 %v977, %v1116
  %v1118 = vpop.f32.mrb[0].mxu0
  %v1119 = vadd.f32 %v977, %v1118
  %1120 = vmatprep.mubr.bf16.mxu0 0
  %1121 = vmatmul.mubr.bf16.gmra.mrb[0].mxu0 %v1005
  %v1122 = vpop.f32.mrb[0].mxu0
  %v1123 = vadd.f32 %v982, %v1122
  %v1124 = vpop.f32.mrb[0].mxu0
  %v1125 = vadd.f32 %v982, %v1124
  %v1126 = vpop.f32.mrb[0].mxu0
  %v1127 = vpop.f32.mrb[0].mxu0
  %1128 = vdwg.mxu0
  %v1129 = vadd.f32 %v1042, %v1044
  %1130 = vadd.xlane.f32.xlu0 %v1129
  %v1131 = vpop.xlane.xlu0 %1130
  %v1132 = vadd.f32 %v1046, %v1048
  %1133 = vadd.xlane.f32.xlu0 %v1132
  %v1134 = vpop.xlane.xlu0 %1133
  %v1135 = vadd.f32 %v1052, %v1054
  %1136 = vadd.xlane.f32.xlu0 %v1135
  %v1137 = vpop.xlane.xlu0 %1136
  %v1138 = vadd.f32 %v1056, %v1058
  %1139 = vadd.xlane.f32.xlu0 %v1138
  %v1140 = vpop.xlane.xlu0 %1139
  %vm1141 = vcmask 1043456
  %v1142 = vsel %vm1141, %v1062, 0.0
  %v1143 = vsel %vm1141, %v1064, 0.0
  %v1144 = vadd.f32 %v1142, %v1143
  %1145 = vadd.xlane.f32.xlu0 %v1144
  %v1146 = vpop.xlane.xlu0 %1145
  %v1147 = vmul.f32 %v1042, %v1042
  %v1148 = vmul.f32 %v1044, %v1044
  %v1149 = vmul.f32 %v1046, %v1046
  %v1150 = vmul.f32 %v1048, %v1048
  %v1151 = vmul.f32 %v1052, %v1052
  %v1152 = vmul.f32 %v1054, %v1054
  %v1153 = vmul.f32 %v1056, %v1056
  %v1154 = vmul.f32 %v1058, %v1058
  %v1155 = vmul.f32 %v1062, %v1062
  %v1156 = vmul.f32 %v1064, %v1064
  %v1157 = vadd.f32 %v1147, %v1148
  %1158 = vadd.xlane.f32.xlu0 %v1157
  %v1159 = vpop.xlane.xlu0 %1158
  %v1160 = vadd.f32 %v1149, %v1150
  %1161 = vadd.xlane.f32.xlu0 %v1160
  %v1162 = vpop.xlane.xlu0 %1161
  %v1163 = vadd.f32 %v1151, %v1152
  %1164 = vadd.xlane.f32.xlu0 %v1163
  %v1165 = vpop.xlane.xlu0 %1164
  %v1166 = vadd.f32 %v1153, %v1154
  %1167 = vadd.xlane.f32.xlu0 %v1166
  %v1168 = vpop.xlane.xlu0 %1167
  %v1169 = vsel %vm1141, %v1155, 0.0
  %v1170 = vsel %vm1141, %v1156, 0.0
  %v1171 = vadd.f32 %v1169, %v1170
  %1172 = vadd.xlane.f32.xlu0 %v1171
  %v1173 = vpop.xlane.xlu0 %1172
  %v1174 = vld [vmem:[%s5] sm:$0xff]
  %v1175 = vld [vmem:[%s5 + $0x8] sm:$0xff]
  %v1176 = vld [vmem:[%s5 + $0x10] sm:$0xff]
  %v1177 = vld [vmem:[%s5 + $0x18] sm:$0xff]
  %v1178 = vld [vmem:[%s5 + $0x20] sm:$0xf]
  %vm1179 = vcmask 293888
  %v1181 = vsel %vm1179, %v1174, 0
  %v1184 = vsel %vm1179, %v1175, 0
  %v1187 = vsel %vm1179, %v1176, 0
  %v1190 = vsel %vm1179, %v1177, 0
  %v1193 = vsel %vm1179, %v1178, 0
  %v1196 = vsel %vm1141, %v1146, 0
  %1198 = vmatprep.subr.mxu0 0.0
  %1199 = vmatpush1.msra.mxu0 %v1131
  %1200 = vmatprep.subr.mxu0 0.0
  %1201 = vmatpush1.msra.mxu0 %v1134
  %1202 = vmatprep.subr.mxu0 0.0
  %1203 = vmatpush1.msra.mxu0 %v1137
  %1204 = vmatprep.subr.mxu0 0.0
  %1205 = vmatpush1.msra.mxu0 %v1140
  %1206 = vmatprep.subr.mxu0 0.0
  %1207 = vmatpush1.msra.mxu0 %v1196
  %1208 = vmatprep.subr.mxu0 0.0
  %1209 = vmatpush1.msra.mxu0 0.0
  %1210 = vmatprep.subr.mxu0 0.0
  %1211 = vmatpush1.msra.mxu0 0.0
  %1212 = vmatprep.subr.mxu0 0.0
  %1213 = vmatpush1.msra.mxu0 0.0
  %1214 = vmatprep.subr.mxu0 0.0
  %1215 = vmatpush1.msra.mxu0 0.0
  %1216 = vmatprep.subr.mxu0 0.0
  %1217 = vmatpush1.msra.mxu0 0.0
  %1218 = vmatprep.subr.mxu0 0.0
  %1219 = vmatpush1.msra.mxu0 0.0
  %1220 = vmatprep.subr.mxu0 0.0
  %1221 = vmatpush1.msra.mxu0 0.0
  %1222 = vmatprep.subr.mxu0 0.0
  %1223 = vmatpush1.msra.mxu0 0.0
  %1224 = vmatprep.subr.mxu0 0.0
  %1225 = vmatpush1.msra.mxu0 0.0
  %1226 = vmatprep.subr.mxu0 0.0
  %1227 = vmatpush1.msra.mxu0 0.0
  %1228 = vmatprep.subr.mxu0 0.0
  %1229 = vmatpush1.msra.mxu0 0.0
  %1230 = vmatprep.subr.mxu0 0.0
  %1231 = vmatpush1.msra.mxu0 0.0
  %1232 = vmatprep.subr.mxu0 0.0
  %1233 = vmatpush1.msra.mxu0 0.0
  %1234 = vmatprep.subr.mxu0 0.0
  %1235 = vmatpush1.msra.mxu0 0.0
  %1236 = vmatprep.subr.mxu0 0.0
  %1237 = vmatpush1.msra.mxu0 0.0
  %1238 = vmatprep.subr.mxu0 0.0
  %1239 = vmatpush1.msra.mxu0 0.0
  %1240 = vmatprep.subr.mxu0 0.0
  %1241 = vmatpush1.msra.mxu0 0.0
  %1242 = vmatprep.subr.mxu0 0.0
  %1243 = vmatpush1.msra.mxu0 0.0
  %1244 = vmatprep.subr.mxu0 0.0
  %1245 = vmatpush1.msra.mxu0 0.0
  %1246 = vmatprep.subr.mxu0 0.0
  %1247 = vmatpush1.msra.mxu0 0.0
  %1248 = vmatprep.subr.mxu0 0.0
  %1249 = vmatpush1.msra.mxu0 0.0
  %1250 = vmatprep.subr.mxu0 0.0
  %1251 = vmatpush1.msra.mxu0 0.0
  %1252 = vmatprep.subr.mxu0 0.0
  %1253 = vmatpush1.msra.mxu0 0.0
  %1254 = vmatprep.subr.mxu0 0.0
  %1255 = vmatpush1.msra.mxu0 0.0
  %1256 = vmatprep.subr.mxu0 0.0
  %1257 = vmatpush1.msra.mxu0 0.0
  %1258 = vmatprep.subr.mxu0 0.0
  %1259 = vmatpush1.msra.mxu0 0.0
  %1260 = vmatprep.subr.mxu0 0.0
  %1261 = vmatpush1.msra.mxu0 0.0
  %1262 = vmatprep.mubr.f32.mxu0 0.0
  %1263 = vmatmul.mubr.f32.gmra.mrb[0].mxu0 %v1181
  %v1264 = vpop.f32.mrb[0].mxu0
  %v1265 = vadd.f32 0.0, %v1264
  %v1266 = vpop.f32.mrb[0].mxu0
  %1267 = vmatprep.mubr.f32.mxu0 0.0
  %1268 = vmatmul.mubr.f32.gmra.mrb[0].mxu0 %v1184
  %v1269 = vpop.f32.mrb[0].mxu0
  %v1270 = vadd.f32 0.0, %v1269
  %v1271 = vpop.f32.mrb[0].mxu0
  %1272 = vmatprep.mubr.f32.mxu0 0.0
  %1273 = vmatmul.mubr.f32.gmra.mrb[0].mxu0 %v1187
  %v1274 = vpop.f32.mrb[0].mxu0
  %v1275 = vadd.f32 0.0, %v1274
  %v1276 = vpop.f32.mrb[0].mxu0
  %1277 = vmatprep.mubr.f32.mxu0 0.0
  %1278 = vmatmul.mubr.f32.gmra.mrb[0].mxu0 %v1190
  %v1279 = vpop.f32.mrb[0].mxu0
  %v1280 = vadd.f32 0.0, %v1279
  %v1281 = vpop.f32.mrb[0].mxu0
  %1282 = vmatprep.mubr.f32.mxu0 0.0
  %1283 = vmatmul.mubr.f32.gmra.mrb[0].mxu0 %v1193
  %v1284 = vpop.f32.mrb[0].mxu0
  %v1285 = vadd.f32 0.0, %v1284
  %v1286 = vpop.f32.mrb[0].mxu0
  %1287 = vdwg.mxu0
  %v1289 = vsel %vm1141, %v1173, 0
  %1291 = vmatprep.subr.mxu0 0.0
  %1292 = vmatpush1.msra.mxu0 %v1159
  %1293 = vmatprep.subr.mxu0 0.0
  %1294 = vmatpush1.msra.mxu0 %v1162
  %1295 = vmatprep.subr.mxu0 0.0
  %1296 = vmatpush1.msra.mxu0 %v1165
  %1297 = vmatprep.subr.mxu0 0.0
  %1298 = vmatpush1.msra.mxu0 %v1168
  %1299 = vmatprep.subr.mxu0 0.0
  %1300 = vmatpush1.msra.mxu0 %v1289
  %1301 = vmatprep.subr.mxu0 0.0
  %1302 = vmatpush1.msra.mxu0 0.0
  %1303 = vmatprep.subr.mxu0 0.0
  %1304 = vmatpush1.msra.mxu0 0.0
  %1305 = vmatprep.subr.mxu0 0.0
  %1306 = vmatpush1.msra.mxu0 0.0
  %1307 = vmatprep.subr.mxu0 0.0
  %1308 = vmatpush1.msra.mxu0 0.0
  %1309 = vmatprep.subr.mxu0 0.0
  %1310 = vmatpush1.msra.mxu0 0.0
  %1311 = vmatprep.subr.mxu0 0.0
  %1312 = vmatpush1.msra.mxu0 0.0
  %1313 = vmatprep.subr.mxu0 0.0
  %1314 = vmatpush1.msra.mxu0 0.0
  %1315 = vmatprep.subr.mxu0 0.0
  %1316 = vmatpush1.msra.mxu0 0.0
  %1317 = vmatprep.subr.mxu0 0.0
  %1318 = vmatpush1.msra.mxu0 0.0
  %1319 = vmatprep.subr.mxu0 0.0
  %1320 = vmatpush1.msra.mxu0 0.0
  %1321 = vmatprep.subr.mxu0 0.0
  %1322 = vmatpush1.msra.mxu0 0.0
  %1323 = vmatprep.subr.mxu0 0.0
  %1324 = vmatpush1.msra.mxu0 0.0
  %1325 = vmatprep.subr.mxu0 0.0
  %1326 = vmatpush1.msra.mxu0 0.0
  %1327 = vmatprep.subr.mxu0 0.0
  %1328 = vmatpush1.msra.mxu0 0.0
  %1329 = vmatprep.subr.mxu0 0.0
  %1330 = vmatpush1.msra.mxu0 0.0
  %1331 = vmatprep.subr.mxu0 0.0
  %1332 = vmatpush1.msra.mxu0 0.0
  %1333 = vmatprep.subr.mxu0 0.0
  %1334 = vmatpush1.msra.mxu0 0.0
  %1335 = vmatprep.subr.mxu0 0.0
  %1336 = vmatpush1.msra.mxu0 0.0
  %1337 = vmatprep.subr.mxu0 0.0
  %1338 = vmatpush1.msra.mxu0 0.0
  %1339 = vmatprep.subr.mxu0 0.0
  %1340 = vmatpush1.msra.mxu0 0.0
  %1341 = vmatprep.subr.mxu0 0.0
  %1342 = vmatpush1.msra.mxu0 0.0
  %1343 = vmatprep.subr.mxu0 0.0
  %1344 = vmatpush1.msra.mxu0 0.0
  %1345 = vmatprep.subr.mxu0 0.0
  %1346 = vmatpush1.msra.mxu0 0.0
  %1347 = vmatprep.subr.mxu0 0.0
  %1348 = vmatpush1.msra.mxu0 0.0
  %1349 = vmatprep.subr.mxu0 0.0
  %1350 = vmatpush1.msra.mxu0 0.0
  %1351 = vmatprep.subr.mxu0 0.0
  %1352 = vmatpush1.msra.mxu0 0.0
  %1353 = vmatprep.subr.mxu0 0.0
  %1354 = vmatpush1.msra.mxu0 0.0
  %1355 = vmatprep.mubr.f32.mxu0 0.0
  %1356 = vmatmul.mubr.f32.gmra.mrb[0].mxu0 %v1181
  %v1357 = vpop.f32.mrb[0].mxu0
  %v1358 = vadd.f32 0.0, %v1357
  %v1359 = vpop.f32.mrb[0].mxu0
  %1360 = vmatprep.mubr.f32.mxu0 0.0
  %1361 = vmatmul.mubr.f32.gmra.mrb[0].mxu0 %v1184
  %v1362 = vpop.f32.mrb[0].mxu0
  %v1363 = vadd.f32 0.0, %v1362
  %v1364 = vpop.f32.mrb[0].mxu0
  %1365 = vmatprep.mubr.f32.mxu0 0.0
  %1366 = vmatmul.mubr.f32.gmra.mrb[0].mxu0 %v1187
  %v1367 = vpop.f32.mrb[0].mxu0
  %v1368 = vadd.f32 0.0, %v1367
  %v1369 = vpop.f32.mrb[0].mxu0
  %1370 = vmatprep.mubr.f32.mxu0 0.0
  %1371 = vmatmul.mubr.f32.gmra.mrb[0].mxu0 %v1190
  %v1372 = vpop.f32.mrb[0].mxu0
  %v1373 = vadd.f32 0.0, %v1372
  %v1374 = vpop.f32.mrb[0].mxu0
  %1375 = vmatprep.mubr.f32.mxu0 0.0
  %1376 = vmatmul.mubr.f32.gmra.mrb[0].mxu0 %v1193
  %v1377 = vpop.f32.mrb[0].mxu0
  %v1378 = vadd.f32 0.0, %v1377
  %v1379 = vpop.f32.mrb[0].mxu0
  %1380 = vdwg.mxu0
  %v1381 = vmul.f32 %v1265, %v1265
  %v1382 = vmul.f32 %v1270, %v1270
  %v1383 = vmul.f32 %v1275, %v1275
  %v1384 = vmul.f32 %v1280, %v1280
  %v1385 = vmul.f32 %v1285, %v1285
  %v1386 = vsub.f32 %v1358, %v1381
  %v1387 = vsub.f32 %v1363, %v1382
  %v1388 = vsub.f32 %v1368, %v1383
  %v1389 = vsub.f32 %v1373, %v1384
  %v1390 = vsub.f32 %v1378, %v1385
  %v1391 = vmax.f32 %v1386, 0.0
  %v1392 = vmax.f32 %v1387, 0.0
  %v1393 = vmax.f32 %v1388, 0.0
  %v1394 = vmax.f32 %v1389, 0.0
  %v1395 = vmax.f32 %v1390, 0.0
  %v1396 = vadd.f32 %v1391, 1e-05
  %v1397 = vadd.f32 %v1392, 1e-05
  %v1398 = vadd.f32 %v1393, 1e-05
  %v1399 = vadd.f32 %v1394, 1e-05
  %v1400 = vadd.f32 %v1395, 1e-05
  %v1401 = vrsqrt.pop %v1396
  %v1402 = vrsqrt.pop %v1397
  %v1403 = vrsqrt.pop %v1398
  %v1404 = vrsqrt.pop %v1399
  %v1405 = vrsqrt.pop %v1400
  %v1406 = vmul.f32 %v1401, %v41
  %v1407 = vmul.f32 %v1402, %v42
  %v1408 = vmul.f32 %v1403, %v43
  %v1409 = vmul.f32 %v1404, %v44
  %v1410 = vmul.f32 %v1405, %v45
  %1412 = vset.pattern.permute.xlu0 0
  %1413 = vperm.xlu0 %1412, %v1406
  %v1414 = vpop.permute.xlu0 %1413
  %1417 = vset.pattern.permute.xlu0 0
  %1418 = vperm.xlu0 %1417, %v1407
  %v1419 = vpop.permute.xlu0 %1418
  %1422 = vset.pattern.permute.xlu0 0
  %1423 = vperm.xlu0 %1422, %v1408
  %v1424 = vpop.permute.xlu0 %1423
  %1427 = vset.pattern.permute.xlu0 0
  %1428 = vperm.xlu0 %1427, %v1409
  %v1429 = vpop.permute.xlu0 %1428
  %1432 = vset.pattern.permute.xlu0 0
  %1433 = vperm.xlu0 %1432, %v1410
  %v1434 = vpop.permute.xlu0 %1433
  %v1436 = vmul.f32 %v1042, %v1414
  %v1437 = vmul.f32 %v1044, %v1414
  %v1438 = vmul.f32 %v1046, %v1419
  %v1439 = vmul.f32 %v1048, %v1419
  %v1440 = vmul.f32 %v1052, %v1424
  %v1441 = vmul.f32 %v1054, %v1424
  %v1442 = vmul.f32 %v1056, %v1429
  %v1443 = vmul.f32 %v1058, %v1429
  %v1444 = vmul.f32 %v1062, %v1434
  %v1445 = vmul.f32 %v1064, %v1434
  %v1446 = vmul.f32 %v1265, %v1406
  %v1447 = vmul.f32 %v1270, %v1407
  %v1448 = vmul.f32 %v1275, %v1408
  %v1449 = vmul.f32 %v1280, %v1409
  %v1450 = vmul.f32 %v1285, %v1410
  %v1451 = vsub.f32 %v46, %v1446
  %v1452 = vsub.f32 %v47, %v1447
  %v1453 = vsub.f32 %v48, %v1448
  %v1454 = vsub.f32 %v49, %v1449
  %v1455 = vsub.f32 %v50, %v1450
  %1457 = vset.pattern.permute.xlu0 0
  %1458 = vperm.xlu0 %1457, %v1451
  %v1459 = vpop.permute.xlu0 %1458
  %1462 = vset.pattern.permute.xlu0 0
  %1463 = vperm.xlu0 %1462, %v1452
  %v1464 = vpop.permute.xlu0 %1463
  %1467 = vset.pattern.permute.xlu0 0
  %1468 = vperm.xlu0 %1467, %v1453
  %v1469 = vpop.permute.xlu0 %1468
  %1472 = vset.pattern.permute.xlu0 0
  %1473 = vperm.xlu0 %1472, %v1454
  %v1474 = vpop.permute.xlu0 %1473
  %1477 = vset.pattern.permute.xlu0 0
  %1478 = vperm.xlu0 %1477, %v1455
  %v1479 = vpop.permute.xlu0 %1478
  %v1481 = vadd.f32 %v1436, %v1459
  %v1482 = vadd.f32 %v1437, %v1459
  %v1483 = vadd.f32 %v1438, %v1464
  %v1484 = vadd.f32 %v1439, %v1464
  %v1485 = vadd.f32 %v1440, %v1469
  %v1486 = vadd.f32 %v1441, %v1469
  %v1487 = vadd.f32 %v1442, %v1474
  %v1488 = vadd.f32 %v1443, %v1474
  %v1489 = vadd.f32 %v1444, %v1479
  %v1490 = vadd.f32 %v1445, %v1479
  %v1491 = vadd.f32 %v1103, %v1105
  %1492 = vadd.xlane.f32.xlu0 %v1491
  %v1493 = vpop.xlane.xlu0 %1492
  %v1494 = vadd.f32 %v1107, %v1109
  %1495 = vadd.xlane.f32.xlu0 %v1494
  %v1496 = vpop.xlane.xlu0 %1495
  %v1497 = vadd.f32 %v1113, %v1115
  %1498 = vadd.xlane.f32.xlu0 %v1497
  %v1499 = vpop.xlane.xlu0 %1498
  %v1500 = vadd.f32 %v1117, %v1119
  %1501 = vadd.xlane.f32.xlu0 %v1500
  %v1502 = vpop.xlane.xlu0 %1501
  %v1503 = vsel %vm1141, %v1123, 0.0
  %v1504 = vsel %vm1141, %v1125, 0.0
  %v1505 = vadd.f32 %v1503, %v1504
  %1506 = vadd.xlane.f32.xlu0 %v1505
  %v1507 = vpop.xlane.xlu0 %1506
  %v1508 = vmul.f32 %v1103, %v1103
  %v1509 = vmul.f32 %v1105, %v1105
  %v1510 = vmul.f32 %v1107, %v1107
  %v1511 = vmul.f32 %v1109, %v1109
  %v1512 = vmul.f32 %v1113, %v1113
  %v1513 = vmul.f32 %v1115, %v1115
  %v1514 = vmul.f32 %v1117, %v1117
  %v1515 = vmul.f32 %v1119, %v1119
  %v1516 = vmul.f32 %v1123, %v1123
  %v1517 = vmul.f32 %v1125, %v1125
  %v1518 = vadd.f32 %v1508, %v1509
  %1519 = vadd.xlane.f32.xlu0 %v1518
  %v1520 = vpop.xlane.xlu0 %1519
  %v1521 = vadd.f32 %v1510, %v1511
  %1522 = vadd.xlane.f32.xlu0 %v1521
  %v1523 = vpop.xlane.xlu0 %1522
  %v1524 = vadd.f32 %v1512, %v1513
  %1525 = vadd.xlane.f32.xlu0 %v1524
  %v1526 = vpop.xlane.xlu0 %1525
  %v1527 = vadd.f32 %v1514, %v1515
  %1528 = vadd.xlane.f32.xlu0 %v1527
  %v1529 = vpop.xlane.xlu0 %1528
  %v1530 = vsel %vm1141, %v1516, 0.0
  %v1531 = vsel %vm1141, %v1517, 0.0
  %v1532 = vadd.f32 %v1530, %v1531
  %1533 = vadd.xlane.f32.xlu0 %v1532
  %v1534 = vpop.xlane.xlu0 %1533
  %v1536 = vsel %vm1141, %v1507, 0
  %1538 = vmatprep.subr.mxu0 0.0
  %1539 = vmatpush1.msra.mxu0 %v1493
  %1540 = vmatprep.subr.mxu0 0.0
  %1541 = vmatpush1.msra.mxu0 %v1496
  %1542 = vmatprep.subr.mxu0 0.0
  %1543 = vmatpush1.msra.mxu0 %v1499
  %1544 = vmatprep.subr.mxu0 0.0
  %1545 = vmatpush1.msra.mxu0 %v1502
  %1546 = vmatprep.subr.mxu0 0.0
  %1547 = vmatpush1.msra.mxu0 %v1536
  %1548 = vmatprep.subr.mxu0 0.0
  %1549 = vmatpush1.msra.mxu0 0.0
  %1550 = vmatprep.subr.mxu0 0.0
  %1551 = vmatpush1.msra.mxu0 0.0
  %1552 = vmatprep.subr.mxu0 0.0
  %1553 = vmatpush1.msra.mxu0 0.0
  %1554 = vmatprep.subr.mxu0 0.0
  %1555 = vmatpush1.msra.mxu0 0.0
  %1556 = vmatprep.subr.mxu0 0.0
  %1557 = vmatpush1.msra.mxu0 0.0
  %1558 = vmatprep.subr.mxu0 0.0
  %1559 = vmatpush1.msra.mxu0 0.0
  %1560 = vmatprep.subr.mxu0 0.0
  %1561 = vmatpush1.msra.mxu0 0.0
  %1562 = vmatprep.subr.mxu0 0.0
  %1563 = vmatpush1.msra.mxu0 0.0
  %1564 = vmatprep.subr.mxu0 0.0
  %1565 = vmatpush1.msra.mxu0 0.0
  %1566 = vmatprep.subr.mxu0 0.0
  %1567 = vmatpush1.msra.mxu0 0.0
  %1568 = vmatprep.subr.mxu0 0.0
  %1569 = vmatpush1.msra.mxu0 0.0
  %1570 = vmatprep.subr.mxu0 0.0
  %1571 = vmatpush1.msra.mxu0 0.0
  %1572 = vmatprep.subr.mxu0 0.0
  %1573 = vmatpush1.msra.mxu0 0.0
  %1574 = vmatprep.subr.mxu0 0.0
  %1575 = vmatpush1.msra.mxu0 0.0
  %1576 = vmatprep.subr.mxu0 0.0
  %1577 = vmatpush1.msra.mxu0 0.0
  %1578 = vmatprep.subr.mxu0 0.0
  %1579 = vmatpush1.msra.mxu0 0.0
  %1580 = vmatprep.subr.mxu0 0.0
  %1581 = vmatpush1.msra.mxu0 0.0
  %1582 = vmatprep.subr.mxu0 0.0
  %1583 = vmatpush1.msra.mxu0 0.0
  %1584 = vmatprep.subr.mxu0 0.0
  %1585 = vmatpush1.msra.mxu0 0.0
  %1586 = vmatprep.subr.mxu0 0.0
  %1587 = vmatpush1.msra.mxu0 0.0
  %1588 = vmatprep.subr.mxu0 0.0
  %1589 = vmatpush1.msra.mxu0 0.0
  %1590 = vmatprep.subr.mxu0 0.0
  %1591 = vmatpush1.msra.mxu0 0.0
  %1592 = vmatprep.subr.mxu0 0.0
  %1593 = vmatpush1.msra.mxu0 0.0
  %1594 = vmatprep.subr.mxu0 0.0
  %1595 = vmatpush1.msra.mxu0 0.0
  %1596 = vmatprep.subr.mxu0 0.0
  %1597 = vmatpush1.msra.mxu0 0.0
  %1598 = vmatprep.subr.mxu0 0.0
  %1599 = vmatpush1.msra.mxu0 0.0
  %1600 = vmatprep.subr.mxu0 0.0
  %1601 = vmatpush1.msra.mxu0 0.0
  %1602 = vmatprep.mubr.f32.mxu0 0.0
  %1603 = vmatmul.mubr.f32.gmra.mrb[0].mxu0 %v1181
  %v1604 = vpop.f32.mrb[0].mxu0
  %v1605 = vadd.f32 0.0, %v1604
  %v1606 = vpop.f32.mrb[0].mxu0
  %1607 = vmatprep.mubr.f32.mxu0 0.0
  %1608 = vmatmul.mubr.f32.gmra.mrb[0].mxu0 %v1184
  %v1609 = vpop.f32.mrb[0].mxu0
  %v1610 = vadd.f32 0.0, %v1609
  %v1611 = vpop.f32.mrb[0].mxu0
  %1612 = vmatprep.mubr.f32.mxu0 0.0
  %1613 = vmatmul.mubr.f32.gmra.mrb[0].mxu0 %v1187
  %v1614 = vpop.f32.mrb[0].mxu0
  %v1615 = vadd.f32 0.0, %v1614
  %v1616 = vpop.f32.mrb[0].mxu0
  %1617 = vmatprep.mubr.f32.mxu0 0.0
  %1618 = vmatmul.mubr.f32.gmra.mrb[0].mxu0 %v1190
  %v1619 = vpop.f32.mrb[0].mxu0
  %v1620 = vadd.f32 0.0, %v1619
  %v1621 = vpop.f32.mrb[0].mxu0
  %1622 = vmatprep.mubr.f32.mxu0 0.0
  %1623 = vmatmul.mubr.f32.gmra.mrb[0].mxu0 %v1193
  %v1624 = vpop.f32.mrb[0].mxu0
  %v1625 = vadd.f32 0.0, %v1624
  %v1626 = vpop.f32.mrb[0].mxu0
  %1627 = vdwg.mxu0
  %v1629 = vsel %vm1141, %v1534, 0
  %1631 = vmatprep.subr.mxu0 0.0
  %1632 = vmatpush1.msra.mxu0 %v1520
  %1633 = vmatprep.subr.mxu0 0.0
  %1634 = vmatpush1.msra.mxu0 %v1523
  %1635 = vmatprep.subr.mxu0 0.0
  %1636 = vmatpush1.msra.mxu0 %v1526
  %1637 = vmatprep.subr.mxu0 0.0
  %1638 = vmatpush1.msra.mxu0 %v1529
  %1639 = vmatprep.subr.mxu0 0.0
  %1640 = vmatpush1.msra.mxu0 %v1629
  %1641 = vmatprep.subr.mxu0 0.0
  %1642 = vmatpush1.msra.mxu0 0.0
  %1643 = vmatprep.subr.mxu0 0.0
  %1644 = vmatpush1.msra.mxu0 0.0
  %1645 = vmatprep.subr.mxu0 0.0
  %1646 = vmatpush1.msra.mxu0 0.0
  %1647 = vmatprep.subr.mxu0 0.0
  %1648 = vmatpush1.msra.mxu0 0.0
  %1649 = vmatprep.subr.mxu0 0.0
  %1650 = vmatpush1.msra.mxu0 0.0
  %1651 = vmatprep.subr.mxu0 0.0
  %1652 = vmatpush1.msra.mxu0 0.0
  %1653 = vmatprep.subr.mxu0 0.0
  %1654 = vmatpush1.msra.mxu0 0.0
  %1655 = vmatprep.subr.mxu0 0.0
  %1656 = vmatpush1.msra.mxu0 0.0
  %1657 = vmatprep.subr.mxu0 0.0
  %1658 = vmatpush1.msra.mxu0 0.0
  %1659 = vmatprep.subr.mxu0 0.0
  %1660 = vmatpush1.msra.mxu0 0.0
  %1661 = vmatprep.subr.mxu0 0.0
  %1662 = vmatpush1.msra.mxu0 0.0
  %1663 = vmatprep.subr.mxu0 0.0
  %1664 = vmatpush1.msra.mxu0 0.0
  %1665 = vmatprep.subr.mxu0 0.0
  %1666 = vmatpush1.msra.mxu0 0.0
  %1667 = vmatprep.subr.mxu0 0.0
  %1668 = vmatpush1.msra.mxu0 0.0
  %1669 = vmatprep.subr.mxu0 0.0
  %1670 = vmatpush1.msra.mxu0 0.0
  %1671 = vmatprep.subr.mxu0 0.0
  %1672 = vmatpush1.msra.mxu0 0.0
  %1673 = vmatprep.subr.mxu0 0.0
  %1674 = vmatpush1.msra.mxu0 0.0
  %1675 = vmatprep.subr.mxu0 0.0
  %1676 = vmatpush1.msra.mxu0 0.0
  %1677 = vmatprep.subr.mxu0 0.0
  %1678 = vmatpush1.msra.mxu0 0.0
  %1679 = vmatprep.subr.mxu0 0.0
  %1680 = vmatpush1.msra.mxu0 0.0
  %1681 = vmatprep.subr.mxu0 0.0
  %1682 = vmatpush1.msra.mxu0 0.0
  %1683 = vmatprep.subr.mxu0 0.0
  %1684 = vmatpush1.msra.mxu0 0.0
  %1685 = vmatprep.subr.mxu0 0.0
  %1686 = vmatpush1.msra.mxu0 0.0
  %1687 = vmatprep.subr.mxu0 0.0
  %1688 = vmatpush1.msra.mxu0 0.0
  %1689 = vmatprep.subr.mxu0 0.0
  %1690 = vmatpush1.msra.mxu0 0.0
  %1691 = vmatprep.subr.mxu0 0.0
  %1692 = vmatpush1.msra.mxu0 0.0
  %1693 = vmatprep.subr.mxu0 0.0
  %1694 = vmatpush1.msra.mxu0 0.0
  %1695 = vmatprep.mubr.f32.mxu0 0.0
  %1696 = vmatmul.mubr.f32.gmra.mrb[0].mxu0 %v1181
  %v1697 = vpop.f32.mrb[0].mxu0
  %v1698 = vadd.f32 0.0, %v1697
  %v1699 = vpop.f32.mrb[0].mxu0
  %1700 = vmatprep.mubr.f32.mxu0 0.0
  %1701 = vmatmul.mubr.f32.gmra.mrb[0].mxu0 %v1184
  %v1702 = vpop.f32.mrb[0].mxu0
  %v1703 = vadd.f32 0.0, %v1702
  %v1704 = vpop.f32.mrb[0].mxu0
  %1705 = vmatprep.mubr.f32.mxu0 0.0
  %1706 = vmatmul.mubr.f32.gmra.mrb[0].mxu0 %v1187
  %v1707 = vpop.f32.mrb[0].mxu0
  %v1708 = vadd.f32 0.0, %v1707
  %v1709 = vpop.f32.mrb[0].mxu0
  %1710 = vmatprep.mubr.f32.mxu0 0.0
  %1711 = vmatmul.mubr.f32.gmra.mrb[0].mxu0 %v1190
  %v1712 = vpop.f32.mrb[0].mxu0
  %v1713 = vadd.f32 0.0, %v1712
  %v1714 = vpop.f32.mrb[0].mxu0
  %1715 = vmatprep.mubr.f32.mxu0 0.0
  %1716 = vmatmul.mubr.f32.gmra.mrb[0].mxu0 %v1193
  %v1717 = vpop.f32.mrb[0].mxu0
  %v1718 = vadd.f32 0.0, %v1717
  %v1719 = vpop.f32.mrb[0].mxu0
  %1720 = vdwg.mxu0
  %v1721 = vmul.f32 %v1605, %v1605
  %v1722 = vmul.f32 %v1610, %v1610
  %v1723 = vmul.f32 %v1615, %v1615
  %v1724 = vmul.f32 %v1620, %v1620
  %v1725 = vmul.f32 %v1625, %v1625
  %v1726 = vsub.f32 %v1698, %v1721
  %v1727 = vsub.f32 %v1703, %v1722
  %v1728 = vsub.f32 %v1708, %v1723
  %v1729 = vsub.f32 %v1713, %v1724
  %v1730 = vsub.f32 %v1718, %v1725
  %v1731 = vmax.f32 %v1726, 0.0
  %v1732 = vmax.f32 %v1727, 0.0
  %v1733 = vmax.f32 %v1728, 0.0
  %v1734 = vmax.f32 %v1729, 0.0
  %v1735 = vmax.f32 %v1730, 0.0
  %v1736 = vadd.f32 %v1731, 1e-05
  %v1737 = vadd.f32 %v1732, 1e-05
  %v1738 = vadd.f32 %v1733, 1e-05
  %v1739 = vadd.f32 %v1734, 1e-05
  %v1740 = vadd.f32 %v1735, 1e-05
  %v1741 = vrsqrt.pop %v1736
  %v1742 = vrsqrt.pop %v1737
  %v1743 = vrsqrt.pop %v1738
  %v1744 = vrsqrt.pop %v1739
  %v1745 = vrsqrt.pop %v1740
  %v1746 = vmul.f32 %v1741, %v41
  %v1747 = vmul.f32 %v1742, %v42
  %v1748 = vmul.f32 %v1743, %v43
  %v1749 = vmul.f32 %v1744, %v44
  %v1750 = vmul.f32 %v1745, %v45
  %1752 = vset.pattern.permute.xlu0 0
  %1753 = vperm.xlu0 %1752, %v1746
  %v1754 = vpop.permute.xlu0 %1753
  %1757 = vset.pattern.permute.xlu0 0
  %1758 = vperm.xlu0 %1757, %v1747
  %v1759 = vpop.permute.xlu0 %1758
  %1762 = vset.pattern.permute.xlu0 0
  %1763 = vperm.xlu0 %1762, %v1748
  %v1764 = vpop.permute.xlu0 %1763
  %1767 = vset.pattern.permute.xlu0 0
  %1768 = vperm.xlu0 %1767, %v1749
  %v1769 = vpop.permute.xlu0 %1768
  %1772 = vset.pattern.permute.xlu0 0
  %1773 = vperm.xlu0 %1772, %v1750
  %v1774 = vpop.permute.xlu0 %1773
  %v1776 = vmul.f32 %v1103, %v1754
  %v1777 = vmul.f32 %v1105, %v1754
  %v1778 = vmul.f32 %v1107, %v1759
  %v1779 = vmul.f32 %v1109, %v1759
  %v1780 = vmul.f32 %v1113, %v1764
  %v1781 = vmul.f32 %v1115, %v1764
  %v1782 = vmul.f32 %v1117, %v1769
  %v1783 = vmul.f32 %v1119, %v1769
  %v1784 = vmul.f32 %v1123, %v1774
  %v1785 = vmul.f32 %v1125, %v1774
  %v1786 = vmul.f32 %v1605, %v1746
  %v1787 = vmul.f32 %v1610, %v1747
  %v1788 = vmul.f32 %v1615, %v1748
  %v1789 = vmul.f32 %v1620, %v1749
  %v1790 = vmul.f32 %v1625, %v1750
  %v1791 = vsub.f32 %v46, %v1786
  %v1792 = vsub.f32 %v47, %v1787
  %v1793 = vsub.f32 %v48, %v1788
  %v1794 = vsub.f32 %v49, %v1789
  %v1795 = vsub.f32 %v50, %v1790
  %1797 = vset.pattern.permute.xlu0 0
  %1798 = vperm.xlu0 %1797, %v1791
  %v1799 = vpop.permute.xlu0 %1798
  %1802 = vset.pattern.permute.xlu0 0
  %1803 = vperm.xlu0 %1802, %v1792
  %v1804 = vpop.permute.xlu0 %1803
  %1807 = vset.pattern.permute.xlu0 0
  %1808 = vperm.xlu0 %1807, %v1793
  %v1809 = vpop.permute.xlu0 %1808
  %1812 = vset.pattern.permute.xlu0 0
  %1813 = vperm.xlu0 %1812, %v1794
  %v1814 = vpop.permute.xlu0 %1813
  %1817 = vset.pattern.permute.xlu0 0
  %1818 = vperm.xlu0 %1817, %v1795
  %v1819 = vpop.permute.xlu0 %1818
  %v1821 = vadd.f32 %v1776, %v1799
  %v1822 = vadd.f32 %v1777, %v1799
  %v1823 = vadd.f32 %v1778, %v1804
  %v1824 = vadd.f32 %v1779, %v1804
  %v1825 = vadd.f32 %v1780, %v1809
  %v1826 = vadd.f32 %v1781, %v1809
  %v1827 = vadd.f32 %v1782, %v1814
  %v1828 = vadd.f32 %v1783, %v1814
  %v1829 = vadd.f32 %v1784, %v1819
  %v1830 = vadd.f32 %v1785, %v1819
  %v1831 = vld [vmem:[%s0] sm:$0xff]
  %v1832 = vld [vmem:[%s0 + $0x8] sm:$0xff]
  %v1833 = vld [vmem:[%s0 + $0x10] sm:$0xff]
  %v1834 = vld [vmem:[%s0 + $0x18] sm:$0xff]
  %v1835 = vld [vmem:[%s0 + $0x20] sm:$0xff]
  %v1836 = vld [vmem:[%s0 + $0x28] sm:$0xff]
  %v1837 = vld [vmem:[%s0 + $0x30] sm:$0xff]
  %v1838 = vld [vmem:[%s0 + $0x38] sm:$0xff]
  %v1839 = vld [vmem:[%s2] sm:$0xf]
  %v1840 = vld [vmem:[%s2 + $0x4] sm:$0xf]
  %v1841 = vld [vmem:[%s2 + $0x8] sm:$0xf]
  %v1842 = vld [vmem:[%s2 + $0xc] sm:$0xf]
  %v1847 = vunpack.c.l.b16 %v1839
  %v1848 = vunpack.c.l.b16 %v1840
  %v1849 = vunpack.c.l.b16 %v1841
  %v1850 = vunpack.c.l.b16 %v1842
  %v1851 = vpack.c.b16 %v1848, %v1847
  %v1852 = vpack.c.b16 %v1850, %v1849
  %v1861 = vunpack.c.l.b16 %v1831
  %v1862 = vunpack.c.h.b16 %v1831
  %v1863 = vunpack.c.l.b16 %v1832
  %v1864 = vunpack.c.h.b16 %v1832
  %v1865 = vunpack.c.l.b16 %v1833
  %v1866 = vunpack.c.h.b16 %v1833
  %v1867 = vunpack.c.l.b16 %v1834
  %v1868 = vunpack.c.h.b16 %v1834
  %v1869 = vunpack.c.l.b16 %v1835
  %v1870 = vunpack.c.h.b16 %v1835
  %v1871 = vunpack.c.l.b16 %v1836
  %v1872 = vunpack.c.h.b16 %v1836
  %v1873 = vunpack.c.l.b16 %v1837
  %v1874 = vunpack.c.h.b16 %v1837
  %v1875 = vunpack.c.l.b16 %v1838
  %v1876 = vunpack.c.h.b16 %v1838
  %v1877 = vpack.c.b16 %v1865, %v1861
  %v1878 = vpack.c.b16 %v1866, %v1862
  %v1879 = vpack.c.b16 %v1867, %v1863
  %v1880 = vpack.c.b16 %v1868, %v1864
  %v1881 = vpack.c.b16 %v1873, %v1869
  %v1882 = vpack.c.b16 %v1874, %v1870
  %v1883 = vpack.c.b16 %v1875, %v1871
  %v1884 = vpack.c.b16 %v1876, %v1872
  %v1894 = vsel %vm552, %v1851, 0
  %v1897 = vsel %vm552, %v1852, 0
  %1899 = vmatprep.subr.bf16.mxu0 %v1878
  %1900 = vmatpush1.bf16.msra.mxu0 %v1877
  %1901 = vmatprep.subr.bf16.mxu0 %v1882
  %1902 = vmatpush1.bf16.msra.mxu0 %v1881
  %1903 = vmatprep.subr.bf16.mxu0 0
  %1904 = vmatpush1.bf16.msra.mxu0 0
  %1905 = vmatprep.subr.bf16.mxu0 0
  %1906 = vmatpush1.bf16.msra.mxu0 0
  %1907 = vmatprep.subr.bf16.mxu0 0
  %1908 = vmatpush1.bf16.msra.mxu0 0
  %1909 = vmatprep.subr.bf16.mxu0 0
  %1910 = vmatpush1.bf16.msra.mxu0 0
  %1911 = vmatprep.subr.bf16.mxu0 0
  %1912 = vmatpush1.bf16.msra.mxu0 0
  %1913 = vmatprep.subr.bf16.mxu0 0
  %1914 = vmatpush1.bf16.msra.mxu0 0
  %1915 = vmatprep.subr.bf16.mxu0 0
  %1916 = vmatpush1.bf16.msra.mxu0 0
  %1917 = vmatprep.subr.bf16.mxu0 0
  %1918 = vmatpush1.bf16.msra.mxu0 0
  %1919 = vmatprep.subr.bf16.mxu0 0
  %1920 = vmatpush1.bf16.msra.mxu0 0
  %1921 = vmatprep.subr.bf16.mxu0 0
  %1922 = vmatpush1.bf16.msra.mxu0 0
  %1923 = vmatprep.subr.bf16.mxu0 0
  %1924 = vmatpush1.bf16.msra.mxu0 0
  %1925 = vmatprep.subr.bf16.mxu0 0
  %1926 = vmatpush1.bf16.msra.mxu0 0
  %1927 = vmatprep.subr.bf16.mxu0 0
  %1928 = vmatpush1.bf16.msra.mxu0 0
  %1929 = vmatprep.subr.bf16.mxu0 0
  %1930 = vmatpush1.bf16.msra.mxu0 0
  %1931 = vmatprep.mubr.bf16.mxu0 0
  %1932 = vmatmul.mubr.bf16.gmra.mrb[0].mxu0 %v1894
  %v1933 = vpop.f32.mrb[0].mxu0
  %v1934 = vadd.f32 0.0, %v1933
  %v1935 = vpop.f32.mrb[0].mxu0
  %v1936 = vadd.f32 0.0, %v1935
  %v1937 = vpop.f32.mrb[0].mxu0
  %v1938 = vadd.f32 0.0, %v1937
  %v1939 = vpop.f32.mrb[0].mxu0
  %v1940 = vadd.f32 0.0, %v1939
  %1941 = vmatprep.mubr.bf16.mxu0 0
  %1942 = vmatmul.mubr.bf16.gmra.mrb[0].mxu0 %v1897
  %v1943 = vpop.f32.mrb[0].mxu0
  %v1944 = vadd.f32 0.0, %v1943
  %v1945 = vpop.f32.mrb[0].mxu0
  %v1946 = vadd.f32 0.0, %v1945
  %v1947 = vpop.f32.mrb[0].mxu0
  %v1948 = vadd.f32 0.0, %v1947
  %v1949 = vpop.f32.mrb[0].mxu0
  %v1950 = vadd.f32 0.0, %v1949
  %1951 = vdwg.mxu0
  %1952 = vmatprep.subr.bf16.mxu0 %v1880
  %1953 = vmatpush1.bf16.msra.mxu0 %v1879
  %1954 = vmatprep.subr.bf16.mxu0 %v1884
  %1955 = vmatpush1.bf16.msra.mxu0 %v1883
  %1956 = vmatprep.subr.bf16.mxu0 0
  %1957 = vmatpush1.bf16.msra.mxu0 0
  %1958 = vmatprep.subr.bf16.mxu0 0
  %1959 = vmatpush1.bf16.msra.mxu0 0
  %1960 = vmatprep.subr.bf16.mxu0 0
  %1961 = vmatpush1.bf16.msra.mxu0 0
  %1962 = vmatprep.subr.bf16.mxu0 0
  %1963 = vmatpush1.bf16.msra.mxu0 0
  %1964 = vmatprep.subr.bf16.mxu0 0
  %1965 = vmatpush1.bf16.msra.mxu0 0
  %1966 = vmatprep.subr.bf16.mxu0 0
  %1967 = vmatpush1.bf16.msra.mxu0 0
  %1968 = vmatprep.subr.bf16.mxu0 0
  %1969 = vmatpush1.bf16.msra.mxu0 0
  %1970 = vmatprep.subr.bf16.mxu0 0
  %1971 = vmatpush1.bf16.msra.mxu0 0
  %1972 = vmatprep.subr.bf16.mxu0 0
  %1973 = vmatpush1.bf16.msra.mxu0 0
  %1974 = vmatprep.subr.bf16.mxu0 0
  %1975 = vmatpush1.bf16.msra.mxu0 0
  %1976 = vmatprep.subr.bf16.mxu0 0
  %1977 = vmatpush1.bf16.msra.mxu0 0
  %1978 = vmatprep.subr.bf16.mxu0 0
  %1979 = vmatpush1.bf16.msra.mxu0 0
  %1980 = vmatprep.subr.bf16.mxu0 0
  %1981 = vmatpush1.bf16.msra.mxu0 0
  %1982 = vmatprep.subr.bf16.mxu0 0
  %1983 = vmatpush1.bf16.msra.mxu0 0
  %1984 = vmatprep.mubr.bf16.mxu0 0
  %1985 = vmatmul.mubr.bf16.gmra.mrb[0].mxu0 %v1894
  %v1986 = vpop.f32.mrb[0].mxu0
  %v1987 = vadd.f32 0.0, %v1986
  %v1988 = vpop.f32.mrb[0].mxu0
  %v1989 = vadd.f32 0.0, %v1988
  %v1990 = vpop.f32.mrb[0].mxu0
  %v1991 = vadd.f32 0.0, %v1990
  %v1992 = vpop.f32.mrb[0].mxu0
  %v1993 = vadd.f32 0.0, %v1992
  %1994 = vmatprep.mubr.bf16.mxu0 0
  %1995 = vmatmul.mubr.bf16.gmra.mrb[0].mxu0 %v1897
  %v1996 = vpop.f32.mrb[0].mxu0
  %v1997 = vadd.f32 0.0, %v1996
  %v1998 = vpop.f32.mrb[0].mxu0
  %v1999 = vadd.f32 0.0, %v1998
  %v2000 = vpop.f32.mrb[0].mxu0
  %v2001 = vadd.f32 0.0, %v2000
  %v2002 = vpop.f32.mrb[0].mxu0
  %v2003 = vadd.f32 0.0, %v2002
  %2004 = vdwg.mxu0
  %v2005 = vld [vmem:[%s6] sm:$0xff]
  %v2006 = vld [vmem:[%s6 + $0x8] sm:$0xff]
  %v2007 = vld [vmem:[%s6 + $0x10] sm:$0xff]
  %v2008 = vld [vmem:[%s6 + $0x18] sm:$0xff]
  %vm2009 = vcmask 31744
  %v2011 = vsel %vm2009, %v2005, 0
  %v2014 = vsel %vm2009, %v2006, 0
  %v2017 = vsel %vm2009, %v2007, 0
  %v2020 = vsel %vm2009, %v2008, 0
  %v2023 = vsel %vm1141, %v1481, 0
  %v2026 = vsel %vm1141, %v1482, 0
  %v2029 = vsel %vm1141, %v1821, 0
  %v2032 = vsel %vm1141, %v1822, 0
  %2034 = vmatprep.subr.mxu0 %v2026
  %2035 = vmatpush1.msra.mxu0 %v2023
  %2036 = vmatprep.subr.mxu0 0.0
  %2037 = vmatpush1.msra.mxu0 0.0
  %2038 = vmatprep.subr.mxu0 0.0
  %2039 = vmatpush1.msra.mxu0 0.0
  %2040 = vmatprep.subr.mxu0 0.0
  %2041 = vmatpush1.msra.mxu0 0.0
  %2042 = vmatprep.subr.mxu0 0.0
  %2043 = vmatpush1.msra.mxu0 0.0
  %2044 = vmatprep.subr.mxu0 0.0
  %2045 = vmatpush1.msra.mxu0 0.0
  %2046 = vmatprep.subr.mxu0 0.0
  %2047 = vmatpush1.msra.mxu0 0.0
  %2048 = vmatprep.subr.mxu0 0.0
  %2049 = vmatpush1.msra.mxu0 0.0
  %2050 = vmatprep.subr.mxu0 0.0
  %2051 = vmatpush1.msra.mxu0 0.0
  %2052 = vmatprep.subr.mxu0 0.0
  %2053 = vmatpush1.msra.mxu0 0.0
  %2054 = vmatprep.subr.mxu0 0.0
  %2055 = vmatpush1.msra.mxu0 0.0
  %2056 = vmatprep.subr.mxu0 0.0
  %2057 = vmatpush1.msra.mxu0 0.0
  %2058 = vmatprep.subr.mxu0 0.0
  %2059 = vmatpush1.msra.mxu0 0.0
  %2060 = vmatprep.subr.mxu0 0.0
  %2061 = vmatpush1.msra.mxu0 0.0
  %2062 = vmatprep.subr.mxu0 0.0
  %2063 = vmatpush1.msra.mxu0 0.0
  %2064 = vmatprep.subr.mxu0 0.0
  %2065 = vmatpush1.msra.mxu0 0.0
  %2066 = vmatprep.subr.mxu0 0.0
  %2067 = vmatpush1.msra.mxu0 0.0
  %2068 = vmatprep.subr.mxu0 0.0
  %2069 = vmatpush1.msra.mxu0 0.0
  %2070 = vmatprep.subr.mxu0 0.0
  %2071 = vmatpush1.msra.mxu0 0.0
  %2072 = vmatprep.subr.mxu0 0.0
  %2073 = vmatpush1.msra.mxu0 0.0
  %2074 = vmatprep.subr.mxu0 0.0
  %2075 = vmatpush1.msra.mxu0 0.0
  %2076 = vmatprep.subr.mxu0 0.0
  %2077 = vmatpush1.msra.mxu0 0.0
  %2078 = vmatprep.subr.mxu0 0.0
  %2079 = vmatpush1.msra.mxu0 0.0
  %2080 = vmatprep.subr.mxu0 0.0
  %2081 = vmatpush1.msra.mxu0 0.0
  %2082 = vmatprep.subr.mxu0 0.0
  %2083 = vmatpush1.msra.mxu0 0.0
  %2084 = vmatprep.subr.mxu0 0.0
  %2085 = vmatpush1.msra.mxu0 0.0
  %2086 = vmatprep.subr.mxu0 0.0
  %2087 = vmatpush1.msra.mxu0 0.0
  %2088 = vmatprep.subr.mxu0 0.0
  %2089 = vmatpush1.msra.mxu0 0.0
  %2090 = vmatprep.subr.mxu0 0.0
  %2091 = vmatpush1.msra.mxu0 0.0
  %2092 = vmatprep.subr.mxu0 0.0
  %2093 = vmatpush1.msra.mxu0 0.0
  %2094 = vmatprep.subr.mxu0 0.0
  %2095 = vmatpush1.msra.mxu0 0.0
  %2096 = vmatprep.subr.mxu0 0.0
  %2097 = vmatpush1.msra.mxu0 0.0
  %2098 = vmatprep.mubr.f32.mxu0 0.0
  %2099 = vmatmul.mubr.f32.gmra.mrb[0].mxu0 %v2011
  %v2100 = vpop.f32.mrb[0].mxu0
  %v2101 = vadd.f32 0.0, %v2100
  %v2102 = vpop.f32.mrb[0].mxu0
  %v2103 = vadd.f32 0.0, %v2102
  %2104 = vmatprep.mubr.f32.mxu0 0.0
  %2105 = vmatmul.mubr.f32.gmra.mrb[0].mxu0 %v2014
  %v2106 = vpop.f32.mrb[0].mxu0
  %v2107 = vadd.f32 0.0, %v2106
  %v2108 = vpop.f32.mrb[0].mxu0
  %v2109 = vadd.f32 0.0, %v2108
  %2110 = vmatprep.mubr.f32.mxu0 0.0
  %2111 = vmatmul.mubr.f32.gmra.mrb[0].mxu0 %v2017
  %v2112 = vpop.f32.mrb[0].mxu0
  %v2113 = vadd.f32 0.0, %v2112
  %v2114 = vpop.f32.mrb[0].mxu0
  %v2115 = vadd.f32 0.0, %v2114
  %2116 = vmatprep.mubr.f32.mxu0 0.0
  %2117 = vmatmul.mubr.f32.gmra.mrb[0].mxu0 %v2020
  %v2118 = vpop.f32.mrb[0].mxu0
  %v2119 = vadd.f32 0.0, %v2118
  %v2120 = vpop.f32.mrb[0].mxu0
  %v2121 = vadd.f32 0.0, %v2120
  %2122 = vdwg.mxu0
  %2123 = vmatprep.subr.mxu0 %v2032
  %2124 = vmatpush1.msra.mxu0 %v2029
  %2125 = vmatprep.subr.mxu0 0.0
  %2126 = vmatpush1.msra.mxu0 0.0
  %2127 = vmatprep.subr.mxu0 0.0
  %2128 = vmatpush1.msra.mxu0 0.0
  %2129 = vmatprep.subr.mxu0 0.0
  %2130 = vmatpush1.msra.mxu0 0.0
  %2131 = vmatprep.subr.mxu0 0.0
  %2132 = vmatpush1.msra.mxu0 0.0
  %2133 = vmatprep.subr.mxu0 0.0
  %2134 = vmatpush1.msra.mxu0 0.0
  %2135 = vmatprep.subr.mxu0 0.0
  %2136 = vmatpush1.msra.mxu0 0.0
  %2137 = vmatprep.subr.mxu0 0.0
  %2138 = vmatpush1.msra.mxu0 0.0
  %2139 = vmatprep.subr.mxu0 0.0
  %2140 = vmatpush1.msra.mxu0 0.0
  %2141 = vmatprep.subr.mxu0 0.0
  %2142 = vmatpush1.msra.mxu0 0.0
  %2143 = vmatprep.subr.mxu0 0.0
  %2144 = vmatpush1.msra.mxu0 0.0
  %2145 = vmatprep.subr.mxu0 0.0
  %2146 = vmatpush1.msra.mxu0 0.0
  %2147 = vmatprep.subr.mxu0 0.0
  %2148 = vmatpush1.msra.mxu0 0.0
  %2149 = vmatprep.subr.mxu0 0.0
  %2150 = vmatpush1.msra.mxu0 0.0
  %2151 = vmatprep.subr.mxu0 0.0
  %2152 = vmatpush1.msra.mxu0 0.0
  %2153 = vmatprep.subr.mxu0 0.0
  %2154 = vmatpush1.msra.mxu0 0.0
  %2155 = vmatprep.subr.mxu0 0.0
  %2156 = vmatpush1.msra.mxu0 0.0
  %2157 = vmatprep.subr.mxu0 0.0
  %2158 = vmatpush1.msra.mxu0 0.0
  %2159 = vmatprep.subr.mxu0 0.0
  %2160 = vmatpush1.msra.mxu0 0.0
  %2161 = vmatprep.subr.mxu0 0.0
  %2162 = vmatpush1.msra.mxu0 0.0
  %2163 = vmatprep.subr.mxu0 0.0
  %2164 = vmatpush1.msra.mxu0 0.0
  %2165 = vmatprep.subr.mxu0 0.0
  %2166 = vmatpush1.msra.mxu0 0.0
  %2167 = vmatprep.subr.mxu0 0.0
  %2168 = vmatpush1.msra.mxu0 0.0
  %2169 = vmatprep.subr.mxu0 0.0
  %2170 = vmatpush1.msra.mxu0 0.0
  %2171 = vmatprep.subr.mxu0 0.0
  %2172 = vmatpush1.msra.mxu0 0.0
  %2173 = vmatprep.subr.mxu0 0.0
  %2174 = vmatpush1.msra.mxu0 0.0
  %2175 = vmatprep.subr.mxu0 0.0
  %2176 = vmatpush1.msra.mxu0 0.0
  %2177 = vmatprep.subr.mxu0 0.0
  %2178 = vmatpush1.msra.mxu0 0.0
  %2179 = vmatprep.subr.mxu0 0.0
  %2180 = vmatpush1.msra.mxu0 0.0
  %2181 = vmatprep.subr.mxu0 0.0
  %2182 = vmatpush1.msra.mxu0 0.0
  %2183 = vmatprep.subr.mxu0 0.0
  %2184 = vmatpush1.msra.mxu0 0.0
  %2185 = vmatprep.subr.mxu0 0.0
  %2186 = vmatpush1.msra.mxu0 0.0
  %2187 = vmatprep.mubr.f32.mxu0 0.0
  %2188 = vmatmul.mubr.f32.gmra.mrb[0].mxu0 %v2011
  %v2189 = vpop.f32.mrb[0].mxu0
  %v2190 = vadd.f32 0.0, %v2189
  %v2191 = vpop.f32.mrb[0].mxu0
  %v2192 = vadd.f32 0.0, %v2191
  %2193 = vmatprep.mubr.f32.mxu0 0.0
  %2194 = vmatmul.mubr.f32.gmra.mrb[0].mxu0 %v2014
  %v2195 = vpop.f32.mrb[0].mxu0
  %v2196 = vadd.f32 0.0, %v2195
  %v2197 = vpop.f32.mrb[0].mxu0
  %v2198 = vadd.f32 0.0, %v2197
  %2199 = vmatprep.mubr.f32.mxu0 0.0
  %2200 = vmatmul.mubr.f32.gmra.mrb[0].mxu0 %v2017
  %v2201 = vpop.f32.mrb[0].mxu0
  %v2202 = vadd.f32 0.0, %v2201
  %v2203 = vpop.f32.mrb[0].mxu0
  %v2204 = vadd.f32 0.0, %v2203
  %2205 = vmatprep.mubr.f32.mxu0 0.0
  %2206 = vmatmul.mubr.f32.gmra.mrb[0].mxu0 %v2020
  %v2207 = vpop.f32.mrb[0].mxu0
  %v2208 = vadd.f32 0.0, %v2207
  %v2209 = vpop.f32.mrb[0].mxu0
  %v2210 = vadd.f32 0.0, %v2209
  %2211 = vdwg.mxu0
  %v2212 = vmul.f32 %v2101, %v1934
  %v2213 = vmul.f32 %v2103, %v1936
  %v2214 = vmul.f32 %v2190, %v1987
  %v2215 = vmul.f32 %v2192, %v1989
  %v2216 = vmul.f32 %v2107, %v1938
  %v2217 = vmul.f32 %v2109, %v1940
  %v2218 = vmul.f32 %v2196, %v1991
  %v2219 = vmul.f32 %v2198, %v1993
  %v2220 = vmul.f32 %v2113, %v1944
  %v2221 = vmul.f32 %v2115, %v1946
  %v2222 = vmul.f32 %v2202, %v1997
  %v2223 = vmul.f32 %v2204, %v1999
  %v2224 = vmul.f32 %v2119, %v1948
  %v2225 = vmul.f32 %v2121, %v1950
  %v2226 = vmul.f32 %v2208, %v2001
  %v2227 = vmul.f32 %v2210, %v2003
  %v2228 = vadd.f32 %v2212, 0.0
  %v2229 = vadd.f32 %v2213, 0.0
  %v2230 = vadd.f32 %v2214, 0.0
  %v2231 = vadd.f32 %v2215, 0.0
  %v2232 = vadd.f32 %v2216, 0.0
  %v2233 = vadd.f32 %v2217, 0.0
  %v2234 = vadd.f32 %v2218, 0.0
  %v2235 = vadd.f32 %v2219, 0.0
  %v2236 = vadd.f32 %v2220, 0.0
  %v2237 = vadd.f32 %v2221, 0.0
  %v2238 = vadd.f32 %v2222, 0.0
  %v2239 = vadd.f32 %v2223, 0.0
  %v2240 = vadd.f32 %v2224, 0.0
  %v2241 = vadd.f32 %v2225, 0.0
  %v2242 = vadd.f32 %v2226, 0.0
  %v2243 = vadd.f32 %v2227, 0.0
  %v2244 = vld [vmem:[%s0 + $0x40] sm:$0xff]
  %v2245 = vld [vmem:[%s0 + $0x48] sm:$0xff]
  %v2246 = vld [vmem:[%s0 + $0x50] sm:$0xff]
  %v2247 = vld [vmem:[%s0 + $0x58] sm:$0xff]
  %v2248 = vld [vmem:[%s0 + $0x60] sm:$0xff]
  %v2249 = vld [vmem:[%s0 + $0x68] sm:$0xff]
  %v2250 = vld [vmem:[%s0 + $0x70] sm:$0xff]
  %v2251 = vld [vmem:[%s0 + $0x78] sm:$0xff]
  %v2260 = vunpack.c.l.b16 %v2244
  %v2261 = vunpack.c.h.b16 %v2244
  %v2262 = vunpack.c.l.b16 %v2245
  %v2263 = vunpack.c.h.b16 %v2245
  %v2264 = vunpack.c.l.b16 %v2246
  %v2265 = vunpack.c.h.b16 %v2246
  %v2266 = vunpack.c.l.b16 %v2247
  %v2267 = vunpack.c.h.b16 %v2247
  %v2268 = vunpack.c.l.b16 %v2248
  %v2269 = vunpack.c.h.b16 %v2248
  %v2270 = vunpack.c.l.b16 %v2249
  %v2271 = vunpack.c.h.b16 %v2249
  %v2272 = vunpack.c.l.b16 %v2250
  %v2273 = vunpack.c.h.b16 %v2250
  %v2274 = vunpack.c.l.b16 %v2251
  %v2275 = vunpack.c.h.b16 %v2251
  %v2276 = vpack.c.b16 %v2264, %v2260
  %v2277 = vpack.c.b16 %v2265, %v2261
  %v2278 = vpack.c.b16 %v2266, %v2262
  %v2279 = vpack.c.b16 %v2267, %v2263
  %v2280 = vpack.c.b16 %v2272, %v2268
  %v2281 = vpack.c.b16 %v2273, %v2269
  %v2282 = vpack.c.b16 %v2274, %v2270
  %v2283 = vpack.c.b16 %v2275, %v2271
  %2292 = vmatprep.subr.bf16.mxu0 %v2277
  %2293 = vmatpush1.bf16.msra.mxu0 %v2276
  %2294 = vmatprep.subr.bf16.mxu0 %v2281
  %2295 = vmatpush1.bf16.msra.mxu0 %v2280
  %2296 = vmatprep.subr.bf16.mxu0 0
  %2297 = vmatpush1.bf16.msra.mxu0 0
  %2298 = vmatprep.subr.bf16.mxu0 0
  %2299 = vmatpush1.bf16.msra.mxu0 0
  %2300 = vmatprep.subr.bf16.mxu0 0
  %2301 = vmatpush1.bf16.msra.mxu0 0
  %2302 = vmatprep.subr.bf16.mxu0 0
  %2303 = vmatpush1.bf16.msra.mxu0 0
  %2304 = vmatprep.subr.bf16.mxu0 0
  %2305 = vmatpush1.bf16.msra.mxu0 0
  %2306 = vmatprep.subr.bf16.mxu0 0
  %2307 = vmatpush1.bf16.msra.mxu0 0
  %2308 = vmatprep.subr.bf16.mxu0 0
  %2309 = vmatpush1.bf16.msra.mxu0 0
  %2310 = vmatprep.subr.bf16.mxu0 0
  %2311 = vmatpush1.bf16.msra.mxu0 0
  %2312 = vmatprep.subr.bf16.mxu0 0
  %2313 = vmatpush1.bf16.msra.mxu0 0
  %2314 = vmatprep.subr.bf16.mxu0 0
  %2315 = vmatpush1.bf16.msra.mxu0 0
  %2316 = vmatprep.subr.bf16.mxu0 0
  %2317 = vmatpush1.bf16.msra.mxu0 0
  %2318 = vmatprep.subr.bf16.mxu0 0
  %2319 = vmatpush1.bf16.msra.mxu0 0
  %2320 = vmatprep.subr.bf16.mxu0 0
  %2321 = vmatpush1.bf16.msra.mxu0 0
  %2322 = vmatprep.subr.bf16.mxu0 0
  %2323 = vmatpush1.bf16.msra.mxu0 0
  %2324 = vmatprep.mubr.bf16.mxu0 0
  %2325 = vmatmul.mubr.bf16.gmra.mrb[0].mxu0 %v1894
  %v2326 = vpop.f32.mrb[0].mxu0
  %v2327 = vadd.f32 0.0, %v2326
  %v2328 = vpop.f32.mrb[0].mxu0
  %v2329 = vadd.f32 0.0, %v2328
  %v2330 = vpop.f32.mrb[0].mxu0
  %v2331 = vadd.f32 0.0, %v2330
  %v2332 = vpop.f32.mrb[0].mxu0
  %v2333 = vadd.f32 0.0, %v2332
  %2334 = vmatprep.mubr.bf16.mxu0 0
  %2335 = vmatmul.mubr.bf16.gmra.mrb[0].mxu0 %v1897
  %v2336 = vpop.f32.mrb[0].mxu0
  %v2337 = vadd.f32 0.0, %v2336
  %v2338 = vpop.f32.mrb[0].mxu0
  %v2339 = vadd.f32 0.0, %v2338
  %v2340 = vpop.f32.mrb[0].mxu0
  %v2341 = vadd.f32 0.0, %v2340
  %v2342 = vpop.f32.mrb[0].mxu0
  %v2343 = vadd.f32 0.0, %v2342
  %2344 = vdwg.mxu0
  %2345 = vmatprep.subr.bf16.mxu0 %v2279
  %2346 = vmatpush1.bf16.msra.mxu0 %v2278
  %2347 = vmatprep.subr.bf16.mxu0 %v2283
  %2348 = vmatpush1.bf16.msra.mxu0 %v2282
  %2349 = vmatprep.subr.bf16.mxu0 0
  %2350 = vmatpush1.bf16.msra.mxu0 0
  %2351 = vmatprep.subr.bf16.mxu0 0
  %2352 = vmatpush1.bf16.msra.mxu0 0
  %2353 = vmatprep.subr.bf16.mxu0 0
  %2354 = vmatpush1.bf16.msra.mxu0 0
  %2355 = vmatprep.subr.bf16.mxu0 0
  %2356 = vmatpush1.bf16.msra.mxu0 0
  %2357 = vmatprep.subr.bf16.mxu0 0
  %2358 = vmatpush1.bf16.msra.mxu0 0
  %2359 = vmatprep.subr.bf16.mxu0 0
  %2360 = vmatpush1.bf16.msra.mxu0 0
  %2361 = vmatprep.subr.bf16.mxu0 0
  %2362 = vmatpush1.bf16.msra.mxu0 0
  %2363 = vmatprep.subr.bf16.mxu0 0
  %2364 = vmatpush1.bf16.msra.mxu0 0
  %2365 = vmatprep.subr.bf16.mxu0 0
  %2366 = vmatpush1.bf16.msra.mxu0 0
  %2367 = vmatprep.subr.bf16.mxu0 0
  %2368 = vmatpush1.bf16.msra.mxu0 0
  %2369 = vmatprep.subr.bf16.mxu0 0
  %2370 = vmatpush1.bf16.msra.mxu0 0
  %2371 = vmatprep.subr.bf16.mxu0 0
  %2372 = vmatpush1.bf16.msra.mxu0 0
  %2373 = vmatprep.subr.bf16.mxu0 0
  %2374 = vmatpush1.bf16.msra.mxu0 0
  %2375 = vmatprep.subr.bf16.mxu0 0
  %2376 = vmatpush1.bf16.msra.mxu0 0
  %2377 = vmatprep.mubr.bf16.mxu0 0
  %2378 = vmatmul.mubr.bf16.gmra.mrb[0].mxu0 %v1894
  %v2379 = vpop.f32.mrb[0].mxu0
  %v2380 = vadd.f32 0.0, %v2379
  %v2381 = vpop.f32.mrb[0].mxu0
  %v2382 = vadd.f32 0.0, %v2381
  %v2383 = vpop.f32.mrb[0].mxu0
  %v2384 = vadd.f32 0.0, %v2383
  %v2385 = vpop.f32.mrb[0].mxu0
  %v2386 = vadd.f32 0.0, %v2385
  %2387 = vmatprep.mubr.bf16.mxu0 0
  %2388 = vmatmul.mubr.bf16.gmra.mrb[0].mxu0 %v1897
  %v2389 = vpop.f32.mrb[0].mxu0
  %v2390 = vadd.f32 0.0, %v2389
  %v2391 = vpop.f32.mrb[0].mxu0
  %v2392 = vadd.f32 0.0, %v2391
  %v2393 = vpop.f32.mrb[0].mxu0
  %v2394 = vadd.f32 0.0, %v2393
  %v2395 = vpop.f32.mrb[0].mxu0
  %v2396 = vadd.f32 0.0, %v2395
  %2397 = vdwg.mxu0
  %v2398 = vrot.slane %v1481, 4
  %v2399 = vrot.slane %v1482, 4
  %v2400 = vrot.slane %v1821, 4
  %v2401 = vrot.slane %v1822, 4
  %v2402 = vsel %vm1141, %v2398, 0
  %v2404 = vsel %vm1141, %v2399, 0
  %v2406 = vsel %vm1141, %v2400, 0
  %v2408 = vsel %vm1141, %v2401, 0
  %2410 = vmatprep.subr.mxu0 %v2404
  %2411 = vmatpush1.msra.mxu0 %v2402
  %2412 = vmatprep.subr.mxu0 0.0
  %2413 = vmatpush1.msra.mxu0 0.0
  %2414 = vmatprep.subr.mxu0 0.0
  %2415 = vmatpush1.msra.mxu0 0.0
  %2416 = vmatprep.subr.mxu0 0.0
  %2417 = vmatpush1.msra.mxu0 0.0
  %2418 = vmatprep.subr.mxu0 0.0
  %2419 = vmatpush1.msra.mxu0 0.0
  %2420 = vmatprep.subr.mxu0 0.0
  %2421 = vmatpush1.msra.mxu0 0.0
  %2422 = vmatprep.subr.mxu0 0.0
  %2423 = vmatpush1.msra.mxu0 0.0
  %2424 = vmatprep.subr.mxu0 0.0
  %2425 = vmatpush1.msra.mxu0 0.0
  %2426 = vmatprep.subr.mxu0 0.0
  %2427 = vmatpush1.msra.mxu0 0.0
  %2428 = vmatprep.subr.mxu0 0.0
  %2429 = vmatpush1.msra.mxu0 0.0
  %2430 = vmatprep.subr.mxu0 0.0
  %2431 = vmatpush1.msra.mxu0 0.0
  %2432 = vmatprep.subr.mxu0 0.0
  %2433 = vmatpush1.msra.mxu0 0.0
  %2434 = vmatprep.subr.mxu0 0.0
  %2435 = vmatpush1.msra.mxu0 0.0
  %2436 = vmatprep.subr.mxu0 0.0
  %2437 = vmatpush1.msra.mxu0 0.0
  %2438 = vmatprep.subr.mxu0 0.0
  %2439 = vmatpush1.msra.mxu0 0.0
  %2440 = vmatprep.subr.mxu0 0.0
  %2441 = vmatpush1.msra.mxu0 0.0
  %2442 = vmatprep.subr.mxu0 0.0
  %2443 = vmatpush1.msra.mxu0 0.0
  %2444 = vmatprep.subr.mxu0 0.0
  %2445 = vmatpush1.msra.mxu0 0.0
  %2446 = vmatprep.subr.mxu0 0.0
  %2447 = vmatpush1.msra.mxu0 0.0
  %2448 = vmatprep.subr.mxu0 0.0
  %2449 = vmatpush1.msra.mxu0 0.0
  %2450 = vmatprep.subr.mxu0 0.0
  %2451 = vmatpush1.msra.mxu0 0.0
  %2452 = vmatprep.subr.mxu0 0.0
  %2453 = vmatpush1.msra.mxu0 0.0
  %2454 = vmatprep.subr.mxu0 0.0
  %2455 = vmatpush1.msra.mxu0 0.0
  %2456 = vmatprep.subr.mxu0 0.0
  %2457 = vmatpush1.msra.mxu0 0.0
  %2458 = vmatprep.subr.mxu0 0.0
  %2459 = vmatpush1.msra.mxu0 0.0
  %2460 = vmatprep.subr.mxu0 0.0
  %2461 = vmatpush1.msra.mxu0 0.0
  %2462 = vmatprep.subr.mxu0 0.0
  %2463 = vmatpush1.msra.mxu0 0.0
  %2464 = vmatprep.subr.mxu0 0.0
  %2465 = vmatpush1.msra.mxu0 0.0
  %2466 = vmatprep.subr.mxu0 0.0
  %2467 = vmatpush1.msra.mxu0 0.0
  %2468 = vmatprep.subr.mxu0 0.0
  %2469 = vmatpush1.msra.mxu0 0.0
  %2470 = vmatprep.subr.mxu0 0.0
  %2471 = vmatpush1.msra.mxu0 0.0
  %2472 = vmatprep.subr.mxu0 0.0
  %2473 = vmatpush1.msra.mxu0 0.0
  %2474 = vmatprep.mubr.f32.mxu0 0.0
  %2475 = vmatmul.mubr.f32.gmra.mrb[0].mxu0 %v2011
  %v2476 = vpop.f32.mrb[0].mxu0
  %v2477 = vadd.f32 0.0, %v2476
  %v2478 = vpop.f32.mrb[0].mxu0
  %v2479 = vadd.f32 0.0, %v2478
  %2480 = vmatprep.mubr.f32.mxu0 0.0
  %2481 = vmatmul.mubr.f32.gmra.mrb[0].mxu0 %v2014
  %v2482 = vpop.f32.mrb[0].mxu0
  %v2483 = vadd.f32 0.0, %v2482
  %v2484 = vpop.f32.mrb[0].mxu0
  %v2485 = vadd.f32 0.0, %v2484
  %2486 = vmatprep.mubr.f32.mxu0 0.0
  %2487 = vmatmul.mubr.f32.gmra.mrb[0].mxu0 %v2017
  %v2488 = vpop.f32.mrb[0].mxu0
  %v2489 = vadd.f32 0.0, %v2488
  %v2490 = vpop.f32.mrb[0].mxu0
  %v2491 = vadd.f32 0.0, %v2490
  %2492 = vmatprep.mubr.f32.mxu0 0.0
  %2493 = vmatmul.mubr.f32.gmra.mrb[0].mxu0 %v2020
  %v2494 = vpop.f32.mrb[0].mxu0
  %v2495 = vadd.f32 0.0, %v2494
  %v2496 = vpop.f32.mrb[0].mxu0
  %v2497 = vadd.f32 0.0, %v2496
  %2498 = vdwg.mxu0
  %2499 = vmatprep.subr.mxu0 %v2408
  %2500 = vmatpush1.msra.mxu0 %v2406
  %2501 = vmatprep.subr.mxu0 0.0
  %2502 = vmatpush1.msra.mxu0 0.0
  %2503 = vmatprep.subr.mxu0 0.0
  %2504 = vmatpush1.msra.mxu0 0.0
  %2505 = vmatprep.subr.mxu0 0.0
  %2506 = vmatpush1.msra.mxu0 0.0
  %2507 = vmatprep.subr.mxu0 0.0
  %2508 = vmatpush1.msra.mxu0 0.0
  %2509 = vmatprep.subr.mxu0 0.0
  %2510 = vmatpush1.msra.mxu0 0.0
  %2511 = vmatprep.subr.mxu0 0.0
  %2512 = vmatpush1.msra.mxu0 0.0
  %2513 = vmatprep.subr.mxu0 0.0
  %2514 = vmatpush1.msra.mxu0 0.0
  %2515 = vmatprep.subr.mxu0 0.0
  %2516 = vmatpush1.msra.mxu0 0.0
  %2517 = vmatprep.subr.mxu0 0.0
  %2518 = vmatpush1.msra.mxu0 0.0
  %2519 = vmatprep.subr.mxu0 0.0
  %2520 = vmatpush1.msra.mxu0 0.0
  %2521 = vmatprep.subr.mxu0 0.0
  %2522 = vmatpush1.msra.mxu0 0.0
  %2523 = vmatprep.subr.mxu0 0.0
  %2524 = vmatpush1.msra.mxu0 0.0
  %2525 = vmatprep.subr.mxu0 0.0
  %2526 = vmatpush1.msra.mxu0 0.0
  %2527 = vmatprep.subr.mxu0 0.0
  %2528 = vmatpush1.msra.mxu0 0.0
  %2529 = vmatprep.subr.mxu0 0.0
  %2530 = vmatpush1.msra.mxu0 0.0
  %2531 = vmatprep.subr.mxu0 0.0
  %2532 = vmatpush1.msra.mxu0 0.0
  %2533 = vmatprep.subr.mxu0 0.0
  %2534 = vmatpush1.msra.mxu0 0.0
  %2535 = vmatprep.subr.mxu0 0.0
  %2536 = vmatpush1.msra.mxu0 0.0
  %2537 = vmatprep.subr.mxu0 0.0
  %2538 = vmatpush1.msra.mxu0 0.0
  %2539 = vmatprep.subr.mxu0 0.0
  %2540 = vmatpush1.msra.mxu0 0.0
  %2541 = vmatprep.subr.mxu0 0.0
  %2542 = vmatpush1.msra.mxu0 0.0
  %2543 = vmatprep.subr.mxu0 0.0
  %2544 = vmatpush1.msra.mxu0 0.0
  %2545 = vmatprep.subr.mxu0 0.0
  %2546 = vmatpush1.msra.mxu0 0.0
  %2547 = vmatprep.subr.mxu0 0.0
  %2548 = vmatpush1.msra.mxu0 0.0
  %2549 = vmatprep.subr.mxu0 0.0
  %2550 = vmatpush1.msra.mxu0 0.0
  %2551 = vmatprep.subr.mxu0 0.0
  %2552 = vmatpush1.msra.mxu0 0.0
  %2553 = vmatprep.subr.mxu0 0.0
  %2554 = vmatpush1.msra.mxu0 0.0
  %2555 = vmatprep.subr.mxu0 0.0
  %2556 = vmatpush1.msra.mxu0 0.0
  %2557 = vmatprep.subr.mxu0 0.0
  %2558 = vmatpush1.msra.mxu0 0.0
  %2559 = vmatprep.subr.mxu0 0.0
  %2560 = vmatpush1.msra.mxu0 0.0
  %2561 = vmatprep.subr.mxu0 0.0
  %2562 = vmatpush1.msra.mxu0 0.0
  %2563 = vmatprep.mubr.f32.mxu0 0.0
  %2564 = vmatmul.mubr.f32.gmra.mrb[0].mxu0 %v2011
  %v2565 = vpop.f32.mrb[0].mxu0
  %v2566 = vadd.f32 0.0, %v2565
  %v2567 = vpop.f32.mrb[0].mxu0
  %v2568 = vadd.f32 0.0, %v2567
  %2569 = vmatprep.mubr.f32.mxu0 0.0
  %2570 = vmatmul.mubr.f32.gmra.mrb[0].mxu0 %v2014
  %v2571 = vpop.f32.mrb[0].mxu0
  %v2572 = vadd.f32 0.0, %v2571
  %v2573 = vpop.f32.mrb[0].mxu0
  %v2574 = vadd.f32 0.0, %v2573
  %2575 = vmatprep.mubr.f32.mxu0 0.0
  %2576 = vmatmul.mubr.f32.gmra.mrb[0].mxu0 %v2017
  %v2577 = vpop.f32.mrb[0].mxu0
  %v2578 = vadd.f32 0.0, %v2577
  %v2579 = vpop.f32.mrb[0].mxu0
  %v2580 = vadd.f32 0.0, %v2579
  %2581 = vmatprep.mubr.f32.mxu0 0.0
  %2582 = vmatmul.mubr.f32.gmra.mrb[0].mxu0 %v2020
  %v2583 = vpop.f32.mrb[0].mxu0
  %v2584 = vadd.f32 0.0, %v2583
  %v2585 = vpop.f32.mrb[0].mxu0
  %v2586 = vadd.f32 0.0, %v2585
  %2587 = vdwg.mxu0
  %v2588 = vmul.f32 %v2477, %v2327
  %v2589 = vmul.f32 %v2479, %v2329
  %v2590 = vmul.f32 %v2566, %v2380
  %v2591 = vmul.f32 %v2568, %v2382
  %v2592 = vmul.f32 %v2483, %v2331
  %v2593 = vmul.f32 %v2485, %v2333
  %v2594 = vmul.f32 %v2572, %v2384
  %v2595 = vmul.f32 %v2574, %v2386
  %v2596 = vmul.f32 %v2489, %v2337
  %v2597 = vmul.f32 %v2491, %v2339
  %v2598 = vmul.f32 %v2578, %v2390
  %v2599 = vmul.f32 %v2580, %v2392
  %v2600 = vmul.f32 %v2495, %v2341
  %v2601 = vmul.f32 %v2497, %v2343
  %v2602 = vmul.f32 %v2584, %v2394
  %v2603 = vmul.f32 %v2586, %v2396
  %v2604 = vadd.f32 %v2228, %v2588
  %v2605 = vadd.f32 %v2229, %v2589
  %v2606 = vadd.f32 %v2230, %v2590
  %v2607 = vadd.f32 %v2231, %v2591
  %v2608 = vadd.f32 %v2232, %v2592
  %v2609 = vadd.f32 %v2233, %v2593
  %v2610 = vadd.f32 %v2234, %v2594
  %v2611 = vadd.f32 %v2235, %v2595
  %v2612 = vadd.f32 %v2236, %v2596
  %v2613 = vadd.f32 %v2237, %v2597
  %v2614 = vadd.f32 %v2238, %v2598
  %v2615 = vadd.f32 %v2239, %v2599
  %v2616 = vadd.f32 %v2240, %v2600
  %v2617 = vadd.f32 %v2241, %v2601
  %v2618 = vadd.f32 %v2242, %v2602
  %v2619 = vadd.f32 %v2243, %v2603
  %v2620 = vld [vmem:[%s0 + $0x80] sm:$0xff]
  %v2621 = vld [vmem:[%s0 + $0x88] sm:$0xff]
  %v2622 = vld [vmem:[%s0 + $0x90] sm:$0xff]
  %v2623 = vld [vmem:[%s0 + $0x98] sm:$0xff]
  %v2624 = vld [vmem:[%s0 + $0xa0] sm:$0xff]
  %v2625 = vld [vmem:[%s0 + $0xa8] sm:$0xff]
  %v2626 = vld [vmem:[%s0 + $0xb0] sm:$0xff]
  %v2627 = vld [vmem:[%s0 + $0xb8] sm:$0xff]
  %v2636 = vunpack.c.l.b16 %v2620
  %v2637 = vunpack.c.h.b16 %v2620
  %v2638 = vunpack.c.l.b16 %v2621
  %v2639 = vunpack.c.h.b16 %v2621
  %v2640 = vunpack.c.l.b16 %v2622
  %v2641 = vunpack.c.h.b16 %v2622
  %v2642 = vunpack.c.l.b16 %v2623
  %v2643 = vunpack.c.h.b16 %v2623
  %v2644 = vunpack.c.l.b16 %v2624
  %v2645 = vunpack.c.h.b16 %v2624
  %v2646 = vunpack.c.l.b16 %v2625
  %v2647 = vunpack.c.h.b16 %v2625
  %v2648 = vunpack.c.l.b16 %v2626
  %v2649 = vunpack.c.h.b16 %v2626
  %v2650 = vunpack.c.l.b16 %v2627
  %v2651 = vunpack.c.h.b16 %v2627
  %v2652 = vpack.c.b16 %v2640, %v2636
  %v2653 = vpack.c.b16 %v2641, %v2637
  %v2654 = vpack.c.b16 %v2642, %v2638
  %v2655 = vpack.c.b16 %v2643, %v2639
  %v2656 = vpack.c.b16 %v2648, %v2644
  %v2657 = vpack.c.b16 %v2649, %v2645
  %v2658 = vpack.c.b16 %v2650, %v2646
  %v2659 = vpack.c.b16 %v2651, %v2647
  %2668 = vmatprep.subr.bf16.mxu0 %v2653
  %2669 = vmatpush1.bf16.msra.mxu0 %v2652
  %2670 = vmatprep.subr.bf16.mxu0 %v2657
  %2671 = vmatpush1.bf16.msra.mxu0 %v2656
  %2672 = vmatprep.subr.bf16.mxu0 0
  %2673 = vmatpush1.bf16.msra.mxu0 0
  %2674 = vmatprep.subr.bf16.mxu0 0
  %2675 = vmatpush1.bf16.msra.mxu0 0
  %2676 = vmatprep.subr.bf16.mxu0 0
  %2677 = vmatpush1.bf16.msra.mxu0 0
  %2678 = vmatprep.subr.bf16.mxu0 0
  %2679 = vmatpush1.bf16.msra.mxu0 0
  %2680 = vmatprep.subr.bf16.mxu0 0
  %2681 = vmatpush1.bf16.msra.mxu0 0
  %2682 = vmatprep.subr.bf16.mxu0 0
  %2683 = vmatpush1.bf16.msra.mxu0 0
  %2684 = vmatprep.subr.bf16.mxu0 0
  %2685 = vmatpush1.bf16.msra.mxu0 0
  %2686 = vmatprep.subr.bf16.mxu0 0
  %2687 = vmatpush1.bf16.msra.mxu0 0
  %2688 = vmatprep.subr.bf16.mxu0 0
  %2689 = vmatpush1.bf16.msra.mxu0 0
  %2690 = vmatprep.subr.bf16.mxu0 0
  %2691 = vmatpush1.bf16.msra.mxu0 0
  %2692 = vmatprep.subr.bf16.mxu0 0
  %2693 = vmatpush1.bf16.msra.mxu0 0
  %2694 = vmatprep.subr.bf16.mxu0 0
  %2695 = vmatpush1.bf16.msra.mxu0 0
  %2696 = vmatprep.subr.bf16.mxu0 0
  %2697 = vmatpush1.bf16.msra.mxu0 0
  %2698 = vmatprep.subr.bf16.mxu0 0
  %2699 = vmatpush1.bf16.msra.mxu0 0
  %2700 = vmatprep.mubr.bf16.mxu0 0
  %2701 = vmatmul.mubr.bf16.gmra.mrb[0].mxu0 %v1894
  %v2702 = vpop.f32.mrb[0].mxu0
  %v2703 = vadd.f32 0.0, %v2702
  %v2704 = vpop.f32.mrb[0].mxu0
  %v2705 = vadd.f32 0.0, %v2704
  %v2706 = vpop.f32.mrb[0].mxu0
  %v2707 = vadd.f32 0.0, %v2706
  %v2708 = vpop.f32.mrb[0].mxu0
  %v2709 = vadd.f32 0.0, %v2708
  %2710 = vmatprep.mubr.bf16.mxu0 0
  %2711 = vmatmul.mubr.bf16.gmra.mrb[0].mxu0 %v1897
  %v2712 = vpop.f32.mrb[0].mxu0
  %v2713 = vadd.f32 0.0, %v2712
  %v2714 = vpop.f32.mrb[0].mxu0
  %v2715 = vadd.f32 0.0, %v2714
  %v2716 = vpop.f32.mrb[0].mxu0
  %v2717 = vadd.f32 0.0, %v2716
  %v2718 = vpop.f32.mrb[0].mxu0
  %v2719 = vadd.f32 0.0, %v2718
  %2720 = vdwg.mxu0
  %2721 = vmatprep.subr.bf16.mxu0 %v2655
  %2722 = vmatpush1.bf16.msra.mxu0 %v2654
  %2723 = vmatprep.subr.bf16.mxu0 %v2659
  %2724 = vmatpush1.bf16.msra.mxu0 %v2658
  %2725 = vmatprep.subr.bf16.mxu0 0
  %2726 = vmatpush1.bf16.msra.mxu0 0
  %2727 = vmatprep.subr.bf16.mxu0 0
  %2728 = vmatpush1.bf16.msra.mxu0 0
  %2729 = vmatprep.subr.bf16.mxu0 0
  %2730 = vmatpush1.bf16.msra.mxu0 0
  %2731 = vmatprep.subr.bf16.mxu0 0
  %2732 = vmatpush1.bf16.msra.mxu0 0
  %2733 = vmatprep.subr.bf16.mxu0 0
  %2734 = vmatpush1.bf16.msra.mxu0 0
  %2735 = vmatprep.subr.bf16.mxu0 0
  %2736 = vmatpush1.bf16.msra.mxu0 0
  %2737 = vmatprep.subr.bf16.mxu0 0
  %2738 = vmatpush1.bf16.msra.mxu0 0
  %2739 = vmatprep.subr.bf16.mxu0 0
  %2740 = vmatpush1.bf16.msra.mxu0 0
  %2741 = vmatprep.subr.bf16.mxu0 0
  %2742 = vmatpush1.bf16.msra.mxu0 0
  %2743 = vmatprep.subr.bf16.mxu0 0
  %2744 = vmatpush1.bf16.msra.mxu0 0
  %2745 = vmatprep.subr.bf16.mxu0 0
  %2746 = vmatpush1.bf16.msra.mxu0 0
  %2747 = vmatprep.subr.bf16.mxu0 0
  %2748 = vmatpush1.bf16.msra.mxu0 0
  %2749 = vmatprep.subr.bf16.mxu0 0
  %2750 = vmatpush1.bf16.msra.mxu0 0
  %2751 = vmatprep.subr.bf16.mxu0 0
  %2752 = vmatpush1.bf16.msra.mxu0 0
  %2753 = vmatprep.mubr.bf16.mxu0 0
  %2754 = vmatmul.mubr.bf16.gmra.mrb[0].mxu0 %v1894
  %v2755 = vpop.f32.mrb[0].mxu0
  %v2756 = vadd.f32 0.0, %v2755
  %v2757 = vpop.f32.mrb[0].mxu0
  %v2758 = vadd.f32 0.0, %v2757
  %v2759 = vpop.f32.mrb[0].mxu0
  %v2760 = vadd.f32 0.0, %v2759
  %v2761 = vpop.f32.mrb[0].mxu0
  %v2762 = vadd.f32 0.0, %v2761
  %2763 = vmatprep.mubr.bf16.mxu0 0
  %2764 = vmatmul.mubr.bf16.gmra.mrb[0].mxu0 %v1897
  %v2765 = vpop.f32.mrb[0].mxu0
  %v2766 = vadd.f32 0.0, %v2765
  %v2767 = vpop.f32.mrb[0].mxu0
  %v2768 = vadd.f32 0.0, %v2767
  %v2769 = vpop.f32.mrb[0].mxu0
  %v2770 = vadd.f32 0.0, %v2769
  %v2771 = vpop.f32.mrb[0].mxu0
  %v2772 = vadd.f32 0.0, %v2771
  %2773 = vdwg.mxu0
  %v2775 = vsel %vm1141, %v1483, 0
  %v2778 = vsel %vm1141, %v1484, 0
  %v2781 = vsel %vm1141, %v1823, 0
  %v2784 = vsel %vm1141, %v1824, 0
  %2786 = vmatprep.subr.mxu0 %v2778
  %2787 = vmatpush1.msra.mxu0 %v2775
  %2788 = vmatprep.subr.mxu0 0.0
  %2789 = vmatpush1.msra.mxu0 0.0
  %2790 = vmatprep.subr.mxu0 0.0
  %2791 = vmatpush1.msra.mxu0 0.0
  %2792 = vmatprep.subr.mxu0 0.0
  %2793 = vmatpush1.msra.mxu0 0.0
  %2794 = vmatprep.subr.mxu0 0.0
  %2795 = vmatpush1.msra.mxu0 0.0
  %2796 = vmatprep.subr.mxu0 0.0
  %2797 = vmatpush1.msra.mxu0 0.0
  %2798 = vmatprep.subr.mxu0 0.0
  %2799 = vmatpush1.msra.mxu0 0.0
  %2800 = vmatprep.subr.mxu0 0.0
  %2801 = vmatpush1.msra.mxu0 0.0
  %2802 = vmatprep.subr.mxu0 0.0
  %2803 = vmatpush1.msra.mxu0 0.0
  %2804 = vmatprep.subr.mxu0 0.0
  %2805 = vmatpush1.msra.mxu0 0.0
  %2806 = vmatprep.subr.mxu0 0.0
  %2807 = vmatpush1.msra.mxu0 0.0
  %2808 = vmatprep.subr.mxu0 0.0
  %2809 = vmatpush1.msra.mxu0 0.0
  %2810 = vmatprep.subr.mxu0 0.0
  %2811 = vmatpush1.msra.mxu0 0.0
  %2812 = vmatprep.subr.mxu0 0.0
  %2813 = vmatpush1.msra.mxu0 0.0
  %2814 = vmatprep.subr.mxu0 0.0
  %2815 = vmatpush1.msra.mxu0 0.0
  %2816 = vmatprep.subr.mxu0 0.0
  %2817 = vmatpush1.msra.mxu0 0.0
  %2818 = vmatprep.subr.mxu0 0.0
  %2819 = vmatpush1.msra.mxu0 0.0
  %2820 = vmatprep.subr.mxu0 0.0
  %2821 = vmatpush1.msra.mxu0 0.0
  %2822 = vmatprep.subr.mxu0 0.0
  %2823 = vmatpush1.msra.mxu0 0.0
  %2824 = vmatprep.subr.mxu0 0.0
  %2825 = vmatpush1.msra.mxu0 0.0
  %2826 = vmatprep.subr.mxu0 0.0
  %2827 = vmatpush1.msra.mxu0 0.0
  %2828 = vmatprep.subr.mxu0 0.0
  %2829 = vmatpush1.msra.mxu0 0.0
  %2830 = vmatprep.subr.mxu0 0.0
  %2831 = vmatpush1.msra.mxu0 0.0
  %2832 = vmatprep.subr.mxu0 0.0
  %2833 = vmatpush1.msra.mxu0 0.0
  %2834 = vmatprep.subr.mxu0 0.0
  %2835 = vmatpush1.msra.mxu0 0.0
  %2836 = vmatprep.subr.mxu0 0.0
  %2837 = vmatpush1.msra.mxu0 0.0
  %2838 = vmatprep.subr.mxu0 0.0
  %2839 = vmatpush1.msra.mxu0 0.0
  %2840 = vmatprep.subr.mxu0 0.0
  %2841 = vmatpush1.msra.mxu0 0.0
  %2842 = vmatprep.subr.mxu0 0.0
  %2843 = vmatpush1.msra.mxu0 0.0
  %2844 = vmatprep.subr.mxu0 0.0
  %2845 = vmatpush1.msra.mxu0 0.0
  %2846 = vmatprep.subr.mxu0 0.0
  %2847 = vmatpush1.msra.mxu0 0.0
  %2848 = vmatprep.subr.mxu0 0.0
  %2849 = vmatpush1.msra.mxu0 0.0
  %2850 = vmatprep.mubr.f32.mxu0 0.0
  %2851 = vmatmul.mubr.f32.gmra.mrb[0].mxu0 %v2011
  %v2852 = vpop.f32.mrb[0].mxu0
  %v2853 = vadd.f32 0.0, %v2852
  %v2854 = vpop.f32.mrb[0].mxu0
  %v2855 = vadd.f32 0.0, %v2854
  %2856 = vmatprep.mubr.f32.mxu0 0.0
  %2857 = vmatmul.mubr.f32.gmra.mrb[0].mxu0 %v2014
  %v2858 = vpop.f32.mrb[0].mxu0
  %v2859 = vadd.f32 0.0, %v2858
  %v2860 = vpop.f32.mrb[0].mxu0
  %v2861 = vadd.f32 0.0, %v2860
  %2862 = vmatprep.mubr.f32.mxu0 0.0
  %2863 = vmatmul.mubr.f32.gmra.mrb[0].mxu0 %v2017
  %v2864 = vpop.f32.mrb[0].mxu0
  %v2865 = vadd.f32 0.0, %v2864
  %v2866 = vpop.f32.mrb[0].mxu0
  %v2867 = vadd.f32 0.0, %v2866
  %2868 = vmatprep.mubr.f32.mxu0 0.0
  %2869 = vmatmul.mubr.f32.gmra.mrb[0].mxu0 %v2020
  %v2870 = vpop.f32.mrb[0].mxu0
  %v2871 = vadd.f32 0.0, %v2870
  %v2872 = vpop.f32.mrb[0].mxu0
  %v2873 = vadd.f32 0.0, %v2872
  %2874 = vdwg.mxu0
  %2875 = vmatprep.subr.mxu0 %v2784
  %2876 = vmatpush1.msra.mxu0 %v2781
  %2877 = vmatprep.subr.mxu0 0.0
  %2878 = vmatpush1.msra.mxu0 0.0
  %2879 = vmatprep.subr.mxu0 0.0
  %2880 = vmatpush1.msra.mxu0 0.0
  %2881 = vmatprep.subr.mxu0 0.0
  %2882 = vmatpush1.msra.mxu0 0.0
  %2883 = vmatprep.subr.mxu0 0.0
  %2884 = vmatpush1.msra.mxu0 0.0
  %2885 = vmatprep.subr.mxu0 0.0
  %2886 = vmatpush1.msra.mxu0 0.0
  %2887 = vmatprep.subr.mxu0 0.0
  %2888 = vmatpush1.msra.mxu0 0.0
  %2889 = vmatprep.subr.mxu0 0.0
  %2890 = vmatpush1.msra.mxu0 0.0
  %2891 = vmatprep.subr.mxu0 0.0
  %2892 = vmatpush1.msra.mxu0 0.0
  %2893 = vmatprep.subr.mxu0 0.0
  %2894 = vmatpush1.msra.mxu0 0.0
  %2895 = vmatprep.subr.mxu0 0.0
  %2896 = vmatpush1.msra.mxu0 0.0
  %2897 = vmatprep.subr.mxu0 0.0
  %2898 = vmatpush1.msra.mxu0 0.0
  %2899 = vmatprep.subr.mxu0 0.0
  %2900 = vmatpush1.msra.mxu0 0.0
  %2901 = vmatprep.subr.mxu0 0.0
  %2902 = vmatpush1.msra.mxu0 0.0
  %2903 = vmatprep.subr.mxu0 0.0
  %2904 = vmatpush1.msra.mxu0 0.0
  %2905 = vmatprep.subr.mxu0 0.0
  %2906 = vmatpush1.msra.mxu0 0.0
  %2907 = vmatprep.subr.mxu0 0.0
  %2908 = vmatpush1.msra.mxu0 0.0
  %2909 = vmatprep.subr.mxu0 0.0
  %2910 = vmatpush1.msra.mxu0 0.0
  %2911 = vmatprep.subr.mxu0 0.0
  %2912 = vmatpush1.msra.mxu0 0.0
  %2913 = vmatprep.subr.mxu0 0.0
  %2914 = vmatpush1.msra.mxu0 0.0
  %2915 = vmatprep.subr.mxu0 0.0
  %2916 = vmatpush1.msra.mxu0 0.0
  %2917 = vmatprep.subr.mxu0 0.0
  %2918 = vmatpush1.msra.mxu0 0.0
  %2919 = vmatprep.subr.mxu0 0.0
  %2920 = vmatpush1.msra.mxu0 0.0
  %2921 = vmatprep.subr.mxu0 0.0
  %2922 = vmatpush1.msra.mxu0 0.0
  %2923 = vmatprep.subr.mxu0 0.0
  %2924 = vmatpush1.msra.mxu0 0.0
  %2925 = vmatprep.subr.mxu0 0.0
  %2926 = vmatpush1.msra.mxu0 0.0
  %2927 = vmatprep.subr.mxu0 0.0
  %2928 = vmatpush1.msra.mxu0 0.0
  %2929 = vmatprep.subr.mxu0 0.0
  %2930 = vmatpush1.msra.mxu0 0.0
  %2931 = vmatprep.subr.mxu0 0.0
  %2932 = vmatpush1.msra.mxu0 0.0
  %2933 = vmatprep.subr.mxu0 0.0
  %2934 = vmatpush1.msra.mxu0 0.0
  %2935 = vmatprep.subr.mxu0 0.0
  %2936 = vmatpush1.msra.mxu0 0.0
  %2937 = vmatprep.subr.mxu0 0.0
  %2938 = vmatpush1.msra.mxu0 0.0
  %2939 = vmatprep.mubr.f32.mxu0 0.0
  %2940 = vmatmul.mubr.f32.gmra.mrb[0].mxu0 %v2011
  %v2941 = vpop.f32.mrb[0].mxu0
  %v2942 = vadd.f32 0.0, %v2941
  %v2943 = vpop.f32.mrb[0].mxu0
  %v2944 = vadd.f32 0.0, %v2943
  %2945 = vmatprep.mubr.f32.mxu0 0.0
  %2946 = vmatmul.mubr.f32.gmra.mrb[0].mxu0 %v2014
  %v2947 = vpop.f32.mrb[0].mxu0
  %v2948 = vadd.f32 0.0, %v2947
  %v2949 = vpop.f32.mrb[0].mxu0
  %v2950 = vadd.f32 0.0, %v2949
  %2951 = vmatprep.mubr.f32.mxu0 0.0
  %2952 = vmatmul.mubr.f32.gmra.mrb[0].mxu0 %v2017
  %v2953 = vpop.f32.mrb[0].mxu0
  %v2954 = vadd.f32 0.0, %v2953
  %v2955 = vpop.f32.mrb[0].mxu0
  %v2956 = vadd.f32 0.0, %v2955
  %2957 = vmatprep.mubr.f32.mxu0 0.0
  %2958 = vmatmul.mubr.f32.gmra.mrb[0].mxu0 %v2020
  %v2959 = vpop.f32.mrb[0].mxu0
  %v2960 = vadd.f32 0.0, %v2959
  %v2961 = vpop.f32.mrb[0].mxu0
  %v2962 = vadd.f32 0.0, %v2961
  %2963 = vdwg.mxu0
  %v2964 = vmul.f32 %v2853, %v2703
  %v2965 = vmul.f32 %v2855, %v2705
  %v2966 = vmul.f32 %v2942, %v2756
  %v2967 = vmul.f32 %v2944, %v2758
  %v2968 = vmul.f32 %v2859, %v2707
  %v2969 = vmul.f32 %v2861, %v2709
  %v2970 = vmul.f32 %v2948, %v2760
  %v2971 = vmul.f32 %v2950, %v2762
  %v2972 = vmul.f32 %v2865, %v2713
  %v2973 = vmul.f32 %v2867, %v2715
  %v2974 = vmul.f32 %v2954, %v2766
  %v2975 = vmul.f32 %v2956, %v2768
  %v2976 = vmul.f32 %v2871, %v2717
  %v2977 = vmul.f32 %v2873, %v2719
  %v2978 = vmul.f32 %v2960, %v2770
  %v2979 = vmul.f32 %v2962, %v2772
  %v2980 = vadd.f32 %v2604, %v2964
  %v2981 = vadd.f32 %v2605, %v2965
  %v2982 = vadd.f32 %v2606, %v2966
  %v2983 = vadd.f32 %v2607, %v2967
  %v2984 = vadd.f32 %v2608, %v2968
  %v2985 = vadd.f32 %v2609, %v2969
  %v2986 = vadd.f32 %v2610, %v2970
  %v2987 = vadd.f32 %v2611, %v2971
  %v2988 = vadd.f32 %v2612, %v2972
  %v2989 = vadd.f32 %v2613, %v2973
  %v2990 = vadd.f32 %v2614, %v2974
  %v2991 = vadd.f32 %v2615, %v2975
  %v2992 = vadd.f32 %v2616, %v2976
  %v2993 = vadd.f32 %v2617, %v2977
  %v2994 = vadd.f32 %v2618, %v2978
  %v2995 = vadd.f32 %v2619, %v2979
  %v2996 = vld [vmem:[%s0 + $0xc0] sm:$0xff]
  %v2997 = vld [vmem:[%s0 + $0xc8] sm:$0xff]
  %v2998 = vld [vmem:[%s0 + $0xd0] sm:$0xff]
  %v2999 = vld [vmem:[%s0 + $0xd8] sm:$0xff]
  %v3000 = vld [vmem:[%s0 + $0xe0] sm:$0xff]
  %v3001 = vld [vmem:[%s0 + $0xe8] sm:$0xff]
  %v3002 = vld [vmem:[%s0 + $0xf0] sm:$0xff]
  %v3003 = vld [vmem:[%s0 + $0xf8] sm:$0xff]
  %v3012 = vunpack.c.l.b16 %v2996
  %v3013 = vunpack.c.h.b16 %v2996
  %v3014 = vunpack.c.l.b16 %v2997
  %v3015 = vunpack.c.h.b16 %v2997
  %v3016 = vunpack.c.l.b16 %v2998
  %v3017 = vunpack.c.h.b16 %v2998
  %v3018 = vunpack.c.l.b16 %v2999
  %v3019 = vunpack.c.h.b16 %v2999
  %v3020 = vunpack.c.l.b16 %v3000
  %v3021 = vunpack.c.h.b16 %v3000
  %v3022 = vunpack.c.l.b16 %v3001
  %v3023 = vunpack.c.h.b16 %v3001
  %v3024 = vunpack.c.l.b16 %v3002
  %v3025 = vunpack.c.h.b16 %v3002
  %v3026 = vunpack.c.l.b16 %v3003
  %v3027 = vunpack.c.h.b16 %v3003
  %v3028 = vpack.c.b16 %v3016, %v3012
  %v3029 = vpack.c.b16 %v3017, %v3013
  %v3030 = vpack.c.b16 %v3018, %v3014
  %v3031 = vpack.c.b16 %v3019, %v3015
  %v3032 = vpack.c.b16 %v3024, %v3020
  %v3033 = vpack.c.b16 %v3025, %v3021
  %v3034 = vpack.c.b16 %v3026, %v3022
  %v3035 = vpack.c.b16 %v3027, %v3023
  %3044 = vmatprep.subr.bf16.mxu0 %v3029
  %3045 = vmatpush1.bf16.msra.mxu0 %v3028
  %3046 = vmatprep.subr.bf16.mxu0 %v3033
  %3047 = vmatpush1.bf16.msra.mxu0 %v3032
  %3048 = vmatprep.subr.bf16.mxu0 0
  %3049 = vmatpush1.bf16.msra.mxu0 0
  %3050 = vmatprep.subr.bf16.mxu0 0
  %3051 = vmatpush1.bf16.msra.mxu0 0
  %3052 = vmatprep.subr.bf16.mxu0 0
  %3053 = vmatpush1.bf16.msra.mxu0 0
  %3054 = vmatprep.subr.bf16.mxu0 0
  %3055 = vmatpush1.bf16.msra.mxu0 0
  %3056 = vmatprep.subr.bf16.mxu0 0
  %3057 = vmatpush1.bf16.msra.mxu0 0
  %3058 = vmatprep.subr.bf16.mxu0 0
  %3059 = vmatpush1.bf16.msra.mxu0 0
  %3060 = vmatprep.subr.bf16.mxu0 0
  %3061 = vmatpush1.bf16.msra.mxu0 0
  %3062 = vmatprep.subr.bf16.mxu0 0
  %3063 = vmatpush1.bf16.msra.mxu0 0
  %3064 = vmatprep.subr.bf16.mxu0 0
  %3065 = vmatpush1.bf16.msra.mxu0 0
  %3066 = vmatprep.subr.bf16.mxu0 0
  %3067 = vmatpush1.bf16.msra.mxu0 0
  %3068 = vmatprep.subr.bf16.mxu0 0
  %3069 = vmatpush1.bf16.msra.mxu0 0
  %3070 = vmatprep.subr.bf16.mxu0 0
  %3071 = vmatpush1.bf16.msra.mxu0 0
  %3072 = vmatprep.subr.bf16.mxu0 0
  %3073 = vmatpush1.bf16.msra.mxu0 0
  %3074 = vmatprep.subr.bf16.mxu0 0
  %3075 = vmatpush1.bf16.msra.mxu0 0
  %3076 = vmatprep.mubr.bf16.mxu0 0
  %3077 = vmatmul.mubr.bf16.gmra.mrb[0].mxu0 %v1894
  %v3078 = vpop.f32.mrb[0].mxu0
  %v3079 = vadd.f32 0.0, %v3078
  %v3080 = vpop.f32.mrb[0].mxu0
  %v3081 = vadd.f32 0.0, %v3080
  %v3082 = vpop.f32.mrb[0].mxu0
  %v3083 = vadd.f32 0.0, %v3082
  %v3084 = vpop.f32.mrb[0].mxu0
  %v3085 = vadd.f32 0.0, %v3084
  %3086 = vmatprep.mubr.bf16.mxu0 0
  %3087 = vmatmul.mubr.bf16.gmra.mrb[0].mxu0 %v1897
  %v3088 = vpop.f32.mrb[0].mxu0
  %v3089 = vadd.f32 0.0, %v3088
  %v3090 = vpop.f32.mrb[0].mxu0
  %v3091 = vadd.f32 0.0, %v3090
  %v3092 = vpop.f32.mrb[0].mxu0
  %v3093 = vadd.f32 0.0, %v3092
  %v3094 = vpop.f32.mrb[0].mxu0
  %v3095 = vadd.f32 0.0, %v3094
  %3096 = vdwg.mxu0
  %3097 = vmatprep.subr.bf16.mxu0 %v3031
  %3098 = vmatpush1.bf16.msra.mxu0 %v3030
  %3099 = vmatprep.subr.bf16.mxu0 %v3035
  %3100 = vmatpush1.bf16.msra.mxu0 %v3034
  %3101 = vmatprep.subr.bf16.mxu0 0
  %3102 = vmatpush1.bf16.msra.mxu0 0
  %3103 = vmatprep.subr.bf16.mxu0 0
  %3104 = vmatpush1.bf16.msra.mxu0 0
  %3105 = vmatprep.subr.bf16.mxu0 0
  %3106 = vmatpush1.bf16.msra.mxu0 0
  %3107 = vmatprep.subr.bf16.mxu0 0
  %3108 = vmatpush1.bf16.msra.mxu0 0
  %3109 = vmatprep.subr.bf16.mxu0 0
  %3110 = vmatpush1.bf16.msra.mxu0 0
  %3111 = vmatprep.subr.bf16.mxu0 0
  %3112 = vmatpush1.bf16.msra.mxu0 0
  %3113 = vmatprep.subr.bf16.mxu0 0
  %3114 = vmatpush1.bf16.msra.mxu0 0
  %3115 = vmatprep.subr.bf16.mxu0 0
  %3116 = vmatpush1.bf16.msra.mxu0 0
  %3117 = vmatprep.subr.bf16.mxu0 0
  %3118 = vmatpush1.bf16.msra.mxu0 0
  %3119 = vmatprep.subr.bf16.mxu0 0
  %3120 = vmatpush1.bf16.msra.mxu0 0
  %3121 = vmatprep.subr.bf16.mxu0 0
  %3122 = vmatpush1.bf16.msra.mxu0 0
  %3123 = vmatprep.subr.bf16.mxu0 0
  %3124 = vmatpush1.bf16.msra.mxu0 0
  %3125 = vmatprep.subr.bf16.mxu0 0
  %3126 = vmatpush1.bf16.msra.mxu0 0
  %3127 = vmatprep.subr.bf16.mxu0 0
  %3128 = vmatpush1.bf16.msra.mxu0 0
  %3129 = vmatprep.mubr.bf16.mxu0 0
  %3130 = vmatmul.mubr.bf16.gmra.mrb[0].mxu0 %v1894
  %v3131 = vpop.f32.mrb[0].mxu0
  %v3132 = vadd.f32 0.0, %v3131
  %v3133 = vpop.f32.mrb[0].mxu0
  %v3134 = vadd.f32 0.0, %v3133
  %v3135 = vpop.f32.mrb[0].mxu0
  %v3136 = vadd.f32 0.0, %v3135
  %v3137 = vpop.f32.mrb[0].mxu0
  %v3138 = vadd.f32 0.0, %v3137
  %3139 = vmatprep.mubr.bf16.mxu0 0
  %3140 = vmatmul.mubr.bf16.gmra.mrb[0].mxu0 %v1897
  %v3141 = vpop.f32.mrb[0].mxu0
  %v3142 = vadd.f32 0.0, %v3141
  %v3143 = vpop.f32.mrb[0].mxu0
  %v3144 = vadd.f32 0.0, %v3143
  %v3145 = vpop.f32.mrb[0].mxu0
  %v3146 = vadd.f32 0.0, %v3145
  %v3147 = vpop.f32.mrb[0].mxu0
  %v3148 = vadd.f32 0.0, %v3147
  %3149 = vdwg.mxu0
  %v3150 = vrot.slane %v1483, 4
  %v3151 = vrot.slane %v1484, 4
  %v3152 = vrot.slane %v1823, 4
  %v3153 = vrot.slane %v1824, 4
  %v3154 = vsel %vm1141, %v3150, 0
  %v3156 = vsel %vm1141, %v3151, 0
  %v3158 = vsel %vm1141, %v3152, 0
  %v3160 = vsel %vm1141, %v3153, 0
  %3162 = vmatprep.subr.mxu0 %v3156
  %3163 = vmatpush1.msra.mxu0 %v3154
  %3164 = vmatprep.subr.mxu0 0.0
  %3165 = vmatpush1.msra.mxu0 0.0
  %3166 = vmatprep.subr.mxu0 0.0
  %3167 = vmatpush1.msra.mxu0 0.0
  %3168 = vmatprep.subr.mxu0 0.0
  %3169 = vmatpush1.msra.mxu0 0.0
  %3170 = vmatprep.subr.mxu0 0.0
  %3171 = vmatpush1.msra.mxu0 0.0
  %3172 = vmatprep.subr.mxu0 0.0
  %3173 = vmatpush1.msra.mxu0 0.0
  %3174 = vmatprep.subr.mxu0 0.0
  %3175 = vmatpush1.msra.mxu0 0.0
  %3176 = vmatprep.subr.mxu0 0.0
  %3177 = vmatpush1.msra.mxu0 0.0
  %3178 = vmatprep.subr.mxu0 0.0
  %3179 = vmatpush1.msra.mxu0 0.0
  %3180 = vmatprep.subr.mxu0 0.0
  %3181 = vmatpush1.msra.mxu0 0.0
  %3182 = vmatprep.subr.mxu0 0.0
  %3183 = vmatpush1.msra.mxu0 0.0
  %3184 = vmatprep.subr.mxu0 0.0
  %3185 = vmatpush1.msra.mxu0 0.0
  %3186 = vmatprep.subr.mxu0 0.0
  %3187 = vmatpush1.msra.mxu0 0.0
  %3188 = vmatprep.subr.mxu0 0.0
  %3189 = vmatpush1.msra.mxu0 0.0
  %3190 = vmatprep.subr.mxu0 0.0
  %3191 = vmatpush1.msra.mxu0 0.0
  %3192 = vmatprep.subr.mxu0 0.0
  %3193 = vmatpush1.msra.mxu0 0.0
  %3194 = vmatprep.subr.mxu0 0.0
  %3195 = vmatpush1.msra.mxu0 0.0
  %3196 = vmatprep.subr.mxu0 0.0
  %3197 = vmatpush1.msra.mxu0 0.0
  %3198 = vmatprep.subr.mxu0 0.0
  %3199 = vmatpush1.msra.mxu0 0.0
  %3200 = vmatprep.subr.mxu0 0.0
  %3201 = vmatpush1.msra.mxu0 0.0
  %3202 = vmatprep.subr.mxu0 0.0
  %3203 = vmatpush1.msra.mxu0 0.0
  %3204 = vmatprep.subr.mxu0 0.0
  %3205 = vmatpush1.msra.mxu0 0.0
  %3206 = vmatprep.subr.mxu0 0.0
  %3207 = vmatpush1.msra.mxu0 0.0
  %3208 = vmatprep.subr.mxu0 0.0
  %3209 = vmatpush1.msra.mxu0 0.0
  %3210 = vmatprep.subr.mxu0 0.0
  %3211 = vmatpush1.msra.mxu0 0.0
  %3212 = vmatprep.subr.mxu0 0.0
  %3213 = vmatpush1.msra.mxu0 0.0
  %3214 = vmatprep.subr.mxu0 0.0
  %3215 = vmatpush1.msra.mxu0 0.0
  %3216 = vmatprep.subr.mxu0 0.0
  %3217 = vmatpush1.msra.mxu0 0.0
  %3218 = vmatprep.subr.mxu0 0.0
  %3219 = vmatpush1.msra.mxu0 0.0
  %3220 = vmatprep.subr.mxu0 0.0
  %3221 = vmatpush1.msra.mxu0 0.0
  %3222 = vmatprep.subr.mxu0 0.0
  %3223 = vmatpush1.msra.mxu0 0.0
  %3224 = vmatprep.subr.mxu0 0.0
  %3225 = vmatpush1.msra.mxu0 0.0
  %3226 = vmatprep.mubr.f32.mxu0 0.0
  %3227 = vmatmul.mubr.f32.gmra.mrb[0].mxu0 %v2011
  %v3228 = vpop.f32.mrb[0].mxu0
  %v3229 = vadd.f32 0.0, %v3228
  %v3230 = vpop.f32.mrb[0].mxu0
  %v3231 = vadd.f32 0.0, %v3230
  %3232 = vmatprep.mubr.f32.mxu0 0.0
  %3233 = vmatmul.mubr.f32.gmra.mrb[0].mxu0 %v2014
  %v3234 = vpop.f32.mrb[0].mxu0
  %v3235 = vadd.f32 0.0, %v3234
  %v3236 = vpop.f32.mrb[0].mxu0
  %v3237 = vadd.f32 0.0, %v3236
  %3238 = vmatprep.mubr.f32.mxu0 0.0
  %3239 = vmatmul.mubr.f32.gmra.mrb[0].mxu0 %v2017
  %v3240 = vpop.f32.mrb[0].mxu0
  %v3241 = vadd.f32 0.0, %v3240
  %v3242 = vpop.f32.mrb[0].mxu0
  %v3243 = vadd.f32 0.0, %v3242
  %3244 = vmatprep.mubr.f32.mxu0 0.0
  %3245 = vmatmul.mubr.f32.gmra.mrb[0].mxu0 %v2020
  %v3246 = vpop.f32.mrb[0].mxu0
  %v3247 = vadd.f32 0.0, %v3246
  %v3248 = vpop.f32.mrb[0].mxu0
  %v3249 = vadd.f32 0.0, %v3248
  %3250 = vdwg.mxu0
  %3251 = vmatprep.subr.mxu0 %v3160
  %3252 = vmatpush1.msra.mxu0 %v3158
  %3253 = vmatprep.subr.mxu0 0.0
  %3254 = vmatpush1.msra.mxu0 0.0
  %3255 = vmatprep.subr.mxu0 0.0
  %3256 = vmatpush1.msra.mxu0 0.0
  %3257 = vmatprep.subr.mxu0 0.0
  %3258 = vmatpush1.msra.mxu0 0.0
  %3259 = vmatprep.subr.mxu0 0.0
  %3260 = vmatpush1.msra.mxu0 0.0
  %3261 = vmatprep.subr.mxu0 0.0
  %3262 = vmatpush1.msra.mxu0 0.0
  %3263 = vmatprep.subr.mxu0 0.0
  %3264 = vmatpush1.msra.mxu0 0.0
  %3265 = vmatprep.subr.mxu0 0.0
  %3266 = vmatpush1.msra.mxu0 0.0
  %3267 = vmatprep.subr.mxu0 0.0
  %3268 = vmatpush1.msra.mxu0 0.0
  %3269 = vmatprep.subr.mxu0 0.0
  %3270 = vmatpush1.msra.mxu0 0.0
  %3271 = vmatprep.subr.mxu0 0.0
  %3272 = vmatpush1.msra.mxu0 0.0
  %3273 = vmatprep.subr.mxu0 0.0
  %3274 = vmatpush1.msra.mxu0 0.0
  %3275 = vmatprep.subr.mxu0 0.0
  %3276 = vmatpush1.msra.mxu0 0.0
  %3277 = vmatprep.subr.mxu0 0.0
  %3278 = vmatpush1.msra.mxu0 0.0
  %3279 = vmatprep.subr.mxu0 0.0
  %3280 = vmatpush1.msra.mxu0 0.0
  %3281 = vmatprep.subr.mxu0 0.0
  %3282 = vmatpush1.msra.mxu0 0.0
  %3283 = vmatprep.subr.mxu0 0.0
  %3284 = vmatpush1.msra.mxu0 0.0
  %3285 = vmatprep.subr.mxu0 0.0
  %3286 = vmatpush1.msra.mxu0 0.0
  %3287 = vmatprep.subr.mxu0 0.0
  %3288 = vmatpush1.msra.mxu0 0.0
  %3289 = vmatprep.subr.mxu0 0.0
  %3290 = vmatpush1.msra.mxu0 0.0
  %3291 = vmatprep.subr.mxu0 0.0
  %3292 = vmatpush1.msra.mxu0 0.0
  %3293 = vmatprep.subr.mxu0 0.0
  %3294 = vmatpush1.msra.mxu0 0.0
  %3295 = vmatprep.subr.mxu0 0.0
  %3296 = vmatpush1.msra.mxu0 0.0
  %3297 = vmatprep.subr.mxu0 0.0
  %3298 = vmatpush1.msra.mxu0 0.0
  %3299 = vmatprep.subr.mxu0 0.0
  %3300 = vmatpush1.msra.mxu0 0.0
  %3301 = vmatprep.subr.mxu0 0.0
  %3302 = vmatpush1.msra.mxu0 0.0
  %3303 = vmatprep.subr.mxu0 0.0
  %3304 = vmatpush1.msra.mxu0 0.0
  %3305 = vmatprep.subr.mxu0 0.0
  %3306 = vmatpush1.msra.mxu0 0.0
  %3307 = vmatprep.subr.mxu0 0.0
  %3308 = vmatpush1.msra.mxu0 0.0
  %3309 = vmatprep.subr.mxu0 0.0
  %3310 = vmatpush1.msra.mxu0 0.0
  %3311 = vmatprep.subr.mxu0 0.0
  %3312 = vmatpush1.msra.mxu0 0.0
  %3313 = vmatprep.subr.mxu0 0.0
  %3314 = vmatpush1.msra.mxu0 0.0
  %3315 = vmatprep.mubr.f32.mxu0 0.0
  %3316 = vmatmul.mubr.f32.gmra.mrb[0].mxu0 %v2011
  %v3317 = vpop.f32.mrb[0].mxu0
  %v3318 = vadd.f32 0.0, %v3317
  %v3319 = vpop.f32.mrb[0].mxu0
  %v3320 = vadd.f32 0.0, %v3319
  %3321 = vmatprep.mubr.f32.mxu0 0.0
  %3322 = vmatmul.mubr.f32.gmra.mrb[0].mxu0 %v2014
  %v3323 = vpop.f32.mrb[0].mxu0
  %v3324 = vadd.f32 0.0, %v3323
  %v3325 = vpop.f32.mrb[0].mxu0
  %v3326 = vadd.f32 0.0, %v3325
  %3327 = vmatprep.mubr.f32.mxu0 0.0
  %3328 = vmatmul.mubr.f32.gmra.mrb[0].mxu0 %v2017
  %v3329 = vpop.f32.mrb[0].mxu0
  %v3330 = vadd.f32 0.0, %v3329
  %v3331 = vpop.f32.mrb[0].mxu0
  %v3332 = vadd.f32 0.0, %v3331
  %3333 = vmatprep.mubr.f32.mxu0 0.0
  %3334 = vmatmul.mubr.f32.gmra.mrb[0].mxu0 %v2020
  %v3335 = vpop.f32.mrb[0].mxu0
  %v3336 = vadd.f32 0.0, %v3335
  %v3337 = vpop.f32.mrb[0].mxu0
  %v3338 = vadd.f32 0.0, %v3337
  %3339 = vdwg.mxu0
  %v3340 = vmul.f32 %v3229, %v3079
  %v3341 = vmul.f32 %v3231, %v3081
  %v3342 = vmul.f32 %v3318, %v3132
  %v3343 = vmul.f32 %v3320, %v3134
  %v3344 = vmul.f32 %v3235, %v3083
  %v3345 = vmul.f32 %v3237, %v3085
  %v3346 = vmul.f32 %v3324, %v3136
  %v3347 = vmul.f32 %v3326, %v3138
  %v3348 = vmul.f32 %v3241, %v3089
  %v3349 = vmul.f32 %v3243, %v3091
  %v3350 = vmul.f32 %v3330, %v3142
  %v3351 = vmul.f32 %v3332, %v3144
  %v3352 = vmul.f32 %v3247, %v3093
  %v3353 = vmul.f32 %v3249, %v3095
  %v3354 = vmul.f32 %v3336, %v3146
  %v3355 = vmul.f32 %v3338, %v3148
  %v3356 = vadd.f32 %v2980, %v3340
  %v3357 = vadd.f32 %v2981, %v3341
  %v3358 = vadd.f32 %v2982, %v3342
  %v3359 = vadd.f32 %v2983, %v3343
  %v3360 = vadd.f32 %v2984, %v3344
  %v3361 = vadd.f32 %v2985, %v3345
  %v3362 = vadd.f32 %v2986, %v3346
  %v3363 = vadd.f32 %v2987, %v3347
  %v3364 = vadd.f32 %v2988, %v3348
  %v3365 = vadd.f32 %v2989, %v3349
  %v3366 = vadd.f32 %v2990, %v3350
  %v3367 = vadd.f32 %v2991, %v3351
  %v3368 = vadd.f32 %v2992, %v3352
  %v3369 = vadd.f32 %v2993, %v3353
  %v3370 = vadd.f32 %v2994, %v3354
  %v3371 = vadd.f32 %v2995, %v3355
  %v3372 = vld [vmem:[%s0 + $0x100] sm:$0xff]
  %v3373 = vld [vmem:[%s0 + $0x108] sm:$0xff]
  %v3374 = vld [vmem:[%s0 + $0x110] sm:$0xff]
  %v3375 = vld [vmem:[%s0 + $0x118] sm:$0xff]
  %v3376 = vld [vmem:[%s0 + $0x120] sm:$0xff]
  %v3377 = vld [vmem:[%s0 + $0x128] sm:$0xff]
  %v3378 = vld [vmem:[%s0 + $0x130] sm:$0xff]
  %v3379 = vld [vmem:[%s0 + $0x138] sm:$0xff]
  %v3388 = vunpack.c.l.b16 %v3372
  %v3389 = vunpack.c.h.b16 %v3372
  %v3390 = vunpack.c.l.b16 %v3373
  %v3391 = vunpack.c.h.b16 %v3373
  %v3392 = vunpack.c.l.b16 %v3374
  %v3393 = vunpack.c.h.b16 %v3374
  %v3394 = vunpack.c.l.b16 %v3375
  %v3395 = vunpack.c.h.b16 %v3375
  %v3396 = vunpack.c.l.b16 %v3376
  %v3397 = vunpack.c.h.b16 %v3376
  %v3398 = vunpack.c.l.b16 %v3377
  %v3399 = vunpack.c.h.b16 %v3377
  %v3400 = vunpack.c.l.b16 %v3378
  %v3401 = vunpack.c.h.b16 %v3378
  %v3402 = vunpack.c.l.b16 %v3379
  %v3403 = vunpack.c.h.b16 %v3379
  %v3404 = vpack.c.b16 %v3392, %v3388
  %v3405 = vpack.c.b16 %v3393, %v3389
  %v3406 = vpack.c.b16 %v3394, %v3390
  %v3407 = vpack.c.b16 %v3395, %v3391
  %v3408 = vpack.c.b16 %v3400, %v3396
  %v3409 = vpack.c.b16 %v3401, %v3397
  %v3410 = vpack.c.b16 %v3402, %v3398
  %v3411 = vpack.c.b16 %v3403, %v3399
  %3420 = vmatprep.subr.bf16.mxu0 %v3405
  %3421 = vmatpush1.bf16.msra.mxu0 %v3404
  %3422 = vmatprep.subr.bf16.mxu0 %v3409
  %3423 = vmatpush1.bf16.msra.mxu0 %v3408
  %3424 = vmatprep.subr.bf16.mxu0 0
  %3425 = vmatpush1.bf16.msra.mxu0 0
  %3426 = vmatprep.subr.bf16.mxu0 0
  %3427 = vmatpush1.bf16.msra.mxu0 0
  %3428 = vmatprep.subr.bf16.mxu0 0
  %3429 = vmatpush1.bf16.msra.mxu0 0
  %3430 = vmatprep.subr.bf16.mxu0 0
  %3431 = vmatpush1.bf16.msra.mxu0 0
  %3432 = vmatprep.subr.bf16.mxu0 0
  %3433 = vmatpush1.bf16.msra.mxu0 0
  %3434 = vmatprep.subr.bf16.mxu0 0
  %3435 = vmatpush1.bf16.msra.mxu0 0
  %3436 = vmatprep.subr.bf16.mxu0 0
  %3437 = vmatpush1.bf16.msra.mxu0 0
  %3438 = vmatprep.subr.bf16.mxu0 0
  %3439 = vmatpush1.bf16.msra.mxu0 0
  %3440 = vmatprep.subr.bf16.mxu0 0
  %3441 = vmatpush1.bf16.msra.mxu0 0
  %3442 = vmatprep.subr.bf16.mxu0 0
  %3443 = vmatpush1.bf16.msra.mxu0 0
  %3444 = vmatprep.subr.bf16.mxu0 0
  %3445 = vmatpush1.bf16.msra.mxu0 0
  %3446 = vmatprep.subr.bf16.mxu0 0
  %3447 = vmatpush1.bf16.msra.mxu0 0
  %3448 = vmatprep.subr.bf16.mxu0 0
  %3449 = vmatpush1.bf16.msra.mxu0 0
  %3450 = vmatprep.subr.bf16.mxu0 0
  %3451 = vmatpush1.bf16.msra.mxu0 0
  %3452 = vmatprep.mubr.bf16.mxu0 0
  %3453 = vmatmul.mubr.bf16.gmra.mrb[0].mxu0 %v1894
  %v3454 = vpop.f32.mrb[0].mxu0
  %v3455 = vadd.f32 0.0, %v3454
  %v3456 = vpop.f32.mrb[0].mxu0
  %v3457 = vadd.f32 0.0, %v3456
  %v3458 = vpop.f32.mrb[0].mxu0
  %v3459 = vadd.f32 0.0, %v3458
  %v3460 = vpop.f32.mrb[0].mxu0
  %v3461 = vadd.f32 0.0, %v3460
  %3462 = vmatprep.mubr.bf16.mxu0 0
  %3463 = vmatmul.mubr.bf16.gmra.mrb[0].mxu0 %v1897
  %v3464 = vpop.f32.mrb[0].mxu0
  %v3465 = vadd.f32 0.0, %v3464
  %v3466 = vpop.f32.mrb[0].mxu0
  %v3467 = vadd.f32 0.0, %v3466
  %v3468 = vpop.f32.mrb[0].mxu0
  %v3469 = vadd.f32 0.0, %v3468
  %v3470 = vpop.f32.mrb[0].mxu0
  %v3471 = vadd.f32 0.0, %v3470
  %3472 = vdwg.mxu0
  %3473 = vmatprep.subr.bf16.mxu0 %v3407
  %3474 = vmatpush1.bf16.msra.mxu0 %v3406
  %3475 = vmatprep.subr.bf16.mxu0 %v3411
  %3476 = vmatpush1.bf16.msra.mxu0 %v3410
  %3477 = vmatprep.subr.bf16.mxu0 0
  %3478 = vmatpush1.bf16.msra.mxu0 0
  %3479 = vmatprep.subr.bf16.mxu0 0
  %3480 = vmatpush1.bf16.msra.mxu0 0
  %3481 = vmatprep.subr.bf16.mxu0 0
  %3482 = vmatpush1.bf16.msra.mxu0 0
  %3483 = vmatprep.subr.bf16.mxu0 0
  %3484 = vmatpush1.bf16.msra.mxu0 0
  %3485 = vmatprep.subr.bf16.mxu0 0
  %3486 = vmatpush1.bf16.msra.mxu0 0
  %3487 = vmatprep.subr.bf16.mxu0 0
  %3488 = vmatpush1.bf16.msra.mxu0 0
  %3489 = vmatprep.subr.bf16.mxu0 0
  %3490 = vmatpush1.bf16.msra.mxu0 0
  %3491 = vmatprep.subr.bf16.mxu0 0
  %3492 = vmatpush1.bf16.msra.mxu0 0
  %3493 = vmatprep.subr.bf16.mxu0 0
  %3494 = vmatpush1.bf16.msra.mxu0 0
  %3495 = vmatprep.subr.bf16.mxu0 0
  %3496 = vmatpush1.bf16.msra.mxu0 0
  %3497 = vmatprep.subr.bf16.mxu0 0
  %3498 = vmatpush1.bf16.msra.mxu0 0
  %3499 = vmatprep.subr.bf16.mxu0 0
  %3500 = vmatpush1.bf16.msra.mxu0 0
  %3501 = vmatprep.subr.bf16.mxu0 0
  %3502 = vmatpush1.bf16.msra.mxu0 0
  %3503 = vmatprep.subr.bf16.mxu0 0
  %3504 = vmatpush1.bf16.msra.mxu0 0
  %3505 = vmatprep.mubr.bf16.mxu0 0
  %3506 = vmatmul.mubr.bf16.gmra.mrb[0].mxu0 %v1894
  %v3507 = vpop.f32.mrb[0].mxu0
  %v3508 = vadd.f32 0.0, %v3507
  %v3509 = vpop.f32.mrb[0].mxu0
  %v3510 = vadd.f32 0.0, %v3509
  %v3511 = vpop.f32.mrb[0].mxu0
  %v3512 = vadd.f32 0.0, %v3511
  %v3513 = vpop.f32.mrb[0].mxu0
  %v3514 = vadd.f32 0.0, %v3513
  %3515 = vmatprep.mubr.bf16.mxu0 0
  %3516 = vmatmul.mubr.bf16.gmra.mrb[0].mxu0 %v1897
  %v3517 = vpop.f32.mrb[0].mxu0
  %v3518 = vadd.f32 0.0, %v3517
  %v3519 = vpop.f32.mrb[0].mxu0
  %v3520 = vadd.f32 0.0, %v3519
  %v3521 = vpop.f32.mrb[0].mxu0
  %v3522 = vadd.f32 0.0, %v3521
  %v3523 = vpop.f32.mrb[0].mxu0
  %v3524 = vadd.f32 0.0, %v3523
  %3525 = vdwg.mxu0
  %v3527 = vsel %vm1141, %v1485, 0
  %v3530 = vsel %vm1141, %v1486, 0
  %v3533 = vsel %vm1141, %v1825, 0
  %v3536 = vsel %vm1141, %v1826, 0
  %3538 = vmatprep.subr.mxu0 %v3530
  %3539 = vmatpush1.msra.mxu0 %v3527
  %3540 = vmatprep.subr.mxu0 0.0
  %3541 = vmatpush1.msra.mxu0 0.0
  %3542 = vmatprep.subr.mxu0 0.0
  %3543 = vmatpush1.msra.mxu0 0.0
  %3544 = vmatprep.subr.mxu0 0.0
  %3545 = vmatpush1.msra.mxu0 0.0
  %3546 = vmatprep.subr.mxu0 0.0
  %3547 = vmatpush1.msra.mxu0 0.0
  %3548 = vmatprep.subr.mxu0 0.0
  %3549 = vmatpush1.msra.mxu0 0.0
  %3550 = vmatprep.subr.mxu0 0.0
  %3551 = vmatpush1.msra.mxu0 0.0
  %3552 = vmatprep.subr.mxu0 0.0
  %3553 = vmatpush1.msra.mxu0 0.0
  %3554 = vmatprep.subr.mxu0 0.0
  %3555 = vmatpush1.msra.mxu0 0.0
  %3556 = vmatprep.subr.mxu0 0.0
  %3557 = vmatpush1.msra.mxu0 0.0
  %3558 = vmatprep.subr.mxu0 0.0
  %3559 = vmatpush1.msra.mxu0 0.0
  %3560 = vmatprep.subr.mxu0 0.0
  %3561 = vmatpush1.msra.mxu0 0.0
  %3562 = vmatprep.subr.mxu0 0.0
  %3563 = vmatpush1.msra.mxu0 0.0
  %3564 = vmatprep.subr.mxu0 0.0
  %3565 = vmatpush1.msra.mxu0 0.0
  %3566 = vmatprep.subr.mxu0 0.0
  %3567 = vmatpush1.msra.mxu0 0.0
  %3568 = vmatprep.subr.mxu0 0.0
  %3569 = vmatpush1.msra.mxu0 0.0
  %3570 = vmatprep.subr.mxu0 0.0
  %3571 = vmatpush1.msra.mxu0 0.0
  %3572 = vmatprep.subr.mxu0 0.0
  %3573 = vmatpush1.msra.mxu0 0.0
  %3574 = vmatprep.subr.mxu0 0.0
  %3575 = vmatpush1.msra.mxu0 0.0
  %3576 = vmatprep.subr.mxu0 0.0
  %3577 = vmatpush1.msra.mxu0 0.0
  %3578 = vmatprep.subr.mxu0 0.0
  %3579 = vmatpush1.msra.mxu0 0.0
  %3580 = vmatprep.subr.mxu0 0.0
  %3581 = vmatpush1.msra.mxu0 0.0
  %3582 = vmatprep.subr.mxu0 0.0
  %3583 = vmatpush1.msra.mxu0 0.0
  %3584 = vmatprep.subr.mxu0 0.0
  %3585 = vmatpush1.msra.mxu0 0.0
  %3586 = vmatprep.subr.mxu0 0.0
  %3587 = vmatpush1.msra.mxu0 0.0
  %3588 = vmatprep.subr.mxu0 0.0
  %3589 = vmatpush1.msra.mxu0 0.0
  %3590 = vmatprep.subr.mxu0 0.0
  %3591 = vmatpush1.msra.mxu0 0.0
  %3592 = vmatprep.subr.mxu0 0.0
  %3593 = vmatpush1.msra.mxu0 0.0
  %3594 = vmatprep.subr.mxu0 0.0
  %3595 = vmatpush1.msra.mxu0 0.0
  %3596 = vmatprep.subr.mxu0 0.0
  %3597 = vmatpush1.msra.mxu0 0.0
  %3598 = vmatprep.subr.mxu0 0.0
  %3599 = vmatpush1.msra.mxu0 0.0
  %3600 = vmatprep.subr.mxu0 0.0
  %3601 = vmatpush1.msra.mxu0 0.0
  %3602 = vmatprep.mubr.f32.mxu0 0.0
  %3603 = vmatmul.mubr.f32.gmra.mrb[0].mxu0 %v2011
  %v3604 = vpop.f32.mrb[0].mxu0
  %v3605 = vadd.f32 0.0, %v3604
  %v3606 = vpop.f32.mrb[0].mxu0
  %v3607 = vadd.f32 0.0, %v3606
  %3608 = vmatprep.mubr.f32.mxu0 0.0
  %3609 = vmatmul.mubr.f32.gmra.mrb[0].mxu0 %v2014
  %v3610 = vpop.f32.mrb[0].mxu0
  %v3611 = vadd.f32 0.0, %v3610
  %v3612 = vpop.f32.mrb[0].mxu0
  %v3613 = vadd.f32 0.0, %v3612
  %3614 = vmatprep.mubr.f32.mxu0 0.0
  %3615 = vmatmul.mubr.f32.gmra.mrb[0].mxu0 %v2017
  %v3616 = vpop.f32.mrb[0].mxu0
  %v3617 = vadd.f32 0.0, %v3616
  %v3618 = vpop.f32.mrb[0].mxu0
  %v3619 = vadd.f32 0.0, %v3618
  %3620 = vmatprep.mubr.f32.mxu0 0.0
  %3621 = vmatmul.mubr.f32.gmra.mrb[0].mxu0 %v2020
  %v3622 = vpop.f32.mrb[0].mxu0
  %v3623 = vadd.f32 0.0, %v3622
  %v3624 = vpop.f32.mrb[0].mxu0
  %v3625 = vadd.f32 0.0, %v3624
  %3626 = vdwg.mxu0
  %3627 = vmatprep.subr.mxu0 %v3536
  %3628 = vmatpush1.msra.mxu0 %v3533
  %3629 = vmatprep.subr.mxu0 0.0
  %3630 = vmatpush1.msra.mxu0 0.0
  %3631 = vmatprep.subr.mxu0 0.0
  %3632 = vmatpush1.msra.mxu0 0.0
  %3633 = vmatprep.subr.mxu0 0.0
  %3634 = vmatpush1.msra.mxu0 0.0
  %3635 = vmatprep.subr.mxu0 0.0
  %3636 = vmatpush1.msra.mxu0 0.0
  %3637 = vmatprep.subr.mxu0 0.0
  %3638 = vmatpush1.msra.mxu0 0.0
  %3639 = vmatprep.subr.mxu0 0.0
  %3640 = vmatpush1.msra.mxu0 0.0
  %3641 = vmatprep.subr.mxu0 0.0
  %3642 = vmatpush1.msra.mxu0 0.0
  %3643 = vmatprep.subr.mxu0 0.0
  %3644 = vmatpush1.msra.mxu0 0.0
  %3645 = vmatprep.subr.mxu0 0.0
  %3646 = vmatpush1.msra.mxu0 0.0
  %3647 = vmatprep.subr.mxu0 0.0
  %3648 = vmatpush1.msra.mxu0 0.0
  %3649 = vmatprep.subr.mxu0 0.0
  %3650 = vmatpush1.msra.mxu0 0.0
  %3651 = vmatprep.subr.mxu0 0.0
  %3652 = vmatpush1.msra.mxu0 0.0
  %3653 = vmatprep.subr.mxu0 0.0
  %3654 = vmatpush1.msra.mxu0 0.0
  %3655 = vmatprep.subr.mxu0 0.0
  %3656 = vmatpush1.msra.mxu0 0.0
  %3657 = vmatprep.subr.mxu0 0.0
  %3658 = vmatpush1.msra.mxu0 0.0
  %3659 = vmatprep.subr.mxu0 0.0
  %3660 = vmatpush1.msra.mxu0 0.0
  %3661 = vmatprep.subr.mxu0 0.0
  %3662 = vmatpush1.msra.mxu0 0.0
  %3663 = vmatprep.subr.mxu0 0.0
  %3664 = vmatpush1.msra.mxu0 0.0
  %3665 = vmatprep.subr.mxu0 0.0
  %3666 = vmatpush1.msra.mxu0 0.0
  %3667 = vmatprep.subr.mxu0 0.0
  %3668 = vmatpush1.msra.mxu0 0.0
  %3669 = vmatprep.subr.mxu0 0.0
  %3670 = vmatpush1.msra.mxu0 0.0
  %3671 = vmatprep.subr.mxu0 0.0
  %3672 = vmatpush1.msra.mxu0 0.0
  %3673 = vmatprep.subr.mxu0 0.0
  %3674 = vmatpush1.msra.mxu0 0.0
  %3675 = vmatprep.subr.mxu0 0.0
  %3676 = vmatpush1.msra.mxu0 0.0
  %3677 = vmatprep.subr.mxu0 0.0
  %3678 = vmatpush1.msra.mxu0 0.0
  %3679 = vmatprep.subr.mxu0 0.0
  %3680 = vmatpush1.msra.mxu0 0.0
  %3681 = vmatprep.subr.mxu0 0.0
  %3682 = vmatpush1.msra.mxu0 0.0
  %3683 = vmatprep.subr.mxu0 0.0
  %3684 = vmatpush1.msra.mxu0 0.0
  %3685 = vmatprep.subr.mxu0 0.0
  %3686 = vmatpush1.msra.mxu0 0.0
  %3687 = vmatprep.subr.mxu0 0.0
  %3688 = vmatpush1.msra.mxu0 0.0
  %3689 = vmatprep.subr.mxu0 0.0
  %3690 = vmatpush1.msra.mxu0 0.0
  %3691 = vmatprep.mubr.f32.mxu0 0.0
  %3692 = vmatmul.mubr.f32.gmra.mrb[0].mxu0 %v2011
  %v3693 = vpop.f32.mrb[0].mxu0
  %v3694 = vadd.f32 0.0, %v3693
  %v3695 = vpop.f32.mrb[0].mxu0
  %v3696 = vadd.f32 0.0, %v3695
  %3697 = vmatprep.mubr.f32.mxu0 0.0
  %3698 = vmatmul.mubr.f32.gmra.mrb[0].mxu0 %v2014
  %v3699 = vpop.f32.mrb[0].mxu0
  %v3700 = vadd.f32 0.0, %v3699
  %v3701 = vpop.f32.mrb[0].mxu0
  %v3702 = vadd.f32 0.0, %v3701
  %3703 = vmatprep.mubr.f32.mxu0 0.0
  %3704 = vmatmul.mubr.f32.gmra.mrb[0].mxu0 %v2017
  %v3705 = vpop.f32.mrb[0].mxu0
  %v3706 = vadd.f32 0.0, %v3705
  %v3707 = vpop.f32.mrb[0].mxu0
  %v3708 = vadd.f32 0.0, %v3707
  %3709 = vmatprep.mubr.f32.mxu0 0.0
  %3710 = vmatmul.mubr.f32.gmra.mrb[0].mxu0 %v2020
  %v3711 = vpop.f32.mrb[0].mxu0
  %v3712 = vadd.f32 0.0, %v3711
  %v3713 = vpop.f32.mrb[0].mxu0
  %v3714 = vadd.f32 0.0, %v3713
  %3715 = vdwg.mxu0
  %v3716 = vmul.f32 %v3605, %v3455
  %v3717 = vmul.f32 %v3607, %v3457
  %v3718 = vmul.f32 %v3694, %v3508
  %v3719 = vmul.f32 %v3696, %v3510
  %v3720 = vmul.f32 %v3611, %v3459
  %v3721 = vmul.f32 %v3613, %v3461
  %v3722 = vmul.f32 %v3700, %v3512
  %v3723 = vmul.f32 %v3702, %v3514
  %v3724 = vmul.f32 %v3617, %v3465
  %v3725 = vmul.f32 %v3619, %v3467
  %v3726 = vmul.f32 %v3706, %v3518
  %v3727 = vmul.f32 %v3708, %v3520
  %v3728 = vmul.f32 %v3623, %v3469
  %v3729 = vmul.f32 %v3625, %v3471
  %v3730 = vmul.f32 %v3712, %v3522
  %v3731 = vmul.f32 %v3714, %v3524
  %v3732 = vadd.f32 %v3356, %v3716
  %v3733 = vadd.f32 %v3357, %v3717
  %v3734 = vadd.f32 %v3358, %v3718
  %v3735 = vadd.f32 %v3359, %v3719
  %v3736 = vadd.f32 %v3360, %v3720
  %v3737 = vadd.f32 %v3361, %v3721
  %v3738 = vadd.f32 %v3362, %v3722
  %v3739 = vadd.f32 %v3363, %v3723
  %v3740 = vadd.f32 %v3364, %v3724
  %v3741 = vadd.f32 %v3365, %v3725
  %v3742 = vadd.f32 %v3366, %v3726
  %v3743 = vadd.f32 %v3367, %v3727
  %v3744 = vadd.f32 %v3368, %v3728
  %v3745 = vadd.f32 %v3369, %v3729
  %v3746 = vadd.f32 %v3370, %v3730
  %v3747 = vadd.f32 %v3371, %v3731
  %v3748 = vld [vmem:[%s0 + $0x140] sm:$0xff]
  %v3749 = vld [vmem:[%s0 + $0x148] sm:$0xff]
  %v3750 = vld [vmem:[%s0 + $0x150] sm:$0xff]
  %v3751 = vld [vmem:[%s0 + $0x158] sm:$0xff]
  %v3752 = vld [vmem:[%s0 + $0x160] sm:$0xff]
  %v3753 = vld [vmem:[%s0 + $0x168] sm:$0xff]
  %v3754 = vld [vmem:[%s0 + $0x170] sm:$0xff]
  %v3755 = vld [vmem:[%s0 + $0x178] sm:$0xff]
  %v3764 = vunpack.c.l.b16 %v3748
  %v3765 = vunpack.c.h.b16 %v3748
  %v3766 = vunpack.c.l.b16 %v3749
  %v3767 = vunpack.c.h.b16 %v3749
  %v3768 = vunpack.c.l.b16 %v3750
  %v3769 = vunpack.c.h.b16 %v3750
  %v3770 = vunpack.c.l.b16 %v3751
  %v3771 = vunpack.c.h.b16 %v3751
  %v3772 = vunpack.c.l.b16 %v3752
  %v3773 = vunpack.c.h.b16 %v3752
  %v3774 = vunpack.c.l.b16 %v3753
  %v3775 = vunpack.c.h.b16 %v3753
  %v3776 = vunpack.c.l.b16 %v3754
  %v3777 = vunpack.c.h.b16 %v3754
  %v3778 = vunpack.c.l.b16 %v3755
  %v3779 = vunpack.c.h.b16 %v3755
  %v3780 = vpack.c.b16 %v3768, %v3764
  %v3781 = vpack.c.b16 %v3769, %v3765
  %v3782 = vpack.c.b16 %v3770, %v3766
  %v3783 = vpack.c.b16 %v3771, %v3767
  %v3784 = vpack.c.b16 %v3776, %v3772
  %v3785 = vpack.c.b16 %v3777, %v3773
  %v3786 = vpack.c.b16 %v3778, %v3774
  %v3787 = vpack.c.b16 %v3779, %v3775
  %3796 = vmatprep.subr.bf16.mxu0 %v3781
  %3797 = vmatpush1.bf16.msra.mxu0 %v3780
  %3798 = vmatprep.subr.bf16.mxu0 %v3785
  %3799 = vmatpush1.bf16.msra.mxu0 %v3784
  %3800 = vmatprep.subr.bf16.mxu0 0
  %3801 = vmatpush1.bf16.msra.mxu0 0
  %3802 = vmatprep.subr.bf16.mxu0 0
  %3803 = vmatpush1.bf16.msra.mxu0 0
  %3804 = vmatprep.subr.bf16.mxu0 0
  %3805 = vmatpush1.bf16.msra.mxu0 0
  %3806 = vmatprep.subr.bf16.mxu0 0
  %3807 = vmatpush1.bf16.msra.mxu0 0
  %3808 = vmatprep.subr.bf16.mxu0 0
  %3809 = vmatpush1.bf16.msra.mxu0 0
  %3810 = vmatprep.subr.bf16.mxu0 0
  %3811 = vmatpush1.bf16.msra.mxu0 0
  %3812 = vmatprep.subr.bf16.mxu0 0
  %3813 = vmatpush1.bf16.msra.mxu0 0
  %3814 = vmatprep.subr.bf16.mxu0 0
  %3815 = vmatpush1.bf16.msra.mxu0 0
  %3816 = vmatprep.subr.bf16.mxu0 0
  %3817 = vmatpush1.bf16.msra.mxu0 0
  %3818 = vmatprep.subr.bf16.mxu0 0
  %3819 = vmatpush1.bf16.msra.mxu0 0
  %3820 = vmatprep.subr.bf16.mxu0 0
  %3821 = vmatpush1.bf16.msra.mxu0 0
  %3822 = vmatprep.subr.bf16.mxu0 0
  %3823 = vmatpush1.bf16.msra.mxu0 0
  %3824 = vmatprep.subr.bf16.mxu0 0
  %3825 = vmatpush1.bf16.msra.mxu0 0
  %3826 = vmatprep.subr.bf16.mxu0 0
  %3827 = vmatpush1.bf16.msra.mxu0 0
  %3828 = vmatprep.mubr.bf16.mxu0 0
  %3829 = vmatmul.mubr.bf16.gmra.mrb[0].mxu0 %v1894
  %v3830 = vpop.f32.mrb[0].mxu0
  %v3831 = vadd.f32 0.0, %v3830
  %v3832 = vpop.f32.mrb[0].mxu0
  %v3833 = vadd.f32 0.0, %v3832
  %v3834 = vpop.f32.mrb[0].mxu0
  %v3835 = vadd.f32 0.0, %v3834
  %v3836 = vpop.f32.mrb[0].mxu0
  %v3837 = vadd.f32 0.0, %v3836
  %3838 = vmatprep.mubr.bf16.mxu0 0
  %3839 = vmatmul.mubr.bf16.gmra.mrb[0].mxu0 %v1897
  %v3840 = vpop.f32.mrb[0].mxu0
  %v3841 = vadd.f32 0.0, %v3840
  %v3842 = vpop.f32.mrb[0].mxu0
  %v3843 = vadd.f32 0.0, %v3842
  %v3844 = vpop.f32.mrb[0].mxu0
  %v3845 = vadd.f32 0.0, %v3844
  %v3846 = vpop.f32.mrb[0].mxu0
  %v3847 = vadd.f32 0.0, %v3846
  %3848 = vdwg.mxu0
  %3849 = vmatprep.subr.bf16.mxu0 %v3783
  %3850 = vmatpush1.bf16.msra.mxu0 %v3782
  %3851 = vmatprep.subr.bf16.mxu0 %v3787
  %3852 = vmatpush1.bf16.msra.mxu0 %v3786
  %3853 = vmatprep.subr.bf16.mxu0 0
  %3854 = vmatpush1.bf16.msra.mxu0 0
  %3855 = vmatprep.subr.bf16.mxu0 0
  %3856 = vmatpush1.bf16.msra.mxu0 0
  %3857 = vmatprep.subr.bf16.mxu0 0
  %3858 = vmatpush1.bf16.msra.mxu0 0
  %3859 = vmatprep.subr.bf16.mxu0 0
  %3860 = vmatpush1.bf16.msra.mxu0 0
  %3861 = vmatprep.subr.bf16.mxu0 0
  %3862 = vmatpush1.bf16.msra.mxu0 0
  %3863 = vmatprep.subr.bf16.mxu0 0
  %3864 = vmatpush1.bf16.msra.mxu0 0
  %3865 = vmatprep.subr.bf16.mxu0 0
  %3866 = vmatpush1.bf16.msra.mxu0 0
  %3867 = vmatprep.subr.bf16.mxu0 0
  %3868 = vmatpush1.bf16.msra.mxu0 0
  %3869 = vmatprep.subr.bf16.mxu0 0
  %3870 = vmatpush1.bf16.msra.mxu0 0
  %3871 = vmatprep.subr.bf16.mxu0 0
  %3872 = vmatpush1.bf16.msra.mxu0 0
  %3873 = vmatprep.subr.bf16.mxu0 0
  %3874 = vmatpush1.bf16.msra.mxu0 0
  %3875 = vmatprep.subr.bf16.mxu0 0
  %3876 = vmatpush1.bf16.msra.mxu0 0
  %3877 = vmatprep.subr.bf16.mxu0 0
  %3878 = vmatpush1.bf16.msra.mxu0 0
  %3879 = vmatprep.subr.bf16.mxu0 0
  %3880 = vmatpush1.bf16.msra.mxu0 0
  %3881 = vmatprep.mubr.bf16.mxu0 0
  %3882 = vmatmul.mubr.bf16.gmra.mrb[0].mxu0 %v1894
  %v3883 = vpop.f32.mrb[0].mxu0
  %v3884 = vadd.f32 0.0, %v3883
  %v3885 = vpop.f32.mrb[0].mxu0
  %v3886 = vadd.f32 0.0, %v3885
  %v3887 = vpop.f32.mrb[0].mxu0
  %v3888 = vadd.f32 0.0, %v3887
  %v3889 = vpop.f32.mrb[0].mxu0
  %v3890 = vadd.f32 0.0, %v3889
  %3891 = vmatprep.mubr.bf16.mxu0 0
  %3892 = vmatmul.mubr.bf16.gmra.mrb[0].mxu0 %v1897
  %v3893 = vpop.f32.mrb[0].mxu0
  %v3894 = vadd.f32 0.0, %v3893
  %v3895 = vpop.f32.mrb[0].mxu0
  %v3896 = vadd.f32 0.0, %v3895
  %v3897 = vpop.f32.mrb[0].mxu0
  %v3898 = vadd.f32 0.0, %v3897
  %v3899 = vpop.f32.mrb[0].mxu0
  %v3900 = vadd.f32 0.0, %v3899
  %3901 = vdwg.mxu0
  %v3902 = vrot.slane %v1485, 4
  %v3903 = vrot.slane %v1486, 4
  %v3904 = vrot.slane %v1825, 4
  %v3905 = vrot.slane %v1826, 4
  %v3906 = vsel %vm1141, %v3902, 0
  %v3908 = vsel %vm1141, %v3903, 0
  %v3910 = vsel %vm1141, %v3904, 0
  %v3912 = vsel %vm1141, %v3905, 0
  %3914 = vmatprep.subr.mxu0 %v3908
  %3915 = vmatpush1.msra.mxu0 %v3906
  %3916 = vmatprep.subr.mxu0 0.0
  %3917 = vmatpush1.msra.mxu0 0.0
  %3918 = vmatprep.subr.mxu0 0.0
  %3919 = vmatpush1.msra.mxu0 0.0
  %3920 = vmatprep.subr.mxu0 0.0
  %3921 = vmatpush1.msra.mxu0 0.0
  %3922 = vmatprep.subr.mxu0 0.0
  %3923 = vmatpush1.msra.mxu0 0.0
  %3924 = vmatprep.subr.mxu0 0.0
  %3925 = vmatpush1.msra.mxu0 0.0
  %3926 = vmatprep.subr.mxu0 0.0
  %3927 = vmatpush1.msra.mxu0 0.0
  %3928 = vmatprep.subr.mxu0 0.0
  %3929 = vmatpush1.msra.mxu0 0.0
  %3930 = vmatprep.subr.mxu0 0.0
  %3931 = vmatpush1.msra.mxu0 0.0
  %3932 = vmatprep.subr.mxu0 0.0
  %3933 = vmatpush1.msra.mxu0 0.0
  %3934 = vmatprep.subr.mxu0 0.0
  %3935 = vmatpush1.msra.mxu0 0.0
  %3936 = vmatprep.subr.mxu0 0.0
  %3937 = vmatpush1.msra.mxu0 0.0
  %3938 = vmatprep.subr.mxu0 0.0
  %3939 = vmatpush1.msra.mxu0 0.0
  %3940 = vmatprep.subr.mxu0 0.0
  %3941 = vmatpush1.msra.mxu0 0.0
  %3942 = vmatprep.subr.mxu0 0.0
  %3943 = vmatpush1.msra.mxu0 0.0
  %3944 = vmatprep.subr.mxu0 0.0
  %3945 = vmatpush1.msra.mxu0 0.0
  %3946 = vmatprep.subr.mxu0 0.0
  %3947 = vmatpush1.msra.mxu0 0.0
  %3948 = vmatprep.subr.mxu0 0.0
  %3949 = vmatpush1.msra.mxu0 0.0
  %3950 = vmatprep.subr.mxu0 0.0
  %3951 = vmatpush1.msra.mxu0 0.0
  %3952 = vmatprep.subr.mxu0 0.0
  %3953 = vmatpush1.msra.mxu0 0.0
  %3954 = vmatprep.subr.mxu0 0.0
  %3955 = vmatpush1.msra.mxu0 0.0
  %3956 = vmatprep.subr.mxu0 0.0
  %3957 = vmatpush1.msra.mxu0 0.0
  %3958 = vmatprep.subr.mxu0 0.0
  %3959 = vmatpush1.msra.mxu0 0.0
  %3960 = vmatprep.subr.mxu0 0.0
  %3961 = vmatpush1.msra.mxu0 0.0
  %3962 = vmatprep.subr.mxu0 0.0
  %3963 = vmatpush1.msra.mxu0 0.0
  %3964 = vmatprep.subr.mxu0 0.0
  %3965 = vmatpush1.msra.mxu0 0.0
  %3966 = vmatprep.subr.mxu0 0.0
  %3967 = vmatpush1.msra.mxu0 0.0
  %3968 = vmatprep.subr.mxu0 0.0
  %3969 = vmatpush1.msra.mxu0 0.0
  %3970 = vmatprep.subr.mxu0 0.0
  %3971 = vmatpush1.msra.mxu0 0.0
  %3972 = vmatprep.subr.mxu0 0.0
  %3973 = vmatpush1.msra.mxu0 0.0
  %3974 = vmatprep.subr.mxu0 0.0
  %3975 = vmatpush1.msra.mxu0 0.0
  %3976 = vmatprep.subr.mxu0 0.0
  %3977 = vmatpush1.msra.mxu0 0.0
  %3978 = vmatprep.mubr.f32.mxu0 0.0
  %3979 = vmatmul.mubr.f32.gmra.mrb[0].mxu0 %v2011
  %v3980 = vpop.f32.mrb[0].mxu0
  %v3981 = vadd.f32 0.0, %v3980
  %v3982 = vpop.f32.mrb[0].mxu0
  %v3983 = vadd.f32 0.0, %v3982
  %3984 = vmatprep.mubr.f32.mxu0 0.0
  %3985 = vmatmul.mubr.f32.gmra.mrb[0].mxu0 %v2014
  %v3986 = vpop.f32.mrb[0].mxu0
  %v3987 = vadd.f32 0.0, %v3986
  %v3988 = vpop.f32.mrb[0].mxu0
  %v3989 = vadd.f32 0.0, %v3988
  %3990 = vmatprep.mubr.f32.mxu0 0.0
  %3991 = vmatmul.mubr.f32.gmra.mrb[0].mxu0 %v2017
  %v3992 = vpop.f32.mrb[0].mxu0
  %v3993 = vadd.f32 0.0, %v3992
  %v3994 = vpop.f32.mrb[0].mxu0
  %v3995 = vadd.f32 0.0, %v3994
  %3996 = vmatprep.mubr.f32.mxu0 0.0
  %3997 = vmatmul.mubr.f32.gmra.mrb[0].mxu0 %v2020
  %v3998 = vpop.f32.mrb[0].mxu0
  %v3999 = vadd.f32 0.0, %v3998
  %v4000 = vpop.f32.mrb[0].mxu0
  %v4001 = vadd.f32 0.0, %v4000
  %4002 = vdwg.mxu0
  %4003 = vmatprep.subr.mxu0 %v3912
  %4004 = vmatpush1.msra.mxu0 %v3910
  %4005 = vmatprep.subr.mxu0 0.0
  %4006 = vmatpush1.msra.mxu0 0.0
  %4007 = vmatprep.subr.mxu0 0.0
  %4008 = vmatpush1.msra.mxu0 0.0
  %4009 = vmatprep.subr.mxu0 0.0
  %4010 = vmatpush1.msra.mxu0 0.0
  %4011 = vmatprep.subr.mxu0 0.0
  %4012 = vmatpush1.msra.mxu0 0.0
  %4013 = vmatprep.subr.mxu0 0.0
  %4014 = vmatpush1.msra.mxu0 0.0
  %4015 = vmatprep.subr.mxu0 0.0
  %4016 = vmatpush1.msra.mxu0 0.0
  %4017 = vmatprep.subr.mxu0 0.0
  %4018 = vmatpush1.msra.mxu0 0.0
  %4019 = vmatprep.subr.mxu0 0.0
  %4020 = vmatpush1.msra.mxu0 0.0
  %4021 = vmatprep.subr.mxu0 0.0
  %4022 = vmatpush1.msra.mxu0 0.0
  %4023 = vmatprep.subr.mxu0 0.0
  %4024 = vmatpush1.msra.mxu0 0.0
  %4025 = vmatprep.subr.mxu0 0.0
  %4026 = vmatpush1.msra.mxu0 0.0
  %4027 = vmatprep.subr.mxu0 0.0
  %4028 = vmatpush1.msra.mxu0 0.0
  %4029 = vmatprep.subr.mxu0 0.0
  %4030 = vmatpush1.msra.mxu0 0.0
  %4031 = vmatprep.subr.mxu0 0.0
  %4032 = vmatpush1.msra.mxu0 0.0
  %4033 = vmatprep.subr.mxu0 0.0
  %4034 = vmatpush1.msra.mxu0 0.0
  %4035 = vmatprep.subr.mxu0 0.0
  %4036 = vmatpush1.msra.mxu0 0.0
  %4037 = vmatprep.subr.mxu0 0.0
  %4038 = vmatpush1.msra.mxu0 0.0
  %4039 = vmatprep.subr.mxu0 0.0
  %4040 = vmatpush1.msra.mxu0 0.0
  %4041 = vmatprep.subr.mxu0 0.0
  %4042 = vmatpush1.msra.mxu0 0.0
  %4043 = vmatprep.subr.mxu0 0.0
  %4044 = vmatpush1.msra.mxu0 0.0
  %4045 = vmatprep.subr.mxu0 0.0
  %4046 = vmatpush1.msra.mxu0 0.0
  %4047 = vmatprep.subr.mxu0 0.0
  %4048 = vmatpush1.msra.mxu0 0.0
  %4049 = vmatprep.subr.mxu0 0.0
  %4050 = vmatpush1.msra.mxu0 0.0
  %4051 = vmatprep.subr.mxu0 0.0
  %4052 = vmatpush1.msra.mxu0 0.0
  %4053 = vmatprep.subr.mxu0 0.0
  %4054 = vmatpush1.msra.mxu0 0.0
  %4055 = vmatprep.subr.mxu0 0.0
  %4056 = vmatpush1.msra.mxu0 0.0
  %4057 = vmatprep.subr.mxu0 0.0
  %4058 = vmatpush1.msra.mxu0 0.0
  %4059 = vmatprep.subr.mxu0 0.0
  %4060 = vmatpush1.msra.mxu0 0.0
  %4061 = vmatprep.subr.mxu0 0.0
  %4062 = vmatpush1.msra.mxu0 0.0
  %4063 = vmatprep.subr.mxu0 0.0
  %4064 = vmatpush1.msra.mxu0 0.0
  %4065 = vmatprep.subr.mxu0 0.0
  %4066 = vmatpush1.msra.mxu0 0.0
  %4067 = vmatprep.mubr.f32.mxu0 0.0
  %4068 = vmatmul.mubr.f32.gmra.mrb[0].mxu0 %v2011
  %v4069 = vpop.f32.mrb[0].mxu0
  %v4070 = vadd.f32 0.0, %v4069
  %v4071 = vpop.f32.mrb[0].mxu0
  %v4072 = vadd.f32 0.0, %v4071
  %4073 = vmatprep.mubr.f32.mxu0 0.0
  %4074 = vmatmul.mubr.f32.gmra.mrb[0].mxu0 %v2014
  %v4075 = vpop.f32.mrb[0].mxu0
  %v4076 = vadd.f32 0.0, %v4075
  %v4077 = vpop.f32.mrb[0].mxu0
  %v4078 = vadd.f32 0.0, %v4077
  %4079 = vmatprep.mubr.f32.mxu0 0.0
  %4080 = vmatmul.mubr.f32.gmra.mrb[0].mxu0 %v2017
  %v4081 = vpop.f32.mrb[0].mxu0
  %v4082 = vadd.f32 0.0, %v4081
  %v4083 = vpop.f32.mrb[0].mxu0
  %v4084 = vadd.f32 0.0, %v4083
  %4085 = vmatprep.mubr.f32.mxu0 0.0
  %4086 = vmatmul.mubr.f32.gmra.mrb[0].mxu0 %v2020
  %v4087 = vpop.f32.mrb[0].mxu0
  %v4088 = vadd.f32 0.0, %v4087
  %v4089 = vpop.f32.mrb[0].mxu0
  %v4090 = vadd.f32 0.0, %v4089
  %4091 = vdwg.mxu0
  %v4092 = vmul.f32 %v3981, %v3831
  %v4093 = vmul.f32 %v3983, %v3833
  %v4094 = vmul.f32 %v4070, %v3884
  %v4095 = vmul.f32 %v4072, %v3886
  %v4096 = vmul.f32 %v3987, %v3835
  %v4097 = vmul.f32 %v3989, %v3837
  %v4098 = vmul.f32 %v4076, %v3888
  %v4099 = vmul.f32 %v4078, %v3890
  %v4100 = vmul.f32 %v3993, %v3841
  %v4101 = vmul.f32 %v3995, %v3843
  %v4102 = vmul.f32 %v4082, %v3894
  %v4103 = vmul.f32 %v4084, %v3896
  %v4104 = vmul.f32 %v3999, %v3845
  %v4105 = vmul.f32 %v4001, %v3847
  %v4106 = vmul.f32 %v4088, %v3898
  %v4107 = vmul.f32 %v4090, %v3900
  %v4108 = vadd.f32 %v3732, %v4092
  %v4109 = vadd.f32 %v3733, %v4093
  %v4110 = vadd.f32 %v3734, %v4094
  %v4111 = vadd.f32 %v3735, %v4095
  %v4112 = vadd.f32 %v3736, %v4096
  %v4113 = vadd.f32 %v3737, %v4097
  %v4114 = vadd.f32 %v3738, %v4098
  %v4115 = vadd.f32 %v3739, %v4099
  %v4116 = vadd.f32 %v3740, %v4100
  %v4117 = vadd.f32 %v3741, %v4101
  %v4118 = vadd.f32 %v3742, %v4102
  %v4119 = vadd.f32 %v3743, %v4103
  %v4120 = vadd.f32 %v3744, %v4104
  %v4121 = vadd.f32 %v3745, %v4105
  %v4122 = vadd.f32 %v3746, %v4106
  %v4123 = vadd.f32 %v3747, %v4107
  %v4124 = vld [vmem:[%s0 + $0x180] sm:$0xff]
  %v4125 = vld [vmem:[%s0 + $0x188] sm:$0xff]
  %v4126 = vld [vmem:[%s0 + $0x190] sm:$0xff]
  %v4127 = vld [vmem:[%s0 + $0x198] sm:$0xff]
  %v4128 = vld [vmem:[%s0 + $0x1a0] sm:$0xff]
  %v4129 = vld [vmem:[%s0 + $0x1a8] sm:$0xff]
  %v4130 = vld [vmem:[%s0 + $0x1b0] sm:$0xff]
  %v4131 = vld [vmem:[%s0 + $0x1b8] sm:$0xff]
  %v4140 = vunpack.c.l.b16 %v4124
  %v4141 = vunpack.c.h.b16 %v4124
  %v4142 = vunpack.c.l.b16 %v4125
  %v4143 = vunpack.c.h.b16 %v4125
  %v4144 = vunpack.c.l.b16 %v4126
  %v4145 = vunpack.c.h.b16 %v4126
  %v4146 = vunpack.c.l.b16 %v4127
  %v4147 = vunpack.c.h.b16 %v4127
  %v4148 = vunpack.c.l.b16 %v4128
  %v4149 = vunpack.c.h.b16 %v4128
  %v4150 = vunpack.c.l.b16 %v4129
  %v4151 = vunpack.c.h.b16 %v4129
  %v4152 = vunpack.c.l.b16 %v4130
  %v4153 = vunpack.c.h.b16 %v4130
  %v4154 = vunpack.c.l.b16 %v4131
  %v4155 = vunpack.c.h.b16 %v4131
  %v4156 = vpack.c.b16 %v4144, %v4140
  %v4157 = vpack.c.b16 %v4145, %v4141
  %v4158 = vpack.c.b16 %v4146, %v4142
  %v4159 = vpack.c.b16 %v4147, %v4143
  %v4160 = vpack.c.b16 %v4152, %v4148
  %v4161 = vpack.c.b16 %v4153, %v4149
  %v4162 = vpack.c.b16 %v4154, %v4150
  %v4163 = vpack.c.b16 %v4155, %v4151
  %4172 = vmatprep.subr.bf16.mxu0 %v4157
  %4173 = vmatpush1.bf16.msra.mxu0 %v4156
  %4174 = vmatprep.subr.bf16.mxu0 %v4161
  %4175 = vmatpush1.bf16.msra.mxu0 %v4160
  %4176 = vmatprep.subr.bf16.mxu0 0
  %4177 = vmatpush1.bf16.msra.mxu0 0
  %4178 = vmatprep.subr.bf16.mxu0 0
  %4179 = vmatpush1.bf16.msra.mxu0 0
  %4180 = vmatprep.subr.bf16.mxu0 0
  %4181 = vmatpush1.bf16.msra.mxu0 0
  %4182 = vmatprep.subr.bf16.mxu0 0
  %4183 = vmatpush1.bf16.msra.mxu0 0
  %4184 = vmatprep.subr.bf16.mxu0 0
  %4185 = vmatpush1.bf16.msra.mxu0 0
  %4186 = vmatprep.subr.bf16.mxu0 0
  %4187 = vmatpush1.bf16.msra.mxu0 0
  %4188 = vmatprep.subr.bf16.mxu0 0
  %4189 = vmatpush1.bf16.msra.mxu0 0
  %4190 = vmatprep.subr.bf16.mxu0 0
  %4191 = vmatpush1.bf16.msra.mxu0 0
  %4192 = vmatprep.subr.bf16.mxu0 0
  %4193 = vmatpush1.bf16.msra.mxu0 0
  %4194 = vmatprep.subr.bf16.mxu0 0
  %4195 = vmatpush1.bf16.msra.mxu0 0
  %4196 = vmatprep.subr.bf16.mxu0 0
  %4197 = vmatpush1.bf16.msra.mxu0 0
  %4198 = vmatprep.subr.bf16.mxu0 0
  %4199 = vmatpush1.bf16.msra.mxu0 0
  %4200 = vmatprep.subr.bf16.mxu0 0
  %4201 = vmatpush1.bf16.msra.mxu0 0
  %4202 = vmatprep.subr.bf16.mxu0 0
  %4203 = vmatpush1.bf16.msra.mxu0 0
  %4204 = vmatprep.mubr.bf16.mxu0 0
  %4205 = vmatmul.mubr.bf16.gmra.mrb[0].mxu0 %v1894
  %v4206 = vpop.f32.mrb[0].mxu0
  %v4207 = vadd.f32 0.0, %v4206
  %v4208 = vpop.f32.mrb[0].mxu0
  %v4209 = vadd.f32 0.0, %v4208
  %v4210 = vpop.f32.mrb[0].mxu0
  %v4211 = vadd.f32 0.0, %v4210
  %v4212 = vpop.f32.mrb[0].mxu0
  %v4213 = vadd.f32 0.0, %v4212
  %4214 = vmatprep.mubr.bf16.mxu0 0
  %4215 = vmatmul.mubr.bf16.gmra.mrb[0].mxu0 %v1897
  %v4216 = vpop.f32.mrb[0].mxu0
  %v4217 = vadd.f32 0.0, %v4216
  %v4218 = vpop.f32.mrb[0].mxu0
  %v4219 = vadd.f32 0.0, %v4218
  %v4220 = vpop.f32.mrb[0].mxu0
  %v4221 = vadd.f32 0.0, %v4220
  %v4222 = vpop.f32.mrb[0].mxu0
  %v4223 = vadd.f32 0.0, %v4222
  %4224 = vdwg.mxu0
  %4225 = vmatprep.subr.bf16.mxu0 %v4159
  %4226 = vmatpush1.bf16.msra.mxu0 %v4158
  %4227 = vmatprep.subr.bf16.mxu0 %v4163
  %4228 = vmatpush1.bf16.msra.mxu0 %v4162
  %4229 = vmatprep.subr.bf16.mxu0 0
  %4230 = vmatpush1.bf16.msra.mxu0 0
  %4231 = vmatprep.subr.bf16.mxu0 0
  %4232 = vmatpush1.bf16.msra.mxu0 0
  %4233 = vmatprep.subr.bf16.mxu0 0
  %4234 = vmatpush1.bf16.msra.mxu0 0
  %4235 = vmatprep.subr.bf16.mxu0 0
  %4236 = vmatpush1.bf16.msra.mxu0 0
  %4237 = vmatprep.subr.bf16.mxu0 0
  %4238 = vmatpush1.bf16.msra.mxu0 0
  %4239 = vmatprep.subr.bf16.mxu0 0
  %4240 = vmatpush1.bf16.msra.mxu0 0
  %4241 = vmatprep.subr.bf16.mxu0 0
  %4242 = vmatpush1.bf16.msra.mxu0 0
  %4243 = vmatprep.subr.bf16.mxu0 0
  %4244 = vmatpush1.bf16.msra.mxu0 0
  %4245 = vmatprep.subr.bf16.mxu0 0
  %4246 = vmatpush1.bf16.msra.mxu0 0
  %4247 = vmatprep.subr.bf16.mxu0 0
  %4248 = vmatpush1.bf16.msra.mxu0 0
  %4249 = vmatprep.subr.bf16.mxu0 0
  %4250 = vmatpush1.bf16.msra.mxu0 0
  %4251 = vmatprep.subr.bf16.mxu0 0
  %4252 = vmatpush1.bf16.msra.mxu0 0
  %4253 = vmatprep.subr.bf16.mxu0 0
  %4254 = vmatpush1.bf16.msra.mxu0 0
  %4255 = vmatprep.subr.bf16.mxu0 0
  %4256 = vmatpush1.bf16.msra.mxu0 0
  %4257 = vmatprep.mubr.bf16.mxu0 0
  %4258 = vmatmul.mubr.bf16.gmra.mrb[0].mxu0 %v1894
  %v4259 = vpop.f32.mrb[0].mxu0
  %v4260 = vadd.f32 0.0, %v4259
  %v4261 = vpop.f32.mrb[0].mxu0
  %v4262 = vadd.f32 0.0, %v4261
  %v4263 = vpop.f32.mrb[0].mxu0
  %v4264 = vadd.f32 0.0, %v4263
  %v4265 = vpop.f32.mrb[0].mxu0
  %v4266 = vadd.f32 0.0, %v4265
  %4267 = vmatprep.mubr.bf16.mxu0 0
  %4268 = vmatmul.mubr.bf16.gmra.mrb[0].mxu0 %v1897
  %v4269 = vpop.f32.mrb[0].mxu0
  %v4270 = vadd.f32 0.0, %v4269
  %v4271 = vpop.f32.mrb[0].mxu0
  %v4272 = vadd.f32 0.0, %v4271
  %v4273 = vpop.f32.mrb[0].mxu0
  %v4274 = vadd.f32 0.0, %v4273
  %v4275 = vpop.f32.mrb[0].mxu0
  %v4276 = vadd.f32 0.0, %v4275
  %4277 = vdwg.mxu0
  %v4279 = vsel %vm1141, %v1487, 0
  %v4282 = vsel %vm1141, %v1488, 0
  %v4285 = vsel %vm1141, %v1827, 0
  %v4288 = vsel %vm1141, %v1828, 0
  %4290 = vmatprep.subr.mxu0 %v4282
  %4291 = vmatpush1.msra.mxu0 %v4279
  %4292 = vmatprep.subr.mxu0 0.0
  %4293 = vmatpush1.msra.mxu0 0.0
  %4294 = vmatprep.subr.mxu0 0.0
  %4295 = vmatpush1.msra.mxu0 0.0
  %4296 = vmatprep.subr.mxu0 0.0
  %4297 = vmatpush1.msra.mxu0 0.0
  %4298 = vmatprep.subr.mxu0 0.0
  %4299 = vmatpush1.msra.mxu0 0.0
  %4300 = vmatprep.subr.mxu0 0.0
  %4301 = vmatpush1.msra.mxu0 0.0
  %4302 = vmatprep.subr.mxu0 0.0
  %4303 = vmatpush1.msra.mxu0 0.0
  %4304 = vmatprep.subr.mxu0 0.0
  %4305 = vmatpush1.msra.mxu0 0.0
  %4306 = vmatprep.subr.mxu0 0.0
  %4307 = vmatpush1.msra.mxu0 0.0
  %4308 = vmatprep.subr.mxu0 0.0
  %4309 = vmatpush1.msra.mxu0 0.0
  %4310 = vmatprep.subr.mxu0 0.0
  %4311 = vmatpush1.msra.mxu0 0.0
  %4312 = vmatprep.subr.mxu0 0.0
  %4313 = vmatpush1.msra.mxu0 0.0
  %4314 = vmatprep.subr.mxu0 0.0
  %4315 = vmatpush1.msra.mxu0 0.0
  %4316 = vmatprep.subr.mxu0 0.0
  %4317 = vmatpush1.msra.mxu0 0.0
  %4318 = vmatprep.subr.mxu0 0.0
  %4319 = vmatpush1.msra.mxu0 0.0
  %4320 = vmatprep.subr.mxu0 0.0
  %4321 = vmatpush1.msra.mxu0 0.0
  %4322 = vmatprep.subr.mxu0 0.0
  %4323 = vmatpush1.msra.mxu0 0.0
  %4324 = vmatprep.subr.mxu0 0.0
  %4325 = vmatpush1.msra.mxu0 0.0
  %4326 = vmatprep.subr.mxu0 0.0
  %4327 = vmatpush1.msra.mxu0 0.0
  %4328 = vmatprep.subr.mxu0 0.0
  %4329 = vmatpush1.msra.mxu0 0.0
  %4330 = vmatprep.subr.mxu0 0.0
  %4331 = vmatpush1.msra.mxu0 0.0
  %4332 = vmatprep.subr.mxu0 0.0
  %4333 = vmatpush1.msra.mxu0 0.0
  %4334 = vmatprep.subr.mxu0 0.0
  %4335 = vmatpush1.msra.mxu0 0.0
  %4336 = vmatprep.subr.mxu0 0.0
  %4337 = vmatpush1.msra.mxu0 0.0
  %4338 = vmatprep.subr.mxu0 0.0
  %4339 = vmatpush1.msra.mxu0 0.0
  %4340 = vmatprep.subr.mxu0 0.0
  %4341 = vmatpush1.msra.mxu0 0.0
  %4342 = vmatprep.subr.mxu0 0.0
  %4343 = vmatpush1.msra.mxu0 0.0
  %4344 = vmatprep.subr.mxu0 0.0
  %4345 = vmatpush1.msra.mxu0 0.0
  %4346 = vmatprep.subr.mxu0 0.0
  %4347 = vmatpush1.msra.mxu0 0.0
  %4348 = vmatprep.subr.mxu0 0.0
  %4349 = vmatpush1.msra.mxu0 0.0
  %4350 = vmatprep.subr.mxu0 0.0
  %4351 = vmatpush1.msra.mxu0 0.0
  %4352 = vmatprep.subr.mxu0 0.0
  %4353 = vmatpush1.msra.mxu0 0.0
  %4354 = vmatprep.mubr.f32.mxu0 0.0
  %4355 = vmatmul.mubr.f32.gmra.mrb[0].mxu0 %v2011
  %v4356 = vpop.f32.mrb[0].mxu0
  %v4357 = vadd.f32 0.0, %v4356
  %v4358 = vpop.f32.mrb[0].mxu0
  %v4359 = vadd.f32 0.0, %v4358
  %4360 = vmatprep.mubr.f32.mxu0 0.0
  %4361 = vmatmul.mubr.f32.gmra.mrb[0].mxu0 %v2014
  %v4362 = vpop.f32.mrb[0].mxu0
  %v4363 = vadd.f32 0.0, %v4362
  %v4364 = vpop.f32.mrb[0].mxu0
  %v4365 = vadd.f32 0.0, %v4364
  %4366 = vmatprep.mubr.f32.mxu0 0.0
  %4367 = vmatmul.mubr.f32.gmra.mrb[0].mxu0 %v2017
  %v4368 = vpop.f32.mrb[0].mxu0
  %v4369 = vadd.f32 0.0, %v4368
  %v4370 = vpop.f32.mrb[0].mxu0
  %v4371 = vadd.f32 0.0, %v4370
  %4372 = vmatprep.mubr.f32.mxu0 0.0
  %4373 = vmatmul.mubr.f32.gmra.mrb[0].mxu0 %v2020
  %v4374 = vpop.f32.mrb[0].mxu0
  %v4375 = vadd.f32 0.0, %v4374
  %v4376 = vpop.f32.mrb[0].mxu0
  %v4377 = vadd.f32 0.0, %v4376
  %4378 = vdwg.mxu0
  %4379 = vmatprep.subr.mxu0 %v4288
  %4380 = vmatpush1.msra.mxu0 %v4285
  %4381 = vmatprep.subr.mxu0 0.0
  %4382 = vmatpush1.msra.mxu0 0.0
  %4383 = vmatprep.subr.mxu0 0.0
  %4384 = vmatpush1.msra.mxu0 0.0
  %4385 = vmatprep.subr.mxu0 0.0
  %4386 = vmatpush1.msra.mxu0 0.0
  %4387 = vmatprep.subr.mxu0 0.0
  %4388 = vmatpush1.msra.mxu0 0.0
  %4389 = vmatprep.subr.mxu0 0.0
  %4390 = vmatpush1.msra.mxu0 0.0
  %4391 = vmatprep.subr.mxu0 0.0
  %4392 = vmatpush1.msra.mxu0 0.0
  %4393 = vmatprep.subr.mxu0 0.0
  %4394 = vmatpush1.msra.mxu0 0.0
  %4395 = vmatprep.subr.mxu0 0.0
  %4396 = vmatpush1.msra.mxu0 0.0
  %4397 = vmatprep.subr.mxu0 0.0
  %4398 = vmatpush1.msra.mxu0 0.0
  %4399 = vmatprep.subr.mxu0 0.0
  %4400 = vmatpush1.msra.mxu0 0.0
  %4401 = vmatprep.subr.mxu0 0.0
  %4402 = vmatpush1.msra.mxu0 0.0
  %4403 = vmatprep.subr.mxu0 0.0
  %4404 = vmatpush1.msra.mxu0 0.0
  %4405 = vmatprep.subr.mxu0 0.0
  %4406 = vmatpush1.msra.mxu0 0.0
  %4407 = vmatprep.subr.mxu0 0.0
  %4408 = vmatpush1.msra.mxu0 0.0
  %4409 = vmatprep.subr.mxu0 0.0
  %4410 = vmatpush1.msra.mxu0 0.0
  %4411 = vmatprep.subr.mxu0 0.0
  %4412 = vmatpush1.msra.mxu0 0.0
  %4413 = vmatprep.subr.mxu0 0.0
  %4414 = vmatpush1.msra.mxu0 0.0
  %4415 = vmatprep.subr.mxu0 0.0
  %4416 = vmatpush1.msra.mxu0 0.0
  %4417 = vmatprep.subr.mxu0 0.0
  %4418 = vmatpush1.msra.mxu0 0.0
  %4419 = vmatprep.subr.mxu0 0.0
  %4420 = vmatpush1.msra.mxu0 0.0
  %4421 = vmatprep.subr.mxu0 0.0
  %4422 = vmatpush1.msra.mxu0 0.0
  %4423 = vmatprep.subr.mxu0 0.0
  %4424 = vmatpush1.msra.mxu0 0.0
  %4425 = vmatprep.subr.mxu0 0.0
  %4426 = vmatpush1.msra.mxu0 0.0
  %4427 = vmatprep.subr.mxu0 0.0
  %4428 = vmatpush1.msra.mxu0 0.0
  %4429 = vmatprep.subr.mxu0 0.0
  %4430 = vmatpush1.msra.mxu0 0.0
  %4431 = vmatprep.subr.mxu0 0.0
  %4432 = vmatpush1.msra.mxu0 0.0
  %4433 = vmatprep.subr.mxu0 0.0
  %4434 = vmatpush1.msra.mxu0 0.0
  %4435 = vmatprep.subr.mxu0 0.0
  %4436 = vmatpush1.msra.mxu0 0.0
  %4437 = vmatprep.subr.mxu0 0.0
  %4438 = vmatpush1.msra.mxu0 0.0
  %4439 = vmatprep.subr.mxu0 0.0
  %4440 = vmatpush1.msra.mxu0 0.0
  %4441 = vmatprep.subr.mxu0 0.0
  %4442 = vmatpush1.msra.mxu0 0.0
  %4443 = vmatprep.mubr.f32.mxu0 0.0
  %4444 = vmatmul.mubr.f32.gmra.mrb[0].mxu0 %v2011
  %v4445 = vpop.f32.mrb[0].mxu0
  %v4446 = vadd.f32 0.0, %v4445
  %v4447 = vpop.f32.mrb[0].mxu0
  %v4448 = vadd.f32 0.0, %v4447
  %4449 = vmatprep.mubr.f32.mxu0 0.0
  %4450 = vmatmul.mubr.f32.gmra.mrb[0].mxu0 %v2014
  %v4451 = vpop.f32.mrb[0].mxu0
  %v4452 = vadd.f32 0.0, %v4451
  %v4453 = vpop.f32.mrb[0].mxu0
  %v4454 = vadd.f32 0.0, %v4453
  %4455 = vmatprep.mubr.f32.mxu0 0.0
  %4456 = vmatmul.mubr.f32.gmra.mrb[0].mxu0 %v2017
  %v4457 = vpop.f32.mrb[0].mxu0
  %v4458 = vadd.f32 0.0, %v4457
  %v4459 = vpop.f32.mrb[0].mxu0
  %v4460 = vadd.f32 0.0, %v4459
  %4461 = vmatprep.mubr.f32.mxu0 0.0
  %4462 = vmatmul.mubr.f32.gmra.mrb[0].mxu0 %v2020
  %v4463 = vpop.f32.mrb[0].mxu0
  %v4464 = vadd.f32 0.0, %v4463
  %v4465 = vpop.f32.mrb[0].mxu0
  %v4466 = vadd.f32 0.0, %v4465
  %4467 = vdwg.mxu0
  %v4468 = vmul.f32 %v4357, %v4207
  %v4469 = vmul.f32 %v4359, %v4209
  %v4470 = vmul.f32 %v4446, %v4260
  %v4471 = vmul.f32 %v4448, %v4262
  %v4472 = vmul.f32 %v4363, %v4211
  %v4473 = vmul.f32 %v4365, %v4213
  %v4474 = vmul.f32 %v4452, %v4264
  %v4475 = vmul.f32 %v4454, %v4266
  %v4476 = vmul.f32 %v4369, %v4217
  %v4477 = vmul.f32 %v4371, %v4219
  %v4478 = vmul.f32 %v4458, %v4270
  %v4479 = vmul.f32 %v4460, %v4272
  %v4480 = vmul.f32 %v4375, %v4221
  %v4481 = vmul.f32 %v4377, %v4223
  %v4482 = vmul.f32 %v4464, %v4274
  %v4483 = vmul.f32 %v4466, %v4276
  %v4484 = vadd.f32 %v4108, %v4468
  %v4485 = vadd.f32 %v4109, %v4469
  %v4486 = vadd.f32 %v4110, %v4470
  %v4487 = vadd.f32 %v4111, %v4471
  %v4488 = vadd.f32 %v4112, %v4472
  %v4489 = vadd.f32 %v4113, %v4473
  %v4490 = vadd.f32 %v4114, %v4474
  %v4491 = vadd.f32 %v4115, %v4475
  %v4492 = vadd.f32 %v4116, %v4476
  %v4493 = vadd.f32 %v4117, %v4477
  %v4494 = vadd.f32 %v4118, %v4478
  %v4495 = vadd.f32 %v4119, %v4479
  %v4496 = vadd.f32 %v4120, %v4480
  %v4497 = vadd.f32 %v4121, %v4481
  %v4498 = vadd.f32 %v4122, %v4482
  %v4499 = vadd.f32 %v4123, %v4483
  %v4500 = vld [vmem:[%s0 + $0x1c0] sm:$0xff]
  %v4501 = vld [vmem:[%s0 + $0x1c8] sm:$0xff]
  %v4502 = vld [vmem:[%s0 + $0x1d0] sm:$0xff]
  %v4503 = vld [vmem:[%s0 + $0x1d8] sm:$0xff]
  %v4504 = vld [vmem:[%s0 + $0x1e0] sm:$0xff]
  %v4505 = vld [vmem:[%s0 + $0x1e8] sm:$0xff]
  %v4506 = vld [vmem:[%s0 + $0x1f0] sm:$0xff]
  %v4507 = vld [vmem:[%s0 + $0x1f8] sm:$0xff]
  %v4516 = vunpack.c.l.b16 %v4500
  %v4517 = vunpack.c.h.b16 %v4500
  %v4518 = vunpack.c.l.b16 %v4501
  %v4519 = vunpack.c.h.b16 %v4501
  %v4520 = vunpack.c.l.b16 %v4502
  %v4521 = vunpack.c.h.b16 %v4502
  %v4522 = vunpack.c.l.b16 %v4503
  %v4523 = vunpack.c.h.b16 %v4503
  %v4524 = vunpack.c.l.b16 %v4504
  %v4525 = vunpack.c.h.b16 %v4504
  %v4526 = vunpack.c.l.b16 %v4505
  %v4527 = vunpack.c.h.b16 %v4505
  %v4528 = vunpack.c.l.b16 %v4506
  %v4529 = vunpack.c.h.b16 %v4506
  %v4530 = vunpack.c.l.b16 %v4507
  %v4531 = vunpack.c.h.b16 %v4507
  %v4532 = vpack.c.b16 %v4520, %v4516
  %v4533 = vpack.c.b16 %v4521, %v4517
  %v4534 = vpack.c.b16 %v4522, %v4518
  %v4535 = vpack.c.b16 %v4523, %v4519
  %v4536 = vpack.c.b16 %v4528, %v4524
  %v4537 = vpack.c.b16 %v4529, %v4525
  %v4538 = vpack.c.b16 %v4530, %v4526
  %v4539 = vpack.c.b16 %v4531, %v4527
  %4548 = vmatprep.subr.bf16.mxu0 %v4533
  %4549 = vmatpush1.bf16.msra.mxu0 %v4532
  %4550 = vmatprep.subr.bf16.mxu0 %v4537
  %4551 = vmatpush1.bf16.msra.mxu0 %v4536
  %4552 = vmatprep.subr.bf16.mxu0 0
  %4553 = vmatpush1.bf16.msra.mxu0 0
  %4554 = vmatprep.subr.bf16.mxu0 0
  %4555 = vmatpush1.bf16.msra.mxu0 0
  %4556 = vmatprep.subr.bf16.mxu0 0
  %4557 = vmatpush1.bf16.msra.mxu0 0
  %4558 = vmatprep.subr.bf16.mxu0 0
  %4559 = vmatpush1.bf16.msra.mxu0 0
  %4560 = vmatprep.subr.bf16.mxu0 0
  %4561 = vmatpush1.bf16.msra.mxu0 0
  %4562 = vmatprep.subr.bf16.mxu0 0
  %4563 = vmatpush1.bf16.msra.mxu0 0
  %4564 = vmatprep.subr.bf16.mxu0 0
  %4565 = vmatpush1.bf16.msra.mxu0 0
  %4566 = vmatprep.subr.bf16.mxu0 0
  %4567 = vmatpush1.bf16.msra.mxu0 0
  %4568 = vmatprep.subr.bf16.mxu0 0
  %4569 = vmatpush1.bf16.msra.mxu0 0
  %4570 = vmatprep.subr.bf16.mxu0 0
  %4571 = vmatpush1.bf16.msra.mxu0 0
  %4572 = vmatprep.subr.bf16.mxu0 0
  %4573 = vmatpush1.bf16.msra.mxu0 0
  %4574 = vmatprep.subr.bf16.mxu0 0
  %4575 = vmatpush1.bf16.msra.mxu0 0
  %4576 = vmatprep.subr.bf16.mxu0 0
  %4577 = vmatpush1.bf16.msra.mxu0 0
  %4578 = vmatprep.subr.bf16.mxu0 0
  %4579 = vmatpush1.bf16.msra.mxu0 0
  %4580 = vmatprep.mubr.bf16.mxu0 0
  %4581 = vmatmul.mubr.bf16.gmra.mrb[0].mxu0 %v1894
  %v4582 = vpop.f32.mrb[0].mxu0
  %v4583 = vadd.f32 0.0, %v4582
  %v4584 = vpop.f32.mrb[0].mxu0
  %v4585 = vadd.f32 0.0, %v4584
  %v4586 = vpop.f32.mrb[0].mxu0
  %v4587 = vadd.f32 0.0, %v4586
  %v4588 = vpop.f32.mrb[0].mxu0
  %v4589 = vadd.f32 0.0, %v4588
  %4590 = vmatprep.mubr.bf16.mxu0 0
  %4591 = vmatmul.mubr.bf16.gmra.mrb[0].mxu0 %v1897
  %v4592 = vpop.f32.mrb[0].mxu0
  %v4593 = vadd.f32 0.0, %v4592
  %v4594 = vpop.f32.mrb[0].mxu0
  %v4595 = vadd.f32 0.0, %v4594
  %v4596 = vpop.f32.mrb[0].mxu0
  %v4597 = vadd.f32 0.0, %v4596
  %v4598 = vpop.f32.mrb[0].mxu0
  %v4599 = vadd.f32 0.0, %v4598
  %4600 = vdwg.mxu0
  %4601 = vmatprep.subr.bf16.mxu0 %v4535
  %4602 = vmatpush1.bf16.msra.mxu0 %v4534
  %4603 = vmatprep.subr.bf16.mxu0 %v4539
  %4604 = vmatpush1.bf16.msra.mxu0 %v4538
  %4605 = vmatprep.subr.bf16.mxu0 0
  %4606 = vmatpush1.bf16.msra.mxu0 0
  %4607 = vmatprep.subr.bf16.mxu0 0
  %4608 = vmatpush1.bf16.msra.mxu0 0
  %4609 = vmatprep.subr.bf16.mxu0 0
  %4610 = vmatpush1.bf16.msra.mxu0 0
  %4611 = vmatprep.subr.bf16.mxu0 0
  %4612 = vmatpush1.bf16.msra.mxu0 0
  %4613 = vmatprep.subr.bf16.mxu0 0
  %4614 = vmatpush1.bf16.msra.mxu0 0
  %4615 = vmatprep.subr.bf16.mxu0 0
  %4616 = vmatpush1.bf16.msra.mxu0 0
  %4617 = vmatprep.subr.bf16.mxu0 0
  %4618 = vmatpush1.bf16.msra.mxu0 0
  %4619 = vmatprep.subr.bf16.mxu0 0
  %4620 = vmatpush1.bf16.msra.mxu0 0
  %4621 = vmatprep.subr.bf16.mxu0 0
  %4622 = vmatpush1.bf16.msra.mxu0 0
  %4623 = vmatprep.subr.bf16.mxu0 0
  %4624 = vmatpush1.bf16.msra.mxu0 0
  %4625 = vmatprep.subr.bf16.mxu0 0
  %4626 = vmatpush1.bf16.msra.mxu0 0
  %4627 = vmatprep.subr.bf16.mxu0 0
  %4628 = vmatpush1.bf16.msra.mxu0 0
  %4629 = vmatprep.subr.bf16.mxu0 0
  %4630 = vmatpush1.bf16.msra.mxu0 0
  %4631 = vmatprep.subr.bf16.mxu0 0
  %4632 = vmatpush1.bf16.msra.mxu0 0
  %4633 = vmatprep.mubr.bf16.mxu0 0
  %4634 = vmatmul.mubr.bf16.gmra.mrb[0].mxu0 %v1894
  %v4635 = vpop.f32.mrb[0].mxu0
  %v4636 = vadd.f32 0.0, %v4635
  %v4637 = vpop.f32.mrb[0].mxu0
  %v4638 = vadd.f32 0.0, %v4637
  %v4639 = vpop.f32.mrb[0].mxu0
  %v4640 = vadd.f32 0.0, %v4639
  %v4641 = vpop.f32.mrb[0].mxu0
  %v4642 = vadd.f32 0.0, %v4641
  %4643 = vmatprep.mubr.bf16.mxu0 0
  %4644 = vmatmul.mubr.bf16.gmra.mrb[0].mxu0 %v1897
  %v4645 = vpop.f32.mrb[0].mxu0
  %v4646 = vadd.f32 0.0, %v4645
  %v4647 = vpop.f32.mrb[0].mxu0
  %v4648 = vadd.f32 0.0, %v4647
  %v4649 = vpop.f32.mrb[0].mxu0
  %v4650 = vadd.f32 0.0, %v4649
  %v4651 = vpop.f32.mrb[0].mxu0
  %v4652 = vadd.f32 0.0, %v4651
  %4653 = vdwg.mxu0
  %v4654 = vrot.slane %v1487, 4
  %v4655 = vrot.slane %v1488, 4
  %v4656 = vrot.slane %v1827, 4
  %v4657 = vrot.slane %v1828, 4
  %v4658 = vsel %vm1141, %v4654, 0
  %v4660 = vsel %vm1141, %v4655, 0
  %v4662 = vsel %vm1141, %v4656, 0
  %v4664 = vsel %vm1141, %v4657, 0
  %4666 = vmatprep.subr.mxu0 %v4660
  %4667 = vmatpush1.msra.mxu0 %v4658
  %4668 = vmatprep.subr.mxu0 0.0
  %4669 = vmatpush1.msra.mxu0 0.0
  %4670 = vmatprep.subr.mxu0 0.0
  %4671 = vmatpush1.msra.mxu0 0.0
  %4672 = vmatprep.subr.mxu0 0.0
  %4673 = vmatpush1.msra.mxu0 0.0
  %4674 = vmatprep.subr.mxu0 0.0
  %4675 = vmatpush1.msra.mxu0 0.0
  %4676 = vmatprep.subr.mxu0 0.0
  %4677 = vmatpush1.msra.mxu0 0.0
  %4678 = vmatprep.subr.mxu0 0.0
  %4679 = vmatpush1.msra.mxu0 0.0
  %4680 = vmatprep.subr.mxu0 0.0
  %4681 = vmatpush1.msra.mxu0 0.0
  %4682 = vmatprep.subr.mxu0 0.0
  %4683 = vmatpush1.msra.mxu0 0.0
  %4684 = vmatprep.subr.mxu0 0.0
  %4685 = vmatpush1.msra.mxu0 0.0
  %4686 = vmatprep.subr.mxu0 0.0
  %4687 = vmatpush1.msra.mxu0 0.0
  %4688 = vmatprep.subr.mxu0 0.0
  %4689 = vmatpush1.msra.mxu0 0.0
  %4690 = vmatprep.subr.mxu0 0.0
  %4691 = vmatpush1.msra.mxu0 0.0
  %4692 = vmatprep.subr.mxu0 0.0
  %4693 = vmatpush1.msra.mxu0 0.0
  %4694 = vmatprep.subr.mxu0 0.0
  %4695 = vmatpush1.msra.mxu0 0.0
  %4696 = vmatprep.subr.mxu0 0.0
  %4697 = vmatpush1.msra.mxu0 0.0
  %4698 = vmatprep.subr.mxu0 0.0
  %4699 = vmatpush1.msra.mxu0 0.0
  %4700 = vmatprep.subr.mxu0 0.0
  %4701 = vmatpush1.msra.mxu0 0.0
  %4702 = vmatprep.subr.mxu0 0.0
  %4703 = vmatpush1.msra.mxu0 0.0
  %4704 = vmatprep.subr.mxu0 0.0
  %4705 = vmatpush1.msra.mxu0 0.0
  %4706 = vmatprep.subr.mxu0 0.0
  %4707 = vmatpush1.msra.mxu0 0.0
  %4708 = vmatprep.subr.mxu0 0.0
  %4709 = vmatpush1.msra.mxu0 0.0
  %4710 = vmatprep.subr.mxu0 0.0
  %4711 = vmatpush1.msra.mxu0 0.0
  %4712 = vmatprep.subr.mxu0 0.0
  %4713 = vmatpush1.msra.mxu0 0.0
  %4714 = vmatprep.subr.mxu0 0.0
  %4715 = vmatpush1.msra.mxu0 0.0
  %4716 = vmatprep.subr.mxu0 0.0
  %4717 = vmatpush1.msra.mxu0 0.0
  %4718 = vmatprep.subr.mxu0 0.0
  %4719 = vmatpush1.msra.mxu0 0.0
  %4720 = vmatprep.subr.mxu0 0.0
  %4721 = vmatpush1.msra.mxu0 0.0
  %4722 = vmatprep.subr.mxu0 0.0
  %4723 = vmatpush1.msra.mxu0 0.0
  %4724 = vmatprep.subr.mxu0 0.0
  %4725 = vmatpush1.msra.mxu0 0.0
  %4726 = vmatprep.subr.mxu0 0.0
  %4727 = vmatpush1.msra.mxu0 0.0
  %4728 = vmatprep.subr.mxu0 0.0
  %4729 = vmatpush1.msra.mxu0 0.0
  %4730 = vmatprep.mubr.f32.mxu0 0.0
  %4731 = vmatmul.mubr.f32.gmra.mrb[0].mxu0 %v2011
  %v4732 = vpop.f32.mrb[0].mxu0
  %v4733 = vadd.f32 0.0, %v4732
  %v4734 = vpop.f32.mrb[0].mxu0
  %v4735 = vadd.f32 0.0, %v4734
  %4736 = vmatprep.mubr.f32.mxu0 0.0
  %4737 = vmatmul.mubr.f32.gmra.mrb[0].mxu0 %v2014
  %v4738 = vpop.f32.mrb[0].mxu0
  %v4739 = vadd.f32 0.0, %v4738
  %v4740 = vpop.f32.mrb[0].mxu0
  %v4741 = vadd.f32 0.0, %v4740
  %4742 = vmatprep.mubr.f32.mxu0 0.0
  %4743 = vmatmul.mubr.f32.gmra.mrb[0].mxu0 %v2017
  %v4744 = vpop.f32.mrb[0].mxu0
  %v4745 = vadd.f32 0.0, %v4744
  %v4746 = vpop.f32.mrb[0].mxu0
  %v4747 = vadd.f32 0.0, %v4746
  %4748 = vmatprep.mubr.f32.mxu0 0.0
  %4749 = vmatmul.mubr.f32.gmra.mrb[0].mxu0 %v2020
  %v4750 = vpop.f32.mrb[0].mxu0
  %v4751 = vadd.f32 0.0, %v4750
  %v4752 = vpop.f32.mrb[0].mxu0
  %v4753 = vadd.f32 0.0, %v4752
  %4754 = vdwg.mxu0
  %4755 = vmatprep.subr.mxu0 %v4664
  %4756 = vmatpush1.msra.mxu0 %v4662
  %4757 = vmatprep.subr.mxu0 0.0
  %4758 = vmatpush1.msra.mxu0 0.0
  %4759 = vmatprep.subr.mxu0 0.0
  %4760 = vmatpush1.msra.mxu0 0.0
  %4761 = vmatprep.subr.mxu0 0.0
  %4762 = vmatpush1.msra.mxu0 0.0
  %4763 = vmatprep.subr.mxu0 0.0
  %4764 = vmatpush1.msra.mxu0 0.0
  %4765 = vmatprep.subr.mxu0 0.0
  %4766 = vmatpush1.msra.mxu0 0.0
  %4767 = vmatprep.subr.mxu0 0.0
  %4768 = vmatpush1.msra.mxu0 0.0
  %4769 = vmatprep.subr.mxu0 0.0
  %4770 = vmatpush1.msra.mxu0 0.0
  %4771 = vmatprep.subr.mxu0 0.0
  %4772 = vmatpush1.msra.mxu0 0.0
  %4773 = vmatprep.subr.mxu0 0.0
  %4774 = vmatpush1.msra.mxu0 0.0
  %4775 = vmatprep.subr.mxu0 0.0
  %4776 = vmatpush1.msra.mxu0 0.0
  %4777 = vmatprep.subr.mxu0 0.0
  %4778 = vmatpush1.msra.mxu0 0.0
  %4779 = vmatprep.subr.mxu0 0.0
  %4780 = vmatpush1.msra.mxu0 0.0
  %4781 = vmatprep.subr.mxu0 0.0
  %4782 = vmatpush1.msra.mxu0 0.0
  %4783 = vmatprep.subr.mxu0 0.0
  %4784 = vmatpush1.msra.mxu0 0.0
  %4785 = vmatprep.subr.mxu0 0.0
  %4786 = vmatpush1.msra.mxu0 0.0
  %4787 = vmatprep.subr.mxu0 0.0
  %4788 = vmatpush1.msra.mxu0 0.0
  %4789 = vmatprep.subr.mxu0 0.0
  %4790 = vmatpush1.msra.mxu0 0.0
  %4791 = vmatprep.subr.mxu0 0.0
  %4792 = vmatpush1.msra.mxu0 0.0
  %4793 = vmatprep.subr.mxu0 0.0
  %4794 = vmatpush1.msra.mxu0 0.0
  %4795 = vmatprep.subr.mxu0 0.0
  %4796 = vmatpush1.msra.mxu0 0.0
  %4797 = vmatprep.subr.mxu0 0.0
  %4798 = vmatpush1.msra.mxu0 0.0
  %4799 = vmatprep.subr.mxu0 0.0
  %4800 = vmatpush1.msra.mxu0 0.0
  %4801 = vmatprep.subr.mxu0 0.0
  %4802 = vmatpush1.msra.mxu0 0.0
  %4803 = vmatprep.subr.mxu0 0.0
  %4804 = vmatpush1.msra.mxu0 0.0
  %4805 = vmatprep.subr.mxu0 0.0
  %4806 = vmatpush1.msra.mxu0 0.0
  %4807 = vmatprep.subr.mxu0 0.0
  %4808 = vmatpush1.msra.mxu0 0.0
  %4809 = vmatprep.subr.mxu0 0.0
  %4810 = vmatpush1.msra.mxu0 0.0
  %4811 = vmatprep.subr.mxu0 0.0
  %4812 = vmatpush1.msra.mxu0 0.0
  %4813 = vmatprep.subr.mxu0 0.0
  %4814 = vmatpush1.msra.mxu0 0.0
  %4815 = vmatprep.subr.mxu0 0.0
  %4816 = vmatpush1.msra.mxu0 0.0
  %4817 = vmatprep.subr.mxu0 0.0
  %4818 = vmatpush1.msra.mxu0 0.0
  %4819 = vmatprep.mubr.f32.mxu0 0.0
  %4820 = vmatmul.mubr.f32.gmra.mrb[0].mxu0 %v2011
  %v4821 = vpop.f32.mrb[0].mxu0
  %v4822 = vadd.f32 0.0, %v4821
  %v4823 = vpop.f32.mrb[0].mxu0
  %v4824 = vadd.f32 0.0, %v4823
  %4825 = vmatprep.mubr.f32.mxu0 0.0
  %4826 = vmatmul.mubr.f32.gmra.mrb[0].mxu0 %v2014
  %v4827 = vpop.f32.mrb[0].mxu0
  %v4828 = vadd.f32 0.0, %v4827
  %v4829 = vpop.f32.mrb[0].mxu0
  %v4830 = vadd.f32 0.0, %v4829
  %4831 = vmatprep.mubr.f32.mxu0 0.0
  %4832 = vmatmul.mubr.f32.gmra.mrb[0].mxu0 %v2017
  %v4833 = vpop.f32.mrb[0].mxu0
  %v4834 = vadd.f32 0.0, %v4833
  %v4835 = vpop.f32.mrb[0].mxu0
  %v4836 = vadd.f32 0.0, %v4835
  %4837 = vmatprep.mubr.f32.mxu0 0.0
  %4838 = vmatmul.mubr.f32.gmra.mrb[0].mxu0 %v2020
  %v4839 = vpop.f32.mrb[0].mxu0
  %v4840 = vadd.f32 0.0, %v4839
  %v4841 = vpop.f32.mrb[0].mxu0
  %v4842 = vadd.f32 0.0, %v4841
  %4843 = vdwg.mxu0
  %v4844 = vmul.f32 %v4733, %v4583
  %v4845 = vmul.f32 %v4735, %v4585
  %v4846 = vmul.f32 %v4822, %v4636
  %v4847 = vmul.f32 %v4824, %v4638
  %v4848 = vmul.f32 %v4739, %v4587
  %v4849 = vmul.f32 %v4741, %v4589
  %v4850 = vmul.f32 %v4828, %v4640
  %v4851 = vmul.f32 %v4830, %v4642
  %v4852 = vmul.f32 %v4745, %v4593
  %v4853 = vmul.f32 %v4747, %v4595
  %v4854 = vmul.f32 %v4834, %v4646
  %v4855 = vmul.f32 %v4836, %v4648
  %v4856 = vmul.f32 %v4751, %v4597
  %v4857 = vmul.f32 %v4753, %v4599
  %v4858 = vmul.f32 %v4840, %v4650
  %v4859 = vmul.f32 %v4842, %v4652
  %v4860 = vadd.f32 %v4484, %v4844
  %v4861 = vadd.f32 %v4485, %v4845
  %v4862 = vadd.f32 %v4486, %v4846
  %v4863 = vadd.f32 %v4487, %v4847
  %v4864 = vadd.f32 %v4488, %v4848
  %v4865 = vadd.f32 %v4489, %v4849
  %v4866 = vadd.f32 %v4490, %v4850
  %v4867 = vadd.f32 %v4491, %v4851
  %v4868 = vadd.f32 %v4492, %v4852
  %v4869 = vadd.f32 %v4493, %v4853
  %v4870 = vadd.f32 %v4494, %v4854
  %v4871 = vadd.f32 %v4495, %v4855
  %v4872 = vadd.f32 %v4496, %v4856
  %v4873 = vadd.f32 %v4497, %v4857
  %v4874 = vadd.f32 %v4498, %v4858
  %v4875 = vadd.f32 %v4499, %v4859
  %4876 = vmatprep.subr.bf16.mxu0 %v473
  %4877 = vmatpush1.bf16.msra.mxu0 %v472
  %4878 = vmatprep.subr.bf16.mxu0 %v477
  %4879 = vmatpush1.bf16.msra.mxu0 %v476
  %4880 = vmatprep.subr.bf16.mxu0 0
  %4881 = vmatpush1.bf16.msra.mxu0 0
  %4882 = vmatprep.subr.bf16.mxu0 0
  %4883 = vmatpush1.bf16.msra.mxu0 0
  %4884 = vmatprep.subr.bf16.mxu0 0
  %4885 = vmatpush1.bf16.msra.mxu0 0
  %4886 = vmatprep.subr.bf16.mxu0 0
  %4887 = vmatpush1.bf16.msra.mxu0 0
  %4888 = vmatprep.subr.bf16.mxu0 0
  %4889 = vmatpush1.bf16.msra.mxu0 0
  %4890 = vmatprep.subr.bf16.mxu0 0
  %4891 = vmatpush1.bf16.msra.mxu0 0
  %4892 = vmatprep.subr.bf16.mxu0 0
  %4893 = vmatpush1.bf16.msra.mxu0 0
  %4894 = vmatprep.subr.bf16.mxu0 0
  %4895 = vmatpush1.bf16.msra.mxu0 0
  %4896 = vmatprep.subr.bf16.mxu0 0
  %4897 = vmatpush1.bf16.msra.mxu0 0
  %4898 = vmatprep.subr.bf16.mxu0 0
  %4899 = vmatpush1.bf16.msra.mxu0 0
  %4900 = vmatprep.subr.bf16.mxu0 0
  %4901 = vmatpush1.bf16.msra.mxu0 0
  %4902 = vmatprep.subr.bf16.mxu0 0
  %4903 = vmatpush1.bf16.msra.mxu0 0
  %4904 = vmatprep.subr.bf16.mxu0 0
  %4905 = vmatpush1.bf16.msra.mxu0 0
  %4906 = vmatprep.subr.bf16.mxu0 0
  %4907 = vmatpush1.bf16.msra.mxu0 0
  %4908 = vmatprep.mubr.bf16.mxu0 0
  %4909 = vmatmul.mubr.bf16.gmra.mrb[0].mxu0 %v1894
  %v4910 = vpop.f32.mrb[0].mxu0
  %v4911 = vadd.f32 0.0, %v4910
  %v4912 = vpop.f32.mrb[0].mxu0
  %v4913 = vadd.f32 0.0, %v4912
  %v4914 = vpop.f32.mrb[0].mxu0
  %v4915 = vadd.f32 0.0, %v4914
  %v4916 = vpop.f32.mrb[0].mxu0
  %v4917 = vadd.f32 0.0, %v4916
  %4918 = vmatprep.mubr.bf16.mxu0 0
  %4919 = vmatmul.mubr.bf16.gmra.mrb[0].mxu0 %v1897
  %v4920 = vpop.f32.mrb[0].mxu0
  %v4921 = vadd.f32 0.0, %v4920
  %v4922 = vpop.f32.mrb[0].mxu0
  %v4923 = vadd.f32 0.0, %v4922
  %v4924 = vpop.f32.mrb[0].mxu0
  %v4925 = vadd.f32 0.0, %v4924
  %v4926 = vpop.f32.mrb[0].mxu0
  %v4927 = vadd.f32 0.0, %v4926
  %4928 = vdwg.mxu0
  %4929 = vmatprep.subr.bf16.mxu0 %v475
  %4930 = vmatpush1.bf16.msra.mxu0 %v474
  %4931 = vmatprep.subr.bf16.mxu0 %v479
  %4932 = vmatpush1.bf16.msra.mxu0 %v478
  %4933 = vmatprep.subr.bf16.mxu0 0
  %4934 = vmatpush1.bf16.msra.mxu0 0
  %4935 = vmatprep.subr.bf16.mxu0 0
  %4936 = vmatpush1.bf16.msra.mxu0 0
  %4937 = vmatprep.subr.bf16.mxu0 0
  %4938 = vmatpush1.bf16.msra.mxu0 0
  %4939 = vmatprep.subr.bf16.mxu0 0
  %4940 = vmatpush1.bf16.msra.mxu0 0
  %4941 = vmatprep.subr.bf16.mxu0 0
  %4942 = vmatpush1.bf16.msra.mxu0 0
  %4943 = vmatprep.subr.bf16.mxu0 0
  %4944 = vmatpush1.bf16.msra.mxu0 0
  %4945 = vmatprep.subr.bf16.mxu0 0
  %4946 = vmatpush1.bf16.msra.mxu0 0
  %4947 = vmatprep.subr.bf16.mxu0 0
  %4948 = vmatpush1.bf16.msra.mxu0 0
  %4949 = vmatprep.subr.bf16.mxu0 0
  %4950 = vmatpush1.bf16.msra.mxu0 0
  %4951 = vmatprep.subr.bf16.mxu0 0
  %4952 = vmatpush1.bf16.msra.mxu0 0
  %4953 = vmatprep.subr.bf16.mxu0 0
  %4954 = vmatpush1.bf16.msra.mxu0 0
  %4955 = vmatprep.subr.bf16.mxu0 0
  %4956 = vmatpush1.bf16.msra.mxu0 0
  %4957 = vmatprep.subr.bf16.mxu0 0
  %4958 = vmatpush1.bf16.msra.mxu0 0
  %4959 = vmatprep.subr.bf16.mxu0 0
  %4960 = vmatpush1.bf16.msra.mxu0 0
  %4961 = vmatprep.mubr.bf16.mxu0 0
  %4962 = vmatmul.mubr.bf16.gmra.mrb[0].mxu0 %v1894
  %v4963 = vpop.f32.mrb[0].mxu0
  %v4964 = vadd.f32 0.0, %v4963
  %v4965 = vpop.f32.mrb[0].mxu0
  %v4966 = vadd.f32 0.0, %v4965
  %v4967 = vpop.f32.mrb[0].mxu0
  %v4968 = vadd.f32 0.0, %v4967
  %v4969 = vpop.f32.mrb[0].mxu0
  %v4970 = vadd.f32 0.0, %v4969
  %4971 = vmatprep.mubr.bf16.mxu0 0
  %4972 = vmatmul.mubr.bf16.gmra.mrb[0].mxu0 %v1897
  %v4973 = vpop.f32.mrb[0].mxu0
  %v4974 = vadd.f32 0.0, %v4973
  %v4975 = vpop.f32.mrb[0].mxu0
  %v4976 = vadd.f32 0.0, %v4975
  %v4977 = vpop.f32.mrb[0].mxu0
  %v4978 = vadd.f32 0.0, %v4977
  %v4979 = vpop.f32.mrb[0].mxu0
  %v4980 = vadd.f32 0.0, %v4979
  %4981 = vdwg.mxu0
  %v4983 = vsel %vm1141, %v1489, 0
  %v4986 = vsel %vm1141, %v1490, 0
  %v4989 = vsel %vm1141, %v1829, 0
  %v4992 = vsel %vm1141, %v1830, 0
  %4994 = vmatprep.subr.mxu0 %v4986
  %4995 = vmatpush1.msra.mxu0 %v4983
  %4996 = vmatprep.subr.mxu0 0.0
  %4997 = vmatpush1.msra.mxu0 0.0
  %4998 = vmatprep.subr.mxu0 0.0
  %4999 = vmatpush1.msra.mxu0 0.0
  %5000 = vmatprep.subr.mxu0 0.0
  %5001 = vmatpush1.msra.mxu0 0.0
  %5002 = vmatprep.subr.mxu0 0.0
  %5003 = vmatpush1.msra.mxu0 0.0
  %5004 = vmatprep.subr.mxu0 0.0
  %5005 = vmatpush1.msra.mxu0 0.0
  %5006 = vmatprep.subr.mxu0 0.0
  %5007 = vmatpush1.msra.mxu0 0.0
  %5008 = vmatprep.subr.mxu0 0.0
  %5009 = vmatpush1.msra.mxu0 0.0
  %5010 = vmatprep.subr.mxu0 0.0
  %5011 = vmatpush1.msra.mxu0 0.0
  %5012 = vmatprep.subr.mxu0 0.0
  %5013 = vmatpush1.msra.mxu0 0.0
  %5014 = vmatprep.subr.mxu0 0.0
  %5015 = vmatpush1.msra.mxu0 0.0
  %5016 = vmatprep.subr.mxu0 0.0
  %5017 = vmatpush1.msra.mxu0 0.0
  %5018 = vmatprep.subr.mxu0 0.0
  %5019 = vmatpush1.msra.mxu0 0.0
  %5020 = vmatprep.subr.mxu0 0.0
  %5021 = vmatpush1.msra.mxu0 0.0
  %5022 = vmatprep.subr.mxu0 0.0
  %5023 = vmatpush1.msra.mxu0 0.0
  %5024 = vmatprep.subr.mxu0 0.0
  %5025 = vmatpush1.msra.mxu0 0.0
  %5026 = vmatprep.subr.mxu0 0.0
  %5027 = vmatpush1.msra.mxu0 0.0
  %5028 = vmatprep.subr.mxu0 0.0
  %5029 = vmatpush1.msra.mxu0 0.0
  %5030 = vmatprep.subr.mxu0 0.0
  %5031 = vmatpush1.msra.mxu0 0.0
  %5032 = vmatprep.subr.mxu0 0.0
  %5033 = vmatpush1.msra.mxu0 0.0
  %5034 = vmatprep.subr.mxu0 0.0
  %5035 = vmatpush1.msra.mxu0 0.0
  %5036 = vmatprep.subr.mxu0 0.0
  %5037 = vmatpush1.msra.mxu0 0.0
  %5038 = vmatprep.subr.mxu0 0.0
  %5039 = vmatpush1.msra.mxu0 0.0
  %5040 = vmatprep.subr.mxu0 0.0
  %5041 = vmatpush1.msra.mxu0 0.0
  %5042 = vmatprep.subr.mxu0 0.0
  %5043 = vmatpush1.msra.mxu0 0.0
  %5044 = vmatprep.subr.mxu0 0.0
  %5045 = vmatpush1.msra.mxu0 0.0
  %5046 = vmatprep.subr.mxu0 0.0
  %5047 = vmatpush1.msra.mxu0 0.0
  %5048 = vmatprep.subr.mxu0 0.0
  %5049 = vmatpush1.msra.mxu0 0.0
  %5050 = vmatprep.subr.mxu0 0.0
  %5051 = vmatpush1.msra.mxu0 0.0
  %5052 = vmatprep.subr.mxu0 0.0
  %5053 = vmatpush1.msra.mxu0 0.0
  %5054 = vmatprep.subr.mxu0 0.0
  %5055 = vmatpush1.msra.mxu0 0.0
  %5056 = vmatprep.subr.mxu0 0.0
  %5057 = vmatpush1.msra.mxu0 0.0
  %5058 = vmatprep.mubr.f32.mxu0 0.0
  %5059 = vmatmul.mubr.f32.gmra.mrb[0].mxu0 %v2011
  %v5060 = vpop.f32.mrb[0].mxu0
  %v5061 = vadd.f32 0.0, %v5060
  %v5062 = vpop.f32.mrb[0].mxu0
  %v5063 = vadd.f32 0.0, %v5062
  %5064 = vmatprep.mubr.f32.mxu0 0.0
  %5065 = vmatmul.mubr.f32.gmra.mrb[0].mxu0 %v2014
  %v5066 = vpop.f32.mrb[0].mxu0
  %v5067 = vadd.f32 0.0, %v5066
  %v5068 = vpop.f32.mrb[0].mxu0
  %v5069 = vadd.f32 0.0, %v5068
  %5070 = vmatprep.mubr.f32.mxu0 0.0
  %5071 = vmatmul.mubr.f32.gmra.mrb[0].mxu0 %v2017
  %v5072 = vpop.f32.mrb[0].mxu0
  %v5073 = vadd.f32 0.0, %v5072
  %v5074 = vpop.f32.mrb[0].mxu0
  %v5075 = vadd.f32 0.0, %v5074
  %5076 = vmatprep.mubr.f32.mxu0 0.0
  %5077 = vmatmul.mubr.f32.gmra.mrb[0].mxu0 %v2020
  %v5078 = vpop.f32.mrb[0].mxu0
  %v5079 = vadd.f32 0.0, %v5078
  %v5080 = vpop.f32.mrb[0].mxu0
  %v5081 = vadd.f32 0.0, %v5080
  %5082 = vdwg.mxu0
  %5083 = vmatprep.subr.mxu0 %v4992
  %5084 = vmatpush1.msra.mxu0 %v4989
  %5085 = vmatprep.subr.mxu0 0.0
  %5086 = vmatpush1.msra.mxu0 0.0
  %5087 = vmatprep.subr.mxu0 0.0
  %5088 = vmatpush1.msra.mxu0 0.0
  %5089 = vmatprep.subr.mxu0 0.0
  %5090 = vmatpush1.msra.mxu0 0.0
  %5091 = vmatprep.subr.mxu0 0.0
  %5092 = vmatpush1.msra.mxu0 0.0
  %5093 = vmatprep.subr.mxu0 0.0
  %5094 = vmatpush1.msra.mxu0 0.0
  %5095 = vmatprep.subr.mxu0 0.0
  %5096 = vmatpush1.msra.mxu0 0.0
  %5097 = vmatprep.subr.mxu0 0.0
  %5098 = vmatpush1.msra.mxu0 0.0
  %5099 = vmatprep.subr.mxu0 0.0
  %5100 = vmatpush1.msra.mxu0 0.0
  %5101 = vmatprep.subr.mxu0 0.0
  %5102 = vmatpush1.msra.mxu0 0.0
  %5103 = vmatprep.subr.mxu0 0.0
  %5104 = vmatpush1.msra.mxu0 0.0
  %5105 = vmatprep.subr.mxu0 0.0
  %5106 = vmatpush1.msra.mxu0 0.0
  %5107 = vmatprep.subr.mxu0 0.0
  %5108 = vmatpush1.msra.mxu0 0.0
  %5109 = vmatprep.subr.mxu0 0.0
  %5110 = vmatpush1.msra.mxu0 0.0
  %5111 = vmatprep.subr.mxu0 0.0
  %5112 = vmatpush1.msra.mxu0 0.0
  %5113 = vmatprep.subr.mxu0 0.0
  %5114 = vmatpush1.msra.mxu0 0.0
  %5115 = vmatprep.subr.mxu0 0.0
  %5116 = vmatpush1.msra.mxu0 0.0
  %5117 = vmatprep.subr.mxu0 0.0
  %5118 = vmatpush1.msra.mxu0 0.0
  %5119 = vmatprep.subr.mxu0 0.0
  %5120 = vmatpush1.msra.mxu0 0.0
  %5121 = vmatprep.subr.mxu0 0.0
  %5122 = vmatpush1.msra.mxu0 0.0
  %5123 = vmatprep.subr.mxu0 0.0
  %5124 = vmatpush1.msra.mxu0 0.0
  %5125 = vmatprep.subr.mxu0 0.0
  %5126 = vmatpush1.msra.mxu0 0.0
  %5127 = vmatprep.subr.mxu0 0.0
  %5128 = vmatpush1.msra.mxu0 0.0
  %5129 = vmatprep.subr.mxu0 0.0
  %5130 = vmatpush1.msra.mxu0 0.0
  %5131 = vmatprep.subr.mxu0 0.0
  %5132 = vmatpush1.msra.mxu0 0.0
  %5133 = vmatprep.subr.mxu0 0.0
  %5134 = vmatpush1.msra.mxu0 0.0
  %5135 = vmatprep.subr.mxu0 0.0
  %5136 = vmatpush1.msra.mxu0 0.0
  %5137 = vmatprep.subr.mxu0 0.0
  %5138 = vmatpush1.msra.mxu0 0.0
  %5139 = vmatprep.subr.mxu0 0.0
  %5140 = vmatpush1.msra.mxu0 0.0
  %5141 = vmatprep.subr.mxu0 0.0
  %5142 = vmatpush1.msra.mxu0 0.0
  %5143 = vmatprep.subr.mxu0 0.0
  %5144 = vmatpush1.msra.mxu0 0.0
  %5145 = vmatprep.subr.mxu0 0.0
  %5146 = vmatpush1.msra.mxu0 0.0
  %5147 = vmatprep.mubr.f32.mxu0 0.0
  %5148 = vmatmul.mubr.f32.gmra.mrb[0].mxu0 %v2011
  %v5149 = vpop.f32.mrb[0].mxu0
  %v5150 = vadd.f32 0.0, %v5149
  %v5151 = vpop.f32.mrb[0].mxu0
  %v5152 = vadd.f32 0.0, %v5151
  %5153 = vmatprep.mubr.f32.mxu0 0.0
  %5154 = vmatmul.mubr.f32.gmra.mrb[0].mxu0 %v2014
  %v5155 = vpop.f32.mrb[0].mxu0
  %v5156 = vadd.f32 0.0, %v5155
  %v5157 = vpop.f32.mrb[0].mxu0
  %v5158 = vadd.f32 0.0, %v5157
  %5159 = vmatprep.mubr.f32.mxu0 0.0
  %5160 = vmatmul.mubr.f32.gmra.mrb[0].mxu0 %v2017
  %v5161 = vpop.f32.mrb[0].mxu0
  %v5162 = vadd.f32 0.0, %v5161
  %v5163 = vpop.f32.mrb[0].mxu0
  %v5164 = vadd.f32 0.0, %v5163
  %5165 = vmatprep.mubr.f32.mxu0 0.0
  %5166 = vmatmul.mubr.f32.gmra.mrb[0].mxu0 %v2020
  %v5167 = vpop.f32.mrb[0].mxu0
  %v5168 = vadd.f32 0.0, %v5167
  %v5169 = vpop.f32.mrb[0].mxu0
  %v5170 = vadd.f32 0.0, %v5169
  %5171 = vdwg.mxu0
  %v5172 = vmul.f32 %v5061, %v4911
  %v5173 = vmul.f32 %v5063, %v4913
  %v5174 = vmul.f32 %v5150, %v4964
  %v5175 = vmul.f32 %v5152, %v4966
  %v5176 = vmul.f32 %v5067, %v4915
  %v5177 = vmul.f32 %v5069, %v4917
  %v5178 = vmul.f32 %v5156, %v4968
  %v5179 = vmul.f32 %v5158, %v4970
  %v5180 = vmul.f32 %v5073, %v4921
  %v5181 = vmul.f32 %v5075, %v4923
  %v5182 = vmul.f32 %v5162, %v4974
  %v5183 = vmul.f32 %v5164, %v4976
  %v5184 = vmul.f32 %v5079, %v4925
  %v5185 = vmul.f32 %v5081, %v4927
  %v5186 = vmul.f32 %v5168, %v4978
  %v5187 = vmul.f32 %v5170, %v4980
  %v5188 = vadd.f32 %v4860, %v5172
  %v5189 = vadd.f32 %v4861, %v5173
  %v5190 = vadd.f32 %v4862, %v5174
  %v5191 = vadd.f32 %v4863, %v5175
  %v5192 = vadd.f32 %v4864, %v5176
  %v5193 = vadd.f32 %v4865, %v5177
  %v5194 = vadd.f32 %v4866, %v5178
  %v5195 = vadd.f32 %v4867, %v5179
  %v5196 = vadd.f32 %v4868, %v5180
  %v5197 = vadd.f32 %v4869, %v5181
  %v5198 = vadd.f32 %v4870, %v5182
  %v5199 = vadd.f32 %v4871, %v5183
  %v5200 = vadd.f32 %v4872, %v5184
  %v5201 = vadd.f32 %v4873, %v5185
  %v5202 = vadd.f32 %v4874, %v5186
  %v5203 = vadd.f32 %v4875, %v5187
  %v5204 = vsub.f32 0.0, %v5188
  %v5205 = vsub.f32 0.0, %v5189
  %v5206 = vsub.f32 0.0, %v5190
  %v5207 = vsub.f32 0.0, %v5191
  %v5208 = vsub.f32 0.0, %v5192
  %v5209 = vsub.f32 0.0, %v5193
  %v5210 = vsub.f32 0.0, %v5194
  %v5211 = vsub.f32 0.0, %v5195
  %v5212 = vsub.f32 0.0, %v5196
  %v5213 = vsub.f32 0.0, %v5197
  %v5214 = vsub.f32 0.0, %v5198
  %v5215 = vsub.f32 0.0, %v5199
  %v5216 = vsub.f32 0.0, %v5200
  %v5217 = vsub.f32 0.0, %v5201
  %v5218 = vsub.f32 0.0, %v5202
  %v5219 = vsub.f32 0.0, %v5203
  %v5220 = vmul.f32 %v5204, 1.442695
  %v5221 = vpow.pop %v5220
  %v5222 = vmul.f32 %v5205, 1.442695
  %v5223 = vpow.pop %v5222
  %v5224 = vmul.f32 %v5206, 1.442695
  %v5225 = vpow.pop %v5224
  %v5226 = vmul.f32 %v5207, 1.442695
  %v5227 = vpow.pop %v5226
  %v5228 = vmul.f32 %v5208, 1.442695
  %v5229 = vpow.pop %v5228
  %v5230 = vmul.f32 %v5209, 1.442695
  %v5231 = vpow.pop %v5230
  %v5232 = vmul.f32 %v5210, 1.442695
  %v5233 = vpow.pop %v5232
  %v5234 = vmul.f32 %v5211, 1.442695
  %v5235 = vpow.pop %v5234
  %v5236 = vmul.f32 %v5212, 1.442695
  %v5237 = vpow.pop %v5236
  %v5238 = vmul.f32 %v5213, 1.442695
  %v5239 = vpow.pop %v5238
  %v5240 = vmul.f32 %v5214, 1.442695
  %v5241 = vpow.pop %v5240
  %v5242 = vmul.f32 %v5215, 1.442695
  %v5243 = vpow.pop %v5242
  %v5244 = vmul.f32 %v5216, 1.442695
  %v5245 = vpow.pop %v5244
  %v5246 = vmul.f32 %v5217, 1.442695
  %v5247 = vpow.pop %v5246
  %v5248 = vmul.f32 %v5218, 1.442695
  %v5249 = vpow.pop %v5248
  %v5250 = vmul.f32 %v5219, 1.442695
  %v5251 = vpow.pop %v5250
  %v5252 = vadd.f32 %v5221, 1.0
  %v5253 = vadd.f32 %v5223, 1.0
  %v5254 = vadd.f32 %v5225, 1.0
  %v5255 = vadd.f32 %v5227, 1.0
  %v5256 = vadd.f32 %v5229, 1.0
  %v5257 = vadd.f32 %v5231, 1.0
  %v5258 = vadd.f32 %v5233, 1.0
  %v5259 = vadd.f32 %v5235, 1.0
  %v5260 = vadd.f32 %v5237, 1.0
  %v5261 = vadd.f32 %v5239, 1.0
  %v5262 = vadd.f32 %v5241, 1.0
  %v5263 = vadd.f32 %v5243, 1.0
  %v5264 = vadd.f32 %v5245, 1.0
  %v5265 = vadd.f32 %v5247, 1.0
  %v5266 = vadd.f32 %v5249, 1.0
  %v5267 = vadd.f32 %v5251, 1.0
  %v5268 = vrcp.pop %v5252
  %v5269 = vrcp.pop %v5253
  %v5270 = vrcp.pop %v5254
  %v5271 = vrcp.pop %v5255
  %v5272 = vrcp.pop %v5256
  %v5273 = vrcp.pop %v5257
  %v5274 = vrcp.pop %v5258
  %v5275 = vrcp.pop %v5259
  %v5276 = vrcp.pop %v5260
  %v5277 = vrcp.pop %v5261
  %v5278 = vrcp.pop %v5262
  %v5279 = vrcp.pop %v5263
  %v5280 = vrcp.pop %v5264
  %v5281 = vrcp.pop %v5265
  %v5282 = vrcp.pop %v5266
  %v5283 = vrcp.pop %v5267
  %v5284 = vmul.f32 %v5188, %v5268
  %v5285 = vmul.f32 %v5189, %v5269
  %v5286 = vmul.f32 %v5190, %v5270
  %v5287 = vmul.f32 %v5191, %v5271
  %v5288 = vmul.f32 %v5192, %v5272
  %v5289 = vmul.f32 %v5193, %v5273
  %v5290 = vmul.f32 %v5194, %v5274
  %v5291 = vmul.f32 %v5195, %v5275
  %v5292 = vmul.f32 %v5196, %v5276
  %v5293 = vmul.f32 %v5197, %v5277
  %v5294 = vmul.f32 %v5198, %v5278
  %v5295 = vmul.f32 %v5199, %v5279
  %v5296 = vmul.f32 %v5200, %v5280
  %v5297 = vmul.f32 %v5201, %v5281
  %v5298 = vmul.f32 %v5202, %v5282
  %v5299 = vmul.f32 %v5203, %v5283
  %v5300 = vadd.f32 %v5284, %v814
  %v5301 = vadd.f32 %v5285, %v815
  %v5302 = vadd.f32 %v5288, %v818
  %v5303 = vadd.f32 %v5289, %v819
  %v5304 = vadd.f32 %v5292, %v822
  %v5305 = vadd.f32 %v5293, %v823
  %v5306 = vadd.f32 %v5296, %v826
  %v5307 = vadd.f32 %v5297, %v827
  %v5308 = vadd.f32 %v5300, %v5301
  %5309 = vadd.xlane.f32.xlu0 %v5308
  %v5310 = vpop.xlane.xlu0 %5309
  %v5311 = vadd.f32 %v5302, %v5303
  %5312 = vadd.xlane.f32.xlu0 %v5311
  %v5313 = vpop.xlane.xlu0 %5312
  %v5314 = vadd.f32 %v5304, %v5305
  %5315 = vadd.xlane.f32.xlu0 %v5314
  %v5316 = vpop.xlane.xlu0 %5315
  %v5317 = vadd.f32 %v5306, %v5307
  %5318 = vadd.xlane.f32.xlu0 %v5317
  %v5319 = vpop.xlane.xlu0 %5318
  %v5320 = vmul.f32 %v5310, 0.00390625
  %v5321 = vmul.f32 %v5313, 0.00390625
  %v5322 = vmul.f32 %v5316, 0.00390625
  %v5323 = vmul.f32 %v5319, 0.00390625
  %v5324 = vld [vmem:[%s7] sm:$0xff]
  %v5325 = vld [vmem:[%s7 + $0x8] sm:$0xff]
  %v5326 = vld [vmem:[%s7 + $0x10] sm:$0xff]
  %v5327 = vld [vmem:[%s7 + $0x18] sm:$0xff]
  %v5329 = vsel %vm552, %v5324, 0
  %v5332 = vsel %vm552, %v5325, 0
  %v5335 = vsel %vm552, %v5326, 0
  %v5338 = vsel %vm552, %v5327, 0
  %5340 = vmatprep.subr.mxu0 0.0
  %5341 = vmatpush1.msra.mxu0 %v5320
  %5342 = vmatprep.subr.mxu0 0.0
  %5343 = vmatpush1.msra.mxu0 %v5321
  %5344 = vmatprep.subr.mxu0 0.0
  %5345 = vmatpush1.msra.mxu0 %v5322
  %5346 = vmatprep.subr.mxu0 0.0
  %5347 = vmatpush1.msra.mxu0 %v5323
  %5348 = vmatprep.subr.mxu0 0.0
  %5349 = vmatpush1.msra.mxu0 0.0
  %5350 = vmatprep.subr.mxu0 0.0
  %5351 = vmatpush1.msra.mxu0 0.0
  %5352 = vmatprep.subr.mxu0 0.0
  %5353 = vmatpush1.msra.mxu0 0.0
  %5354 = vmatprep.subr.mxu0 0.0
  %5355 = vmatpush1.msra.mxu0 0.0
  %5356 = vmatprep.subr.mxu0 0.0
  %5357 = vmatpush1.msra.mxu0 0.0
  %5358 = vmatprep.subr.mxu0 0.0
  %5359 = vmatpush1.msra.mxu0 0.0
  %5360 = vmatprep.subr.mxu0 0.0
  %5361 = vmatpush1.msra.mxu0 0.0
  %5362 = vmatprep.subr.mxu0 0.0
  %5363 = vmatpush1.msra.mxu0 0.0
  %5364 = vmatprep.subr.mxu0 0.0
  %5365 = vmatpush1.msra.mxu0 0.0
  %5366 = vmatprep.subr.mxu0 0.0
  %5367 = vmatpush1.msra.mxu0 0.0
  %5368 = vmatprep.subr.mxu0 0.0
  %5369 = vmatpush1.msra.mxu0 0.0
  %5370 = vmatprep.subr.mxu0 0.0
  %5371 = vmatpush1.msra.mxu0 0.0
  %5372 = vmatprep.subr.mxu0 0.0
  %5373 = vmatpush1.msra.mxu0 0.0
  %5374 = vmatprep.subr.mxu0 0.0
  %5375 = vmatpush1.msra.mxu0 0.0
  %5376 = vmatprep.subr.mxu0 0.0
  %5377 = vmatpush1.msra.mxu0 0.0
  %5378 = vmatprep.subr.mxu0 0.0
  %5379 = vmatpush1.msra.mxu0 0.0
  %5380 = vmatprep.subr.mxu0 0.0
  %5381 = vmatpush1.msra.mxu0 0.0
  %5382 = vmatprep.subr.mxu0 0.0
  %5383 = vmatpush1.msra.mxu0 0.0
  %5384 = vmatprep.subr.mxu0 0.0
  %5385 = vmatpush1.msra.mxu0 0.0
  %5386 = vmatprep.subr.mxu0 0.0
  %5387 = vmatpush1.msra.mxu0 0.0
  %5388 = vmatprep.subr.mxu0 0.0
  %5389 = vmatpush1.msra.mxu0 0.0
  %5390 = vmatprep.subr.mxu0 0.0
  %5391 = vmatpush1.msra.mxu0 0.0
  %5392 = vmatprep.subr.mxu0 0.0
  %5393 = vmatpush1.msra.mxu0 0.0
  %5394 = vmatprep.subr.mxu0 0.0
  %5395 = vmatpush1.msra.mxu0 0.0
  %5396 = vmatprep.subr.mxu0 0.0
  %5397 = vmatpush1.msra.mxu0 0.0
  %5398 = vmatprep.subr.mxu0 0.0
  %5399 = vmatpush1.msra.mxu0 0.0
  %5400 = vmatprep.subr.mxu0 0.0
  %5401 = vmatpush1.msra.mxu0 0.0
  %5402 = vmatprep.subr.mxu0 0.0
  %5403 = vmatpush1.msra.mxu0 0.0
  %5404 = vmatprep.mubr.f32.mxu0 0.0
  %5405 = vmatmul.mubr.f32.gmra.mrb[0].mxu0 %v5329
  %v5406 = vpop.f32.mrb[0].mxu0
  %v5407 = vadd.f32 %v51, %v5406
  %v5408 = vpop.f32.mrb[0].mxu0
  %5409 = vmatprep.mubr.f32.mxu0 0.0
  %5410 = vmatmul.mubr.f32.gmra.mrb[0].mxu0 %v5332
  %v5411 = vpop.f32.mrb[0].mxu0
  %v5412 = vadd.f32 %v52, %v5411
  %v5413 = vpop.f32.mrb[0].mxu0
  %5414 = vmatprep.mubr.f32.mxu0 0.0
  %5415 = vmatmul.mubr.f32.gmra.mrb[0].mxu0 %v5335
  %v5416 = vpop.f32.mrb[0].mxu0
  %v5417 = vadd.f32 %v53, %v5416
  %v5418 = vpop.f32.mrb[0].mxu0
  %5419 = vmatprep.mubr.f32.mxu0 0.0
  %5420 = vmatmul.mubr.f32.gmra.mrb[0].mxu0 %v5338
  %v5421 = vpop.f32.mrb[0].mxu0
  %v5422 = vadd.f32 %v54, %v5421
  %v5423 = vpop.f32.mrb[0].mxu0
  %5424 = vdwg.mxu0
  %v5425 = vmax.f32 %v5407, 0.0
  %v5426 = vmax.f32 %v5412, 0.0
  %v5427 = vmax.f32 %v5417, 0.0
  %v5428 = vmax.f32 %v5422, 0.0
  %v5429 = vld [vmem:[%s8] sm:$0xff]
  %v5430 = vld [vmem:[%s8 + $0x8] sm:$0xff]
  %v5431 = vld [vmem:[%s8 + $0x10] sm:$0xff]
  %v5432 = vld [vmem:[%s8 + $0x18] sm:$0xff]
  %v5433 = vld [vmem:[%s8 + $0x20] sm:$0xff]
  %v5434 = vld [vmem:[%s8 + $0x28] sm:$0xff]
  %v5435 = vld [vmem:[%s8 + $0x30] sm:$0xff]
  %v5436 = vld [vmem:[%s8 + $0x38] sm:$0xff]
  %v5438 = vsel %vm552, %v5429, 0
  %v5441 = vsel %vm552, %v5430, 0
  %v5444 = vsel %vm552, %v5431, 0
  %v5447 = vsel %vm552, %v5432, 0
  %v5450 = vsel %vm552, %v5433, 0
  %v5453 = vsel %vm552, %v5434, 0
  %v5456 = vsel %vm552, %v5435, 0
  %v5459 = vsel %vm552, %v5436, 0
  %5461 = vmatprep.subr.mxu0 0.0
  %5462 = vmatpush1.msra.mxu0 %v5425
  %5463 = vmatprep.subr.mxu0 0.0
  %5464 = vmatpush1.msra.mxu0 %v5426
  %5465 = vmatprep.subr.mxu0 0.0
  %5466 = vmatpush1.msra.mxu0 %v5427
  %5467 = vmatprep.subr.mxu0 0.0
  %5468 = vmatpush1.msra.mxu0 %v5428
  %5469 = vmatprep.subr.mxu0 0.0
  %5470 = vmatpush1.msra.mxu0 0.0
  %5471 = vmatprep.subr.mxu0 0.0
  %5472 = vmatpush1.msra.mxu0 0.0
  %5473 = vmatprep.subr.mxu0 0.0
  %5474 = vmatpush1.msra.mxu0 0.0
  %5475 = vmatprep.subr.mxu0 0.0
  %5476 = vmatpush1.msra.mxu0 0.0
  %5477 = vmatprep.subr.mxu0 0.0
  %5478 = vmatpush1.msra.mxu0 0.0
  %5479 = vmatprep.subr.mxu0 0.0
  %5480 = vmatpush1.msra.mxu0 0.0
  %5481 = vmatprep.subr.mxu0 0.0
  %5482 = vmatpush1.msra.mxu0 0.0
  %5483 = vmatprep.subr.mxu0 0.0
  %5484 = vmatpush1.msra.mxu0 0.0
  %5485 = vmatprep.subr.mxu0 0.0
  %5486 = vmatpush1.msra.mxu0 0.0
  %5487 = vmatprep.subr.mxu0 0.0
  %5488 = vmatpush1.msra.mxu0 0.0
  %5489 = vmatprep.subr.mxu0 0.0
  %5490 = vmatpush1.msra.mxu0 0.0
  %5491 = vmatprep.subr.mxu0 0.0
  %5492 = vmatpush1.msra.mxu0 0.0
  %5493 = vmatprep.subr.mxu0 0.0
  %5494 = vmatpush1.msra.mxu0 0.0
  %5495 = vmatprep.subr.mxu0 0.0
  %5496 = vmatpush1.msra.mxu0 0.0
  %5497 = vmatprep.subr.mxu0 0.0
  %5498 = vmatpush1.msra.mxu0 0.0
  %5499 = vmatprep.subr.mxu0 0.0
  %5500 = vmatpush1.msra.mxu0 0.0
  %5501 = vmatprep.subr.mxu0 0.0
  %5502 = vmatpush1.msra.mxu0 0.0
  %5503 = vmatprep.subr.mxu0 0.0
  %5504 = vmatpush1.msra.mxu0 0.0
  %5505 = vmatprep.subr.mxu0 0.0
  %5506 = vmatpush1.msra.mxu0 0.0
  %5507 = vmatprep.subr.mxu0 0.0
  %5508 = vmatpush1.msra.mxu0 0.0
  %5509 = vmatprep.subr.mxu0 0.0
  %5510 = vmatpush1.msra.mxu0 0.0
  %5511 = vmatprep.subr.mxu0 0.0
  %5512 = vmatpush1.msra.mxu0 0.0
  %5513 = vmatprep.subr.mxu0 0.0
  %5514 = vmatpush1.msra.mxu0 0.0
  %5515 = vmatprep.subr.mxu0 0.0
  %5516 = vmatpush1.msra.mxu0 0.0
  %5517 = vmatprep.subr.mxu0 0.0
  %5518 = vmatpush1.msra.mxu0 0.0
  %5519 = vmatprep.subr.mxu0 0.0
  %5520 = vmatpush1.msra.mxu0 0.0
  %5521 = vmatprep.subr.mxu0 0.0
  %5522 = vmatpush1.msra.mxu0 0.0
  %5523 = vmatprep.subr.mxu0 0.0
  %5524 = vmatpush1.msra.mxu0 0.0
  %5525 = vmatprep.mubr.f32.mxu0 0.0
  %5526 = vmatmul.mubr.f32.gmra.mrb[0].mxu0 %v5438
  %v5527 = vpop.f32.mrb[0].mxu0
  %v5528 = vadd.f32 %v55, %v5527
  %v5529 = vpop.f32.mrb[0].mxu0
  %5530 = vmatprep.mubr.f32.mxu0 0.0
  %5531 = vmatmul.mubr.f32.gmra.mrb[0].mxu0 %v5441
  %v5532 = vpop.f32.mrb[0].mxu0
  %v5533 = vadd.f32 %v56, %v5532
  %v5534 = vpop.f32.mrb[0].mxu0
  %5535 = vmatprep.mubr.f32.mxu0 0.0
  %5536 = vmatmul.mubr.f32.gmra.mrb[0].mxu0 %v5444
  %v5537 = vpop.f32.mrb[0].mxu0
  %v5538 = vadd.f32 %v57, %v5537
  %v5539 = vpop.f32.mrb[0].mxu0
  %5540 = vmatprep.mubr.f32.mxu0 0.0
  %5541 = vmatmul.mubr.f32.gmra.mrb[0].mxu0 %v5447
  %v5542 = vpop.f32.mrb[0].mxu0
  %v5543 = vadd.f32 %v58, %v5542
  %v5544 = vpop.f32.mrb[0].mxu0
  %5545 = vmatprep.mubr.f32.mxu0 0.0
  %5546 = vmatmul.mubr.f32.gmra.mrb[0].mxu0 %v5450
  %v5547 = vpop.f32.mrb[0].mxu0
  %v5548 = vadd.f32 %v59, %v5547
  %v5549 = vpop.f32.mrb[0].mxu0
  %5550 = vmatprep.mubr.f32.mxu0 0.0
  %5551 = vmatmul.mubr.f32.gmra.mrb[0].mxu0 %v5453
  %v5552 = vpop.f32.mrb[0].mxu0
  %v5553 = vadd.f32 %v60, %v5552
  %v5554 = vpop.f32.mrb[0].mxu0
  %5555 = vmatprep.mubr.f32.mxu0 0.0
  %5556 = vmatmul.mubr.f32.gmra.mrb[0].mxu0 %v5456
  %v5557 = vpop.f32.mrb[0].mxu0
  %v5558 = vadd.f32 %v61, %v5557
  %v5559 = vpop.f32.mrb[0].mxu0
  %5560 = vmatprep.mubr.f32.mxu0 0.0
  %5561 = vmatmul.mubr.f32.gmra.mrb[0].mxu0 %v5459
  %v5562 = vpop.f32.mrb[0].mxu0
  %v5563 = vadd.f32 %v62, %v5562
  %v5564 = vpop.f32.mrb[0].mxu0
  %5565 = vdwg.mxu0
  %v5566 = vsub.f32 %v5548, %v5528
  %v5567 = vsub.f32 %v5553, %v5533
  %v5568 = vsub.f32 %v5558, %v5538
  %v5569 = vsub.f32 %v5563, %v5543
  %v5570 = vmul.f32 %v5566, 1.442695
  %v5571 = vpow.pop %v5570
  %v5572 = vmul.f32 %v5567, 1.442695
  %v5573 = vpow.pop %v5572
  %v5574 = vmul.f32 %v5568, 1.442695
  %v5575 = vpow.pop %v5574
  %v5576 = vmul.f32 %v5569, 1.442695
  %v5577 = vpow.pop %v5576
  %v5578 = vadd.f32 %v5571, 1.0
  %v5579 = vadd.f32 %v5573, 1.0
  %v5580 = vadd.f32 %v5575, 1.0
  %v5581 = vadd.f32 %v5577, 1.0
  %v5582 = vrcp.pop %v5578
  %v5583 = vrcp.pop %v5579
  %v5584 = vrcp.pop %v5580
  %v5585 = vrcp.pop %v5581
  %5587 = vset.pattern.permute.xlu0 0
  %5588 = vperm.xlu0 %5587, %v5582
  %v5589 = vpop.permute.xlu0 %5588
  %5592 = vset.pattern.permute.xlu0 0
  %5593 = vperm.xlu0 %5592, %v5583
  %v5594 = vpop.permute.xlu0 %5593
  %5597 = vset.pattern.permute.xlu0 0
  %5598 = vperm.xlu0 %5597, %v5584
  %v5599 = vpop.permute.xlu0 %5598
  %5602 = vset.pattern.permute.xlu0 0
  %5603 = vperm.xlu0 %5602, %v5585
  %v5604 = vpop.permute.xlu0 %5603
  %v5606 = vmul.f32 %v5284, %v5589
  %v5607 = vmul.f32 %v5285, %v5589
  %v5608 = vmul.f32 %v5288, %v5594
  %v5609 = vmul.f32 %v5289, %v5594
  %v5610 = vmul.f32 %v5292, %v5599
  %v5611 = vmul.f32 %v5293, %v5599
  %v5612 = vmul.f32 %v5296, %v5604
  %v5613 = vmul.f32 %v5297, %v5604
  %v5614 = vsub.f32 1.0, %v5582
  %v5615 = vsub.f32 1.0, %v5583
  %v5616 = vsub.f32 1.0, %v5584
  %v5617 = vsub.f32 1.0, %v5585
  %5619 = vset.pattern.permute.xlu0 0
  %5620 = vperm.xlu0 %5619, %v5614
  %v5621 = vpop.permute.xlu0 %5620
  %5624 = vset.pattern.permute.xlu0 0
  %5625 = vperm.xlu0 %5624, %v5615
  %v5626 = vpop.permute.xlu0 %5625
  %5629 = vset.pattern.permute.xlu0 0
  %5630 = vperm.xlu0 %5629, %v5616
  %v5631 = vpop.permute.xlu0 %5630
  %5634 = vset.pattern.permute.xlu0 0
  %5635 = vperm.xlu0 %5634, %v5617
  %v5636 = vpop.permute.xlu0 %5635
  %v5638 = vmul.f32 %v814, %v5621
  %v5639 = vmul.f32 %v815, %v5621
  %v5640 = vmul.f32 %v818, %v5626
  %v5641 = vmul.f32 %v819, %v5626
  %v5642 = vmul.f32 %v822, %v5631
  %v5643 = vmul.f32 %v823, %v5631
  %v5644 = vmul.f32 %v826, %v5636
  %v5645 = vmul.f32 %v827, %v5636
  %v5646 = vadd.f32 %v5606, %v5638
  %v5647 = vadd.f32 %v5607, %v5639
  %v5648 = vadd.f32 %v5608, %v5640
  %v5649 = vadd.f32 %v5609, %v5641
  %v5650 = vadd.f32 %v5610, %v5642
  %v5651 = vadd.f32 %v5611, %v5643
  %v5652 = vadd.f32 %v5612, %v5644
  %v5653 = vadd.f32 %v5613, %v5645
  %5654 = vst [vmem:[%s10] sm:$0xff] %v5646
  %5655 = vst [vmem:[%s10 + $0x8] sm:$0xff] %v5647
  %5656 = vst [vmem:[%s10 + $0x10] sm:$0xff] %v5648
  %5657 = vst [vmem:[%s10 + $0x18] sm:$0xff] %v5649
  %5658 = vst [vmem:[%s10 + $0x20] sm:$0xff] %v5650
  %5659 = vst [vmem:[%s10 + $0x28] sm:$0xff] %v5651
  %5660 = vst [vmem:[%s10 + $0x30] sm:$0xff] %v5652
  %5661 = vst [vmem:[%s10 + $0x38] sm:$0xff] %v5653
  %v5662 = vadd.f32 %v5286, %v816
  %v5663 = vadd.f32 %v5287, %v817
  %v5664 = vadd.f32 %v5290, %v820
  %v5665 = vadd.f32 %v5291, %v821
  %v5666 = vadd.f32 %v5294, %v824
  %v5667 = vadd.f32 %v5295, %v825
  %v5668 = vadd.f32 %v5298, %v828
  %v5669 = vadd.f32 %v5299, %v829
  %v5670 = vadd.f32 %v5662, %v5663
  %5671 = vadd.xlane.f32.xlu0 %v5670
  %v5672 = vpop.xlane.xlu0 %5671
  %v5673 = vadd.f32 %v5664, %v5665
  %5674 = vadd.xlane.f32.xlu0 %v5673
  %v5675 = vpop.xlane.xlu0 %5674
  %v5676 = vadd.f32 %v5666, %v5667
  %5677 = vadd.xlane.f32.xlu0 %v5676
  %v5678 = vpop.xlane.xlu0 %5677
  %v5679 = vadd.f32 %v5668, %v5669
  %5680 = vadd.xlane.f32.xlu0 %v5679
  %v5681 = vpop.xlane.xlu0 %5680
  %v5682 = vmul.f32 %v5672, 0.00390625
  %v5683 = vmul.f32 %v5675, 0.00390625
  %v5684 = vmul.f32 %v5678, 0.00390625
  %v5685 = vmul.f32 %v5681, 0.00390625
  %v5686 = vld [vmem:[%s7] sm:$0xff]
  %v5687 = vld [vmem:[%s7 + $0x8] sm:$0xff]
  %v5688 = vld [vmem:[%s7 + $0x10] sm:$0xff]
  %v5689 = vld [vmem:[%s7 + $0x18] sm:$0xff]
  %v5691 = vsel %vm552, %v5686, 0
  %v5694 = vsel %vm552, %v5687, 0
  %v5697 = vsel %vm552, %v5688, 0
  %v5700 = vsel %vm552, %v5689, 0
  %5702 = vmatprep.subr.mxu0 0.0
  %5703 = vmatpush1.msra.mxu0 %v5682
  %5704 = vmatprep.subr.mxu0 0.0
  %5705 = vmatpush1.msra.mxu0 %v5683
  %5706 = vmatprep.subr.mxu0 0.0
  %5707 = vmatpush1.msra.mxu0 %v5684
  %5708 = vmatprep.subr.mxu0 0.0
  %5709 = vmatpush1.msra.mxu0 %v5685
  %5710 = vmatprep.subr.mxu0 0.0
  %5711 = vmatpush1.msra.mxu0 0.0
  %5712 = vmatprep.subr.mxu0 0.0
  %5713 = vmatpush1.msra.mxu0 0.0
  %5714 = vmatprep.subr.mxu0 0.0
  %5715 = vmatpush1.msra.mxu0 0.0
  %5716 = vmatprep.subr.mxu0 0.0
  %5717 = vmatpush1.msra.mxu0 0.0
  %5718 = vmatprep.subr.mxu0 0.0
  %5719 = vmatpush1.msra.mxu0 0.0
  %5720 = vmatprep.subr.mxu0 0.0
  %5721 = vmatpush1.msra.mxu0 0.0
  %5722 = vmatprep.subr.mxu0 0.0
  %5723 = vmatpush1.msra.mxu0 0.0
  %5724 = vmatprep.subr.mxu0 0.0
  %5725 = vmatpush1.msra.mxu0 0.0
  %5726 = vmatprep.subr.mxu0 0.0
  %5727 = vmatpush1.msra.mxu0 0.0
  %5728 = vmatprep.subr.mxu0 0.0
  %5729 = vmatpush1.msra.mxu0 0.0
  %5730 = vmatprep.subr.mxu0 0.0
  %5731 = vmatpush1.msra.mxu0 0.0
  %5732 = vmatprep.subr.mxu0 0.0
  %5733 = vmatpush1.msra.mxu0 0.0
  %5734 = vmatprep.subr.mxu0 0.0
  %5735 = vmatpush1.msra.mxu0 0.0
  %5736 = vmatprep.subr.mxu0 0.0
  %5737 = vmatpush1.msra.mxu0 0.0
  %5738 = vmatprep.subr.mxu0 0.0
  %5739 = vmatpush1.msra.mxu0 0.0
  %5740 = vmatprep.subr.mxu0 0.0
  %5741 = vmatpush1.msra.mxu0 0.0
  %5742 = vmatprep.subr.mxu0 0.0
  %5743 = vmatpush1.msra.mxu0 0.0
  %5744 = vmatprep.subr.mxu0 0.0
  %5745 = vmatpush1.msra.mxu0 0.0
  %5746 = vmatprep.subr.mxu0 0.0
  %5747 = vmatpush1.msra.mxu0 0.0
  %5748 = vmatprep.subr.mxu0 0.0
  %5749 = vmatpush1.msra.mxu0 0.0
  %5750 = vmatprep.subr.mxu0 0.0
  %5751 = vmatpush1.msra.mxu0 0.0
  %5752 = vmatprep.subr.mxu0 0.0
  %5753 = vmatpush1.msra.mxu0 0.0
  %5754 = vmatprep.subr.mxu0 0.0
  %5755 = vmatpush1.msra.mxu0 0.0
  %5756 = vmatprep.subr.mxu0 0.0
  %5757 = vmatpush1.msra.mxu0 0.0
  %5758 = vmatprep.subr.mxu0 0.0
  %5759 = vmatpush1.msra.mxu0 0.0
  %5760 = vmatprep.subr.mxu0 0.0
  %5761 = vmatpush1.msra.mxu0 0.0
  %5762 = vmatprep.subr.mxu0 0.0
  %5763 = vmatpush1.msra.mxu0 0.0
  %5764 = vmatprep.subr.mxu0 0.0
  %5765 = vmatpush1.msra.mxu0 0.0
  %5766 = vmatprep.mubr.f32.mxu0 0.0
  %5767 = vmatmul.mubr.f32.gmra.mrb[0].mxu0 %v5691
  %v5768 = vpop.f32.mrb[0].mxu0
  %v5769 = vadd.f32 %v51, %v5768
  %v5770 = vpop.f32.mrb[0].mxu0
  %5771 = vmatprep.mubr.f32.mxu0 0.0
  %5772 = vmatmul.mubr.f32.gmra.mrb[0].mxu0 %v5694
  %v5773 = vpop.f32.mrb[0].mxu0
  %v5774 = vadd.f32 %v52, %v5773
  %v5775 = vpop.f32.mrb[0].mxu0
  %5776 = vmatprep.mubr.f32.mxu0 0.0
  %5777 = vmatmul.mubr.f32.gmra.mrb[0].mxu0 %v5697
  %v5778 = vpop.f32.mrb[0].mxu0
  %v5779 = vadd.f32 %v53, %v5778
  %v5780 = vpop.f32.mrb[0].mxu0
  %5781 = vmatprep.mubr.f32.mxu0 0.0
  %5782 = vmatmul.mubr.f32.gmra.mrb[0].mxu0 %v5700
  %v5783 = vpop.f32.mrb[0].mxu0
  %v5784 = vadd.f32 %v54, %v5783
  %v5785 = vpop.f32.mrb[0].mxu0
  %5786 = vdwg.mxu0
  %v5787 = vmax.f32 %v5769, 0.0
  %v5788 = vmax.f32 %v5774, 0.0
  %v5789 = vmax.f32 %v5779, 0.0
  %v5790 = vmax.f32 %v5784, 0.0
  %v5791 = vld [vmem:[%s8] sm:$0xff]
  %v5792 = vld [vmem:[%s8 + $0x8] sm:$0xff]
  %v5793 = vld [vmem:[%s8 + $0x10] sm:$0xff]
  %v5794 = vld [vmem:[%s8 + $0x18] sm:$0xff]
  %v5795 = vld [vmem:[%s8 + $0x20] sm:$0xff]
  %v5796 = vld [vmem:[%s8 + $0x28] sm:$0xff]
  %v5797 = vld [vmem:[%s8 + $0x30] sm:$0xff]
  %v5798 = vld [vmem:[%s8 + $0x38] sm:$0xff]
  %v5800 = vsel %vm552, %v5791, 0
  %v5803 = vsel %vm552, %v5792, 0
  %v5806 = vsel %vm552, %v5793, 0
  %v5809 = vsel %vm552, %v5794, 0
  %v5812 = vsel %vm552, %v5795, 0
  %v5815 = vsel %vm552, %v5796, 0
  %v5818 = vsel %vm552, %v5797, 0
  %v5821 = vsel %vm552, %v5798, 0
  %5823 = vmatprep.subr.mxu0 0.0
  %5824 = vmatpush1.msra.mxu0 %v5787
  %5825 = vmatprep.subr.mxu0 0.0
  %5826 = vmatpush1.msra.mxu0 %v5788
  %5827 = vmatprep.subr.mxu0 0.0
  %5828 = vmatpush1.msra.mxu0 %v5789
  %5829 = vmatprep.subr.mxu0 0.0
  %5830 = vmatpush1.msra.mxu0 %v5790
  %5831 = vmatprep.subr.mxu0 0.0
  %5832 = vmatpush1.msra.mxu0 0.0
  %5833 = vmatprep.subr.mxu0 0.0
  %5834 = vmatpush1.msra.mxu0 0.0
  %5835 = vmatprep.subr.mxu0 0.0
  %5836 = vmatpush1.msra.mxu0 0.0
  %5837 = vmatprep.subr.mxu0 0.0
  %5838 = vmatpush1.msra.mxu0 0.0
  %5839 = vmatprep.subr.mxu0 0.0
  %5840 = vmatpush1.msra.mxu0 0.0
  %5841 = vmatprep.subr.mxu0 0.0
  %5842 = vmatpush1.msra.mxu0 0.0
  %5843 = vmatprep.subr.mxu0 0.0
  %5844 = vmatpush1.msra.mxu0 0.0
  %5845 = vmatprep.subr.mxu0 0.0
  %5846 = vmatpush1.msra.mxu0 0.0
  %5847 = vmatprep.subr.mxu0 0.0
  %5848 = vmatpush1.msra.mxu0 0.0
  %5849 = vmatprep.subr.mxu0 0.0
  %5850 = vmatpush1.msra.mxu0 0.0
  %5851 = vmatprep.subr.mxu0 0.0
  %5852 = vmatpush1.msra.mxu0 0.0
  %5853 = vmatprep.subr.mxu0 0.0
  %5854 = vmatpush1.msra.mxu0 0.0
  %5855 = vmatprep.subr.mxu0 0.0
  %5856 = vmatpush1.msra.mxu0 0.0
  %5857 = vmatprep.subr.mxu0 0.0
  %5858 = vmatpush1.msra.mxu0 0.0
  %5859 = vmatprep.subr.mxu0 0.0
  %5860 = vmatpush1.msra.mxu0 0.0
  %5861 = vmatprep.subr.mxu0 0.0
  %5862 = vmatpush1.msra.mxu0 0.0
  %5863 = vmatprep.subr.mxu0 0.0
  %5864 = vmatpush1.msra.mxu0 0.0
  %5865 = vmatprep.subr.mxu0 0.0
  %5866 = vmatpush1.msra.mxu0 0.0
  %5867 = vmatprep.subr.mxu0 0.0
  %5868 = vmatpush1.msra.mxu0 0.0
  %5869 = vmatprep.subr.mxu0 0.0
  %5870 = vmatpush1.msra.mxu0 0.0
  %5871 = vmatprep.subr.mxu0 0.0
  %5872 = vmatpush1.msra.mxu0 0.0
  %5873 = vmatprep.subr.mxu0 0.0
  %5874 = vmatpush1.msra.mxu0 0.0
  %5875 = vmatprep.subr.mxu0 0.0
  %5876 = vmatpush1.msra.mxu0 0.0
  %5877 = vmatprep.subr.mxu0 0.0
  %5878 = vmatpush1.msra.mxu0 0.0
  %5879 = vmatprep.subr.mxu0 0.0
  %5880 = vmatpush1.msra.mxu0 0.0
  %5881 = vmatprep.subr.mxu0 0.0
  %5882 = vmatpush1.msra.mxu0 0.0
  %5883 = vmatprep.subr.mxu0 0.0
  %5884 = vmatpush1.msra.mxu0 0.0
  %5885 = vmatprep.subr.mxu0 0.0
  %5886 = vmatpush1.msra.mxu0 0.0
  %5887 = vmatprep.mubr.f32.mxu0 0.0
  %5888 = vmatmul.mubr.f32.gmra.mrb[0].mxu0 %v5800
  %v5889 = vpop.f32.mrb[0].mxu0
  %v5890 = vadd.f32 %v55, %v5889
  %v5891 = vpop.f32.mrb[0].mxu0
  %5892 = vmatprep.mubr.f32.mxu0 0.0
  %5893 = vmatmul.mubr.f32.gmra.mrb[0].mxu0 %v5803
  %v5894 = vpop.f32.mrb[0].mxu0
  %v5895 = vadd.f32 %v56, %v5894
  %v5896 = vpop.f32.mrb[0].mxu0
  %5897 = vmatprep.mubr.f32.mxu0 0.0
  %5898 = vmatmul.mubr.f32.gmra.mrb[0].mxu0 %v5806
  %v5899 = vpop.f32.mrb[0].mxu0
  %v5900 = vadd.f32 %v57, %v5899
  %v5901 = vpop.f32.mrb[0].mxu0
  %5902 = vmatprep.mubr.f32.mxu0 0.0
  %5903 = vmatmul.mubr.f32.gmra.mrb[0].mxu0 %v5809
  %v5904 = vpop.f32.mrb[0].mxu0
  %v5905 = vadd.f32 %v58, %v5904
  %v5906 = vpop.f32.mrb[0].mxu0
  %5907 = vmatprep.mubr.f32.mxu0 0.0
  %5908 = vmatmul.mubr.f32.gmra.mrb[0].mxu0 %v5812
  %v5909 = vpop.f32.mrb[0].mxu0
  %v5910 = vadd.f32 %v59, %v5909
  %v5911 = vpop.f32.mrb[0].mxu0
  %5912 = vmatprep.mubr.f32.mxu0 0.0
  %5913 = vmatmul.mubr.f32.gmra.mrb[0].mxu0 %v5815
  %v5914 = vpop.f32.mrb[0].mxu0
  %v5915 = vadd.f32 %v60, %v5914
  %v5916 = vpop.f32.mrb[0].mxu0
  %5917 = vmatprep.mubr.f32.mxu0 0.0
  %5918 = vmatmul.mubr.f32.gmra.mrb[0].mxu0 %v5818
  %v5919 = vpop.f32.mrb[0].mxu0
  %v5920 = vadd.f32 %v61, %v5919
  %v5921 = vpop.f32.mrb[0].mxu0
  %5922 = vmatprep.mubr.f32.mxu0 0.0
  %5923 = vmatmul.mubr.f32.gmra.mrb[0].mxu0 %v5821
  %v5924 = vpop.f32.mrb[0].mxu0
  %v5925 = vadd.f32 %v62, %v5924
  %v5926 = vpop.f32.mrb[0].mxu0
  %5927 = vdwg.mxu0
  %v5928 = vsub.f32 %v5910, %v5890
  %v5929 = vsub.f32 %v5915, %v5895
  %v5930 = vsub.f32 %v5920, %v5900
  %v5931 = vsub.f32 %v5925, %v5905
  %v5932 = vmul.f32 %v5928, 1.442695
  %v5933 = vpow.pop %v5932
  %v5934 = vmul.f32 %v5929, 1.442695
  %v5935 = vpow.pop %v5934
  %v5936 = vmul.f32 %v5930, 1.442695
  %v5937 = vpow.pop %v5936
  %v5938 = vmul.f32 %v5931, 1.442695
  %v5939 = vpow.pop %v5938
  %v5940 = vadd.f32 %v5933, 1.0
  %v5941 = vadd.f32 %v5935, 1.0
  %v5942 = vadd.f32 %v5937, 1.0
  %v5943 = vadd.f32 %v5939, 1.0
  %v5944 = vrcp.pop %v5940
  %v5945 = vrcp.pop %v5941
  %v5946 = vrcp.pop %v5942
  %v5947 = vrcp.pop %v5943
  %5949 = vset.pattern.permute.xlu0 0
  %5950 = vperm.xlu0 %5949, %v5944
  %v5951 = vpop.permute.xlu0 %5950
  %5954 = vset.pattern.permute.xlu0 0
  %5955 = vperm.xlu0 %5954, %v5945
  %v5956 = vpop.permute.xlu0 %5955
  %5959 = vset.pattern.permute.xlu0 0
  %5960 = vperm.xlu0 %5959, %v5946
  %v5961 = vpop.permute.xlu0 %5960
  %5964 = vset.pattern.permute.xlu0 0
  %5965 = vperm.xlu0 %5964, %v5947
  %v5966 = vpop.permute.xlu0 %5965
  %v5968 = vmul.f32 %v5286, %v5951
  %v5969 = vmul.f32 %v5287, %v5951
  %v5970 = vmul.f32 %v5290, %v5956
  %v5971 = vmul.f32 %v5291, %v5956
  %v5972 = vmul.f32 %v5294, %v5961
  %v5973 = vmul.f32 %v5295, %v5961
  %v5974 = vmul.f32 %v5298, %v5966
  %v5975 = vmul.f32 %v5299, %v5966
  %v5976 = vsub.f32 1.0, %v5944
  %v5977 = vsub.f32 1.0, %v5945
  %v5978 = vsub.f32 1.0, %v5946
  %v5979 = vsub.f32 1.0, %v5947
  %5981 = vset.pattern.permute.xlu0 0
  %5982 = vperm.xlu0 %5981, %v5976
  %v5983 = vpop.permute.xlu0 %5982
  %5986 = vset.pattern.permute.xlu0 0
  %5987 = vperm.xlu0 %5986, %v5977
  %v5988 = vpop.permute.xlu0 %5987
  %5991 = vset.pattern.permute.xlu0 0
  %5992 = vperm.xlu0 %5991, %v5978
  %v5993 = vpop.permute.xlu0 %5992
  %5996 = vset.pattern.permute.xlu0 0
  %5997 = vperm.xlu0 %5996, %v5979
  %v5998 = vpop.permute.xlu0 %5997
  %v6000 = vmul.f32 %v816, %v5983
  %v6001 = vmul.f32 %v817, %v5983
  %v6002 = vmul.f32 %v820, %v5988
  %v6003 = vmul.f32 %v821, %v5988
  %v6004 = vmul.f32 %v824, %v5993
  %v6005 = vmul.f32 %v825, %v5993
  %v6006 = vmul.f32 %v828, %v5998
  %v6007 = vmul.f32 %v829, %v5998
  %v6008 = vadd.f32 %v5968, %v6000
  %v6009 = vadd.f32 %v5969, %v6001
  %v6010 = vadd.f32 %v5970, %v6002
  %v6011 = vadd.f32 %v5971, %v6003
  %v6012 = vadd.f32 %v5972, %v6004
  %v6013 = vadd.f32 %v5973, %v6005
  %v6014 = vadd.f32 %v5974, %v6006
  %v6015 = vadd.f32 %v5975, %v6007
  %s6016 = scalar_lea.vmem %s10, 64
  %6017 = vst [vmem:[%s6016] sm:$0xff] %v6008
  %6018 = vst [vmem:[%s6016 + $0x8] sm:$0xff] %v6009
  %6019 = vst [vmem:[%s6016 + $0x10] sm:$0xff] %v6010
  %6020 = vst [vmem:[%s6016 + $0x18] sm:$0xff] %v6011
  %6021 = vst [vmem:[%s6016 + $0x20] sm:$0xff] %v6012
  %6022 = vst [vmem:[%s6016 + $0x28] sm:$0xff] %v6013
  %6023 = vst [vmem:[%s6016 + $0x30] sm:$0xff] %v6014
  %6024 = vst [vmem:[%s6016 + $0x38] sm:$0xff] %v6015
  // Predicated region
  $region42: #{cot_layer.1} parent=0 // pred_check
    _
  $region43: #{cot_layer.1} parent=0 // pred_check_branch
    %6026 = sbr.rel (0) target = $region45
  $region44: #{cot_layer.1} parent=0 // pred_region
    _
  $region45: #{cot_layer.1} parent=0 // pred_fallthru
    _
  // Predicated region
  $region46: #{cot_layer.1} parent=0 // pred_check
    _
  $region47: #{cot_layer.1} parent=0 // pred_check_branch
    %6028 = sbr.rel (0) target = $region49
  $region48: #{cot_layer.1} parent=0 // pred_region
    _
  $region49: #{cot_layer.1} parent=0 // pred_fallthru
    _

</llo_original>
